<compile_context>
chip_gen: v5e
topology: v5e:2x2
jax: 0.10.0
libtpu: 0.0.40
codegen_flags: <defaults>
</compile_context>

<pallas_src>
import functools
import math

import jax
import jax.numpy as jnp
import numpy as np
from jax.experimental import pallas as pl
from jax.experimental.pallas import tpu as pltpu

EPS = 1e-6
NEG_INF = -1e9

# vec-slab row layout (per layer, all f32, width d_model)
_ROW_ALPHA = 0      # rows 0..2  : norm_1/2/3 alpha
_ROW_NBIAS = 3      # rows 3..5  : norm_1/2/3 bias
_ROW_ATTN1 = 6      # rows 6..9  : attn_1 bq (pre-scaled), bk, bv, bo
_ROW_ATTN2 = 10     # rows 10..13: attn_2 bq (pre-scaled), bk, bv, bo
_ROW_FFB2 = 14      # row 14     : ff linear_2 bias
_N_VEC_ROWS = 15


# ----------------------------------------------------------------------------
# Fused decoder-stack kernel: grid = (n_layers, batch).
# Layer is the outer axis so the per-layer weight slabs stay resident across
# the inner batch steps; the activation carry lives in a VMEM scratch.
# ----------------------------------------------------------------------------
def _fused_decoder_kernel(x0_ref, e_ref, sb_ref, cb_ref,
                          wa_ref, w2_ref, vec_ref, fb1_ref,
                          fna_ref, fnb_ref,
                          o_ref, x_scr,
                          *, heads, d_model, d_ff, n_layers):
    D, H, F = d_model, heads, d_ff
    dk = D // H
    layer = pl.program_id(0)
    b = pl.program_id(1)

    # Initialize this batch's activation carry from the embedded input once.
    @pl.when(layer == 0)
    def _():
        x_scr[b] = x0_ref[0]

    x = x_scr[b]                      # (T, D) f32 carry, VMEM-resident
    e = e_ref[0]                      # (C+S, D) f32 encoder keys/values
    vec = vec_ref[0]                  # (15, D) f32: norm params + biases

    def norm(t, idx):
        # torch Norm: unbiased std (/(d-1)), eps added to the std.
        alpha = vec[_ROW_ALPHA + idx:_ROW_ALPHA + idx + 1]
        beta = vec[_ROW_NBIAS + idx:_ROW_NBIAS + idx + 1]
        mu = jnp.mean(t, axis=-1, keepdims=True)
        c = t - mu
        var = jnp.sum(c * c, axis=-1, keepdims=True) * (1.0 / (D - 1))
        return alpha * c / (jnp.sqrt(var) + EPS) + beta

    def mha(q_in, kv_in, col_off, brow, bias):
        # q_in (M, D), kv_in (N, D) in f32.  Weights come as one
        # 128-lane-aligned bf16 slice [Wq|Wk|Wv|Wo] of the packed slab.
        # `bias` is the additive mask, broadcastable to (M, N).
        # The 1/sqrt(d_k) score scale is pre-folded into Wq / bq.
        wattn = wa_ref[0, :, col_off:col_off + 4 * D]        # (D, 4D) bf16
        wq = wattn[:, :D]
        wkv = wattn[:, D:3 * D]
        wo = wattn[:, 3 * D:]
        bq = vec[brow:brow + 1]
        bk = vec[brow + 1:brow + 2]
        bv = vec[brow + 2:brow + 3]
        bo = vec[brow + 3:brow + 4]

        q = jnp.dot(q_in.astype(jnp.bfloat16), wq,
                    preferred_element_type=jnp.float32) + bq          # (M, D)
        kv = jnp.dot(kv_in.astype(jnp.bfloat16), wkv,
                     preferred_element_type=jnp.float32)              # (N, 2D)
        q16 = q.astype(jnp.bfloat16)
        k16 = (kv[:, :D] + bk).astype(jnp.bfloat16)
        v16 = (kv[:, D:] + bv).astype(jnp.bfloat16)

        head_out = []
        for h in range(H):                         # H is small -> unrolled
            sl = slice(h * dk, (h + 1) * dk)
            s = jax.lax.dot_general(q16[:, sl], k16[:, sl],
                                    (((1,), (1,)), ((), ())),
                                    preferred_element_type=jnp.float32)
            s = s + bias
            s = s - jnp.max(s, axis=-1, keepdims=True)
            p = jnp.exp(s)
            p = p * pl.reciprocal(jnp.sum(p, axis=-1, keepdims=True),
                                  approx=True)
            head_out.append(jnp.dot(p.astype(jnp.bfloat16), v16[:, sl],
                                    preferred_element_type=jnp.float32))
        concat = jnp.concatenate(head_out, axis=-1)                    # (M, D)
        return jnp.dot(concat.astype(jnp.bfloat16), wo,
                       preferred_element_type=jnp.float32) + bo

    # --- self-attention sublayer (dropout = identity in eval mode) ---
    x2 = norm(x, 0)
    x = x + mha(x2, x2, 0, _ROW_ATTN1, sb_ref[0])

    # --- cross-attention over (cond2lat ++ latent) encoder outputs ---
    x2 = norm(x, 1)
    x = x + mha(x2, e, 4 * D, _ROW_ATTN2, cb_ref[0])

    # --- feed-forward sublayer (tanh-approx GELU per review item 8) ---
    x2 = norm(x, 2)
    w1 = wa_ref[0, :, 8 * D:8 * D + F]                                 # (D, F)
    h1 = jnp.dot(x2.astype(jnp.bfloat16), w1,
                 preferred_element_type=jnp.float32) + fb1_ref[0]
    h1 = jax.nn.gelu(h1, approximate=True)
    x = x + (jnp.dot(h1.astype(jnp.bfloat16), w2_ref[0],
                     preferred_element_type=jnp.float32)
             + vec[_ROW_FFB2:_ROW_FFB2 + 1])

    x_scr[b] = x

    # Final Norm of the whole Decoder; written back only at the last layer.
    @pl.when(layer == n_layers - 1)
    def _():
        mu = jnp.mean(x, axis=-1, keepdims=True)
        c = x - mu
        var = jnp.sum(c * c, axis=-1, keepdims=True) * (1.0 / (D - 1))
        o_ref[0] = fna_ref[...] * c / (jnp.sqrt(var) + EPS) + fnb_ref[...]


# ----------------------------------------------------------------------------
# Host-side parameter packing (review items 1 / 2 / 10).
# ----------------------------------------------------------------------------
def pack_decoder_stack(stack, *, heads):
    L, D, F = stack["ff_w1"].shape
    scale = 1.0 / math.sqrt(D // heads)
    a1, a2 = stack["attn1"], stack["attn2"]
    wa = jnp.concatenate(
        [a1["wq"] * scale, a1["wk"], a1["wv"], a1["wo"],
         a2["wq"] * scale, a2["wk"], a2["wv"], a2["wo"],
         stack["ff_w1"]], axis=-1).astype(jnp.bfloat16)     # (L, D, 8D+F)
    w2 = stack["ff_w2"].astype(jnp.bfloat16)                # (L, F, D)
    row = lambda v: v[:, None, :]
    vec = jnp.concatenate(
        [stack["n_alpha"], stack["n_bias"],
         row(a1["bq"] * scale), row(a1["bk"]), row(a1["bv"]), row(a1["bo"]),
         row(a2["bq"] * scale), row(a2["bk"]), row(a2["bv"]), row(a2["bo"]),
         row(stack["ff_b2"])], axis=1).astype(jnp.float32)  # (L, 15, D)
    fb1 = stack["ff_b1"][:, None, :].astype(jnp.float32)    # (L, 1, F)
    return {"wa": wa, "w2": w2, "vec": vec, "fb1": fb1}


def fused_decoder_stack(x0, e_full, self_bias, cross_bias, packed,
                        final_alpha, final_bias, *, heads):
    B, T, D = x0.shape
    N = e_full.shape[1]
    L = packed["wa"].shape[0]
    F = packed["fb1"].shape[-1]

    per_batch = lambda s: pl.BlockSpec(s, lambda l, b: (b, 0, 0))
    per_layer = lambda s: pl.BlockSpec(s, lambda l, b: (l, 0, 0))
    const2d = lambda s: pl.BlockSpec(s, lambda l, b: (0, 0))

    kernel = functools.partial(_fused_decoder_kernel, heads=heads,
                               d_model=D, d_ff=F, n_layers=L)

    # TODO(synk): on v7x the independent batch axis could additionally be
    # split across the 2 TensorCores (core_map); kept serial here for safety.
    return pl.pallas_call(
        kernel,
        out_shape=jax.ShapeDtypeStruct((B, T, D), jnp.float32),
        grid=(L, B),   # layer outer (weight slabs stay resident), batch inner
        in_specs=[
            per_batch((1, T, D)),             # embedded input x0
            per_batch((1, N, D)),             # encoder keys/values
            per_batch((1, T, T)),             # self-attention additive mask
            per_batch((1, 1, N)),             # cross-attention additive mask
            per_layer((1, D, 8 * D + F)),     # packed bf16 weight slab
            per_layer((1, F, D)),             # ff linear_2 weight (bf16)
            per_layer((1, _N_VEC_ROWS, D)),   # norm params + biases (f32)
            per_layer((1, 1, F)),             # ff linear_1 bias (f32)
            const2d((1, D)), const2d((1, D)),  # final Norm alpha / bias
        ],
        out_specs=pl.BlockSpec((1, T, D), lambda l, b: (b, 0, 0)),
        scratch_shapes=[pltpu.VMEM((B, T, D), jnp.float32)],
        compiler_params=pltpu.CompilerParams(
            dimension_semantics=("arbitrary", "arbitrary")),
    )(x0, e_full, self_bias, cross_bias,
      packed["wa"], packed["w2"], packed["vec"], packed["fb1"],
      final_alpha, final_bias)


# ----------------------------------------------------------------------------
# Positional encoding table — exact reproduction of the (non-standard) formula
# ----------------------------------------------------------------------------
def make_pe(max_seq_len, d_model):
    pe = np.zeros((max_seq_len, d_model), dtype=np.float32)
    for pos in range(max_seq_len):
        for i in range(0, d_model, 2):
            pe[pos, i] = math.sin(pos / 10000 ** (2 * i / d_model))
            pe[pos, i + 1] = math.cos(pos / 10000 ** (2 * (i + 1) / d_model))
    return jnp.asarray(pe)


# ----------------------------------------------------------------------------
# Parameter init (deterministic, synthetic).  Attention / FF weights are kept
# in the torch `linear.weight.T` orientation so y = x @ w + b.
# ----------------------------------------------------------------------------
def init_params(key, vocab_size, d_model, latent_dim, cond_dim, d_ff,
                n_layers, heads):
    D, F, L = d_model, d_ff, n_layers
    keys = iter(jax.random.split(key, 48))

    def w(shape, scale=0.02):
        return scale * jax.random.normal(next(keys), shape, dtype=jnp.float32)

    def attn():
        return {"wq": w((L, D, D)), "wk": w((L, D, D)),
                "wv": w((L, D, D)), "wo": w((L, D, D)),
                "bq": w((L, D)), "bk": w((L, D)),
                "bv": w((L, D)), "bo": w((L, D))}

    return {
        "embed": w((vocab_size, D), 1.0),
        "fc_z_w": w((latent_dim, D)),
        "fc_z_b": w((D,)),
        "cond2lat_w": w((cond_dim, D * cond_dim)),
        "cond2lat_b": w((D * cond_dim,)),
        "final_alpha": jnp.ones((1, D), jnp.float32),
        "final_bias": jnp.zeros((1, D), jnp.float32),
        "stack": {
            "n_alpha": jnp.ones((L, 3, D), jnp.float32),
            "n_bias": jnp.zeros((L, 3, D), jnp.float32),
            "attn1": attn(),
            "attn2": attn(),
            "ff_w1": w((L, D, F)),
            "ff_b1": w((L, F)),
            "ff_w2": w((L, F, D)),
            "ff_b2": w((L, D)),
        },
    }


# ----------------------------------------------------------------------------
# Decoder forward (use_cond2dec=False, use_cond2lat=True, eval-mode dropout).
# Plain-JAX glue: embedding gather, PE add, tiny fc_z / cond2lat projections,
# per-batch additive mask construction, parameter packing.  Everything else is
# one pallas_call.
# ----------------------------------------------------------------------------
def decoder_forward(params, trg, e_outputs, cond_input, src_mask, trg_mask,
                    *, d_model, heads, pe_table):
    B, T = trg.shape
    S = e_outputs.shape[1]
    C = cond_input.shape[1]
    D = d_model

    # embedding + positional encoding (dropout = identity)
    x0 = params["embed"][trg] * math.sqrt(D) + pe_table[:T][None, :, :]

    # e_outputs = fc_z(e_outputs); prepend cond2lat tokens (use_cond2lat)
    lat = e_outputs @ params["fc_z_w"] + params["fc_z_b"]              # (B,S,D)
    c2l = (cond_input @ params["cond2lat_w"]
           + params["cond2lat_b"]).reshape(B, C, D)                    # (B,C,D)
    e_full = jnp.concatenate([c2l, lat], axis=1)                       # (B,C+S,D)

    # per-batch additive attention masks (0 / -1e9); no batch folding
    self_bias = jnp.where(trg_mask != 0, 0.0, NEG_INF).astype(jnp.float32)
    full_src = jnp.concatenate(
        [jnp.ones((B, 1, C), src_mask.dtype), src_mask], axis=2)       # (B,1,C+S)
    cross_bias = jnp.where(full_src != 0, 0.0, NEG_INF).astype(jnp.float32)

    packed = pack_decoder_stack(params["stack"], heads=heads)

    return fused_decoder_stack(
        x0.astype(jnp.float32), e_full.astype(jnp.float32),
        self_bias, cross_bias, packed,
        params["final_alpha"], params["final_bias"], heads=heads)


# ----------------------------------------------------------------------------
if __name__ == "__main__":
    # small, module-consistent shapes
    B, T, S = 2, 8, 8
    d_model, heads, n_layers = 32, 4, 2
    d_ff = 2048                       # FeedForward default
    vocab_size = 20
    latent_dim = 16
    cond_dim = 4

    key = jax.random.PRNGKey(0)
    k_par, k_trg, k_e, k_c = jax.random.split(key, 4)

    params = init_params(k_par, vocab_size, d_model, latent_dim, cond_dim,
                         d_ff, n_layers, heads)
    pe_table = make_pe(200, d_model)

    trg = jax.random.randint(k_trg, (B, T), 0, vocab_size, dtype=jnp.int32)
    e_outputs = jax.random.normal(k_e, (B, S, latent_dim), dtype=jnp.float32)
    cond_input = jax.random.normal(k_c, (B, cond_dim), dtype=jnp.float32)
    src_mask = jnp.ones((B, 1, S), jnp.float32)
    trg_mask = jnp.tril(jnp.ones((T, T), jnp.float32))[None].repeat(B, axis=0)

    fwd = jax.jit(functools.partial(decoder_forward, d_model=d_model,
                                    heads=heads, pe_table=pe_table))
    out = fwd(params, trg, e_outputs, cond_input, src_mask, trg_mask)
    jax.block_until_ready(out)
    assert out.shape == (B, T, d_model)
    assert bool(jnp.all(jnp.isfinite(out)))
    print("KERNEL_OK")
</pallas_src>

<mosaic_0001>
module attributes {stable_mosaic.version = 11 : i64} {
  func.func @_fused_decoder_kernel(%arg0: i32, %arg1: i32, %arg2: memref<1x8x32xf32, #tpu.memory_space<vmem>>, %arg3: memref<1x12x32xf32, #tpu.memory_space<vmem>>, %arg4: memref<1x8x8xf32, #tpu.memory_space<vmem>>, %arg5: memref<1x1x12xf32, #tpu.memory_space<vmem>>, %arg6: memref<1x32x2304xbf16, #tpu.memory_space<vmem>>, %arg7: memref<1x2048x32xbf16, #tpu.memory_space<vmem>>, %arg8: memref<1x15x32xf32, #tpu.memory_space<vmem>>, %arg9: memref<1x1x2048xf32, #tpu.memory_space<vmem>>, %arg10: memref<1x32xf32, #tpu.memory_space<vmem>>, %arg11: memref<1x32xf32, #tpu.memory_space<vmem>>, %arg12: memref<1x8x32xf32, #tpu.memory_space<vmem>>, %arg13: memref<2x8x32xf32, #tpu.memory_space<vmem>>) attributes {dimension_semantics = [#tpu.dimension_semantics<arbitrary>, #tpu.dimension_semantics<arbitrary>], iteration_bounds = array<i64: 2, 2>, scalar_prefetch = 0 : i64, scratch_operands = 1 : i64, tpu.core_type = #tpu.core_type<tc>, window_params = [{transform_indices = @transform_0, window_bounds = array<i64: 1, 8, 32>}, {transform_indices = @transform_1, window_bounds = array<i64: 1, 12, 32>}, {transform_indices = @transform_2, window_bounds = array<i64: 1, 8, 8>}, {transform_indices = @transform_3, window_bounds = array<i64: 1, 1, 12>}, {transform_indices = @transform_4, window_bounds = array<i64: 1, 32, 2304>}, {transform_indices = @transform_5, window_bounds = array<i64: 1, 2048, 32>}, {transform_indices = @transform_6, window_bounds = array<i64: 1, 15, 32>}, {transform_indices = @transform_7, window_bounds = array<i64: 1, 1, 2048>}, {pipeline_mode = #tpu.pipeline_mode<synchronous>, transform_indices = @transform_8, window_bounds = array<i64: 1, 32>}, {pipeline_mode = #tpu.pipeline_mode<synchronous>, transform_indices = @transform_9, window_bounds = array<i64: 1, 32>}, {transform_indices = @transform_10, window_bounds = array<i64: 1, 8, 32>}]} {
    %c0_i32 = arith.constant 0 : i32
    %0 = arith.cmpi eq, %arg0, %c0_i32 : i32
    %1 = arith.extui %0 : i1 to i32
    %c0_i32_0 = arith.constant 0 : i32
    %2 = arith.cmpi ne, %1, %c0_i32_0 : i32
    scf.if %2 {
      %c0_88 = arith.constant 0 : index
      %c0_89 = arith.constant 0 : index
      %c0_90 = arith.constant 0 : index
      %316 = vector.load %arg2[%c0_88, %c0_89, %c0_90] : memref<1x8x32xf32, #tpu.memory_space<vmem>>, vector<1x8x32xf32>
      %317 = vector.shape_cast %316 : vector<1x8x32xf32> to vector<8x32xf32>
      %318 = arith.index_cast %arg1 : i32 to index
      %c0_91 = arith.constant 0 : index
      %c0_92 = arith.constant 0 : index
      %319 = vector.load %arg13[%318, %c0_91, %c0_92] : memref<2x8x32xf32, #tpu.memory_space<vmem>>, vector<1x8x32xf32>
      %320 = vector.shape_cast %319 : vector<1x8x32xf32> to vector<8x32xf32>
      %321 = vector.shape_cast %317 : vector<8x32xf32> to vector<1x8x32xf32>
      tpu.vector_store %arg13[%318, %c0_91, %c0_92], %321 {strides = array<i32>} : memref<2x8x32xf32, #tpu.memory_space<vmem>>, vector<1x8x32xf32>,
    } else {
    }
    %3 = arith.index_cast %arg1 : i32 to index
    %c0 = arith.constant 0 : index
    %c0_1 = arith.constant 0 : index
    %4 = vector.load %arg13[%3, %c0, %c0_1] : memref<2x8x32xf32, #tpu.memory_space<vmem>>, vector<1x8x32xf32>
    %5 = vector.shape_cast %4 : vector<1x8x32xf32> to vector<8x32xf32>
    %c0_2 = arith.constant 0 : index
    %c0_3 = arith.constant 0 : index
    %c0_4 = arith.constant 0 : index
    %6 = vector.load %arg3[%c0_2, %c0_3, %c0_4] : memref<1x12x32xf32, #tpu.memory_space<vmem>>, vector<1x12x32xf32>
    %7 = vector.shape_cast %6 : vector<1x12x32xf32> to vector<12x32xf32>
    %c0_5 = arith.constant 0 : index
    %c0_6 = arith.constant 0 : index
    %c0_7 = arith.constant 0 : index
    %8 = vector.load %arg8[%c0_5, %c0_6, %c0_7] : memref<1x15x32xf32, #tpu.memory_space<vmem>>, vector<1x15x32xf32>
    %9 = vector.shape_cast %8 : vector<1x15x32xf32> to vector<15x32xf32>
    %10 = vector.extract_strided_slice %9 {offsets = [0, 0], sizes = [1, 32], strides = [1, 1]} : vector<15x32xf32> to vector<1x32xf32>
    %11 = vector.extract_strided_slice %9 {offsets = [3, 0], sizes = [1, 32], strides = [1, 1]} : vector<15x32xf32> to vector<1x32xf32>
    %cst = arith.constant dense<0.000000e+00> : vector<8xf32>
    %12 = vector.multi_reduction <add>, %5, %cst [1] : vector<8x32xf32> to vector<8xf32>
    %13 = vector.shape_cast %12 : vector<8xf32> to vector<8x1xf32>
    %cst_8 = arith.constant 3.200000e+01 : f32
    %14 = vector.broadcast %cst_8 : f32 to vector<8x1xf32>
    %15 = arith.divf %13, %14 : vector<8x1xf32>
    %16 = vector.broadcast %15 : vector<8x1xf32> to vector<8x32xf32>
    %17 = arith.subf %5, %16 : vector<8x32xf32>
    %18 = arith.mulf %17, %17 : vector<8x32xf32>
    %cst_9 = arith.constant dense<0.000000e+00> : vector<8xf32>
    %19 = vector.multi_reduction <add>, %18, %cst_9 [1] : vector<8x32xf32> to vector<8xf32>
    %20 = vector.shape_cast %19 : vector<8xf32> to vector<8x1xf32>
    %cst_10 = arith.constant 0.0322580636 : f32
    %21 = vector.broadcast %cst_10 : f32 to vector<8x1xf32>
    %22 = arith.mulf %20, %21 : vector<8x1xf32>
    %23 = vector.broadcast %10 : vector<1x32xf32> to vector<8x32xf32>
    %24 = arith.mulf %23, %17 : vector<8x32xf32>
    %25 = math.sqrt %22 : vector<8x1xf32>
    %cst_11 = arith.constant 9.99999997E-7 : f32
    %26 = vector.broadcast %cst_11 : f32 to vector<8x1xf32>
    %27 = arith.addf %25, %26 : vector<8x1xf32>
    %28 = vector.broadcast %27 : vector<8x1xf32> to vector<8x32xf32>
    %29 = arith.divf %24, %28 : vector<8x32xf32>
    %30 = vector.broadcast %11 : vector<1x32xf32> to vector<8x32xf32>
    %31 = arith.addf %29, %30 : vector<8x32xf32>
    %c0_12 = arith.constant 0 : index
    %c0_13 = arith.constant 0 : index
    %c0_14 = arith.constant 0 : index
    %32 = vector.load %arg4[%c0_12, %c0_13, %c0_14] : memref<1x8x8xf32, #tpu.memory_space<vmem>>, vector<1x8x8xf32>
    %33 = vector.shape_cast %32 : vector<1x8x8xf32> to vector<8x8xf32>
    %c0_15 = arith.constant 0 : index
    %c0_16 = arith.constant 0 : index
    %c0_17 = arith.constant 0 : index
    %34 = vector.load %arg6[%c0_15, %c0_16, %c0_17] : memref<1x32x2304xbf16, #tpu.memory_space<vmem>>, vector<1x32x128xbf16>
    %35 = vector.shape_cast %34 : vector<1x32x128xbf16> to vector<32x128xbf16>
    %36 = vector.extract_strided_slice %35 {offsets = [0, 0], sizes = [32, 32], strides = [1, 1]} : vector<32x128xbf16> to vector<32x32xbf16>
    %37 = vector.extract_strided_slice %35 {offsets = [0, 32], sizes = [32, 64], strides = [1, 1]} : vector<32x128xbf16> to vector<32x64xbf16>
    %38 = vector.extract_strided_slice %35 {offsets = [0, 96], sizes = [32, 32], strides = [1, 1]} : vector<32x128xbf16> to vector<32x32xbf16>
    %39 = vector.extract_strided_slice %9 {offsets = [6, 0], sizes = [1, 32], strides = [1, 1]} : vector<15x32xf32> to vector<1x32xf32>
    %40 = vector.extract_strided_slice %9 {offsets = [7, 0], sizes = [1, 32], strides = [1, 1]} : vector<15x32xf32> to vector<1x32xf32>
    %41 = vector.extract_strided_slice %9 {offsets = [8, 0], sizes = [1, 32], strides = [1, 1]} : vector<15x32xf32> to vector<1x32xf32>
    %42 = vector.extract_strided_slice %9 {offsets = [9, 0], sizes = [1, 32], strides = [1, 1]} : vector<15x32xf32> to vector<1x32xf32>
    %43 = arith.truncf %31 : vector<8x32xf32> to vector<8x32xbf16>
    %cst_18 = arith.constant dense<0.000000e+00> : vector<8x32xf32>
    %44 = tpu.matmul %43, %36, %cst_18 {dimension_numbers = #tpu.dot_dimension_numbers<[1], [0], [0], [1], [0, 0, 1, 1], [], []>} : vector<8x32xbf16>, vector<32x32xbf16>, vector<8x32xf32> -> vector<8x32xf32>
    %45 = vector.broadcast %39 : vector<1x32xf32> to vector<8x32xf32>
    %46 = arith.addf %44, %45 : vector<8x32xf32>
    %47 = arith.truncf %31 : vector<8x32xf32> to vector<8x32xbf16>
    %cst_19 = arith.constant dense<0.000000e+00> : vector<8x64xf32>
    %48 = tpu.matmul %47, %37, %cst_19 {dimension_numbers = #tpu.dot_dimension_numbers<[1], [0], [0], [1], [0, 0, 1, 1], [], []>} : vector<8x32xbf16>, vector<32x64xbf16>, vector<8x64xf32> -> vector<8x64xf32>
    %49 = arith.truncf %46 : vector<8x32xf32> to vector<8x32xbf16>
    %50 = vector.extract_strided_slice %48 {offsets = [0, 0], sizes = [8, 32], strides = [1, 1]} : vector<8x64xf32> to vector<8x32xf32>
    %51 = vector.broadcast %40 : vector<1x32xf32> to vector<8x32xf32>
    %52 = arith.addf %50, %51 : vector<8x32xf32>
    %53 = arith.truncf %52 : vector<8x32xf32> to vector<8x32xbf16>
    %54 = vector.extract_strided_slice %48 {offsets = [0, 32], sizes = [8, 32], strides = [1, 1]} : vector<8x64xf32> to vector<8x32xf32>
    %55 = vector.broadcast %41 : vector<1x32xf32> to vector<8x32xf32>
    %56 = arith.addf %54, %55 : vector<8x32xf32>
    %57 = arith.truncf %56 : vector<8x32xf32> to vector<8x32xbf16>
    %58 = vector.extract_strided_slice %49 {offsets = [0, 0], sizes = [8, 8], strides = [1, 1]} : vector<8x32xbf16> to vector<8x8xbf16>
    %59 = vector.extract_strided_slice %53 {offsets = [0, 0], sizes = [8, 8], strides = [1, 1]} : vector<8x32xbf16> to vector<8x8xbf16>
    %cst_20 = arith.constant dense<0.000000e+00> : vector<8x8xf32>
    %60 = tpu.matmul %58, %59, %cst_20 {dimension_numbers = #tpu.dot_dimension_numbers<[1], [1], [0], [0], [0, 0, 1, 0], [], []>} : vector<8x8xbf16>, vector<8x8xbf16>, vector<8x8xf32> -> vector<8x8xf32>
    %61 = arith.addf %60, %33 : vector<8x8xf32>
    %cst_21 = arith.constant dense<0xFF800000> : vector<8xf32>
    %62 = vector.multi_reduction <maximumf>, %61, %cst_21 [1] : vector<8x8xf32> to vector<8xf32>
    %63 = vector.shape_cast %62 : vector<8xf32> to vector<8x1xf32>
    %64 = vector.broadcast %63 : vector<8x1xf32> to vector<8x8xf32>
    %65 = arith.subf %61, %64 : vector<8x8xf32>
    %66 = math.exp %65 : vector<8x8xf32>
    %cst_22 = arith.constant dense<0.000000e+00> : vector<8xf32>
    %67 = vector.multi_reduction <add>, %66, %cst_22 [1] : vector<8x8xf32> to vector<8xf32>
    %68 = vector.shape_cast %67 : vector<8xf32> to vector<8x1xf32>
    %69 = tpu.reciprocal %68 {approx = true} : vector<8x1xf32> -> vector<8x1xf32>
    %70 = vector.broadcast %69 : vector<8x1xf32> to vector<8x8xf32>
    %71 = arith.mulf %66, %70 : vector<8x8xf32>
    %72 = arith.truncf %71 : vector<8x8xf32> to vector<8x8xbf16>
    %73 = vector.extract_strided_slice %57 {offsets = [0, 0], sizes = [8, 8], strides = [1, 1]} : vector<8x32xbf16> to vector<8x8xbf16>
    %cst_23 = arith.constant dense<0.000000e+00> : vector<8x8xf32>
    %74 = tpu.matmul %72, %73, %cst_23 {dimension_numbers = #tpu.dot_dimension_numbers<[1], [0], [0], [1], [0, 0, 1, 1], [], []>} : vector<8x8xbf16>, vector<8x8xbf16>, vector<8x8xf32> -> vector<8x8xf32>
    %75 = vector.extract_strided_slice %49 {offsets = [0, 8], sizes = [8, 8], strides = [1, 1]} : vector<8x32xbf16> to vector<8x8xbf16>
    %76 = vector.extract_strided_slice %53 {offsets = [0, 8], sizes = [8, 8], strides = [1, 1]} : vector<8x32xbf16> to vector<8x8xbf16>
    %cst_24 = arith.constant dense<0.000000e+00> : vector<8x8xf32>
    %77 = tpu.matmul %75, %76, %cst_24 {dimension_numbers = #tpu.dot_dimension_numbers<[1], [1], [0], [0], [0, 0, 1, 0], [], []>} : vector<8x8xbf16>, vector<8x8xbf16>, vector<8x8xf32> -> vector<8x8xf32>
    %78 = arith.addf %77, %33 : vector<8x8xf32>
    %cst_25 = arith.constant dense<0xFF800000> : vector<8xf32>
    %79 = vector.multi_reduction <maximumf>, %78, %cst_25 [1] : vector<8x8xf32> to vector<8xf32>
    %80 = vector.shape_cast %79 : vector<8xf32> to vector<8x1xf32>
    %81 = vector.broadcast %80 : vector<8x1xf32> to vector<8x8xf32>
    %82 = arith.subf %78, %81 : vector<8x8xf32>
    %83 = math.exp %82 : vector<8x8xf32>
    %cst_26 = arith.constant dense<0.000000e+00> : vector<8xf32>
    %84 = vector.multi_reduction <add>, %83, %cst_26 [1] : vector<8x8xf32> to vector<8xf32>
    %85 = vector.shape_cast %84 : vector<8xf32> to vector<8x1xf32>
    %86 = tpu.reciprocal %85 {approx = true} : vector<8x1xf32> -> vector<8x1xf32>
    %87 = vector.broadcast %86 : vector<8x1xf32> to vector<8x8xf32>
    %88 = arith.mulf %83, %87 : vector<8x8xf32>
    %89 = arith.truncf %88 : vector<8x8xf32> to vector<8x8xbf16>
    %90 = vector.extract_strided_slice %57 {offsets = [0, 8], sizes = [8, 8], strides = [1, 1]} : vector<8x32xbf16> to vector<8x8xbf16>
    %cst_27 = arith.constant dense<0.000000e+00> : vector<8x8xf32>
    %91 = tpu.matmul %89, %90, %cst_27 {dimension_numbers = #tpu.dot_dimension_numbers<[1], [0], [0], [1], [0, 0, 1, 1], [], []>} : vector<8x8xbf16>, vector<8x8xbf16>, vector<8x8xf32> -> vector<8x8xf32>
    %92 = vector.extract_strided_slice %49 {offsets = [0, 16], sizes = [8, 8], strides = [1, 1]} : vector<8x32xbf16> to vector<8x8xbf16>
    %93 = vector.extract_strided_slice %53 {offsets = [0, 16], sizes = [8, 8], strides = [1, 1]} : vector<8x32xbf16> to vector<8x8xbf16>
    %cst_28 = arith.constant dense<0.000000e+00> : vector<8x8xf32>
    %94 = tpu.matmul %92, %93, %cst_28 {dimension_numbers = #tpu.dot_dimension_numbers<[1], [1], [0], [0], [0, 0, 1, 0], [], []>} : vector<8x8xbf16>, vector<8x8xbf16>, vector<8x8xf32> -> vector<8x8xf32>
    %95 = arith.addf %94, %33 : vector<8x8xf32>
    %cst_29 = arith.constant dense<0xFF800000> : vector<8xf32>
    %96 = vector.multi_reduction <maximumf>, %95, %cst_29 [1] : vector<8x8xf32> to vector<8xf32>
    %97 = vector.shape_cast %96 : vector<8xf32> to vector<8x1xf32>
    %98 = vector.broadcast %97 : vector<8x1xf32> to vector<8x8xf32>
    %99 = arith.subf %95, %98 : vector<8x8xf32>
    %100 = math.exp %99 : vector<8x8xf32>
    %cst_30 = arith.constant dense<0.000000e+00> : vector<8xf32>
    %101 = vector.multi_reduction <add>, %100, %cst_30 [1] : vector<8x8xf32> to vector<8xf32>
    %102 = vector.shape_cast %101 : vector<8xf32> to vector<8x1xf32>
    %103 = tpu.reciprocal %102 {approx = true} : vector<8x1xf32> -> vector<8x1xf32>
    %104 = vector.broadcast %103 : vector<8x1xf32> to vector<8x8xf32>
    %105 = arith.mulf %100, %104 : vector<8x8xf32>
    %106 = arith.truncf %105 : vector<8x8xf32> to vector<8x8xbf16>
    %107 = vector.extract_strided_slice %57 {offsets = [0, 16], sizes = [8, 8], strides = [1, 1]} : vector<8x32xbf16> to vector<8x8xbf16>
    %cst_31 = arith.constant dense<0.000000e+00> : vector<8x8xf32>
    %108 = tpu.matmul %106, %107, %cst_31 {dimension_numbers = #tpu.dot_dimension_numbers<[1], [0], [0], [1], [0, 0, 1, 1], [], []>} : vector<8x8xbf16>, vector<8x8xbf16>, vector<8x8xf32> -> vector<8x8xf32>
    %109 = vector.extract_strided_slice %49 {offsets = [0, 24], sizes = [8, 8], strides = [1, 1]} : vector<8x32xbf16> to vector<8x8xbf16>
    %110 = vector.extract_strided_slice %53 {offsets = [0, 24], sizes = [8, 8], strides = [1, 1]} : vector<8x32xbf16> to vector<8x8xbf16>
    %cst_32 = arith.constant dense<0.000000e+00> : vector<8x8xf32>
    %111 = tpu.matmul %109, %110, %cst_32 {dimension_numbers = #tpu.dot_dimension_numbers<[1], [1], [0], [0], [0, 0, 1, 0], [], []>} : vector<8x8xbf16>, vector<8x8xbf16>, vector<8x8xf32> -> vector<8x8xf32>
    %112 = arith.addf %111, %33 : vector<8x8xf32>
    %cst_33 = arith.constant dense<0xFF800000> : vector<8xf32>
    %113 = vector.multi_reduction <maximumf>, %112, %cst_33 [1] : vector<8x8xf32> to vector<8xf32>
    %114 = vector.shape_cast %113 : vector<8xf32> to vector<8x1xf32>
    %115 = vector.broadcast %114 : vector<8x1xf32> to vector<8x8xf32>
    %116 = arith.subf %112, %115 : vector<8x8xf32>
    %117 = math.exp %116 : vector<8x8xf32>
    %cst_34 = arith.constant dense<0.000000e+00> : vector<8xf32>
    %118 = vector.multi_reduction <add>, %117, %cst_34 [1] : vector<8x8xf32> to vector<8xf32>
    %119 = vector.shape_cast %118 : vector<8xf32> to vector<8x1xf32>
    %120 = tpu.reciprocal %119 {approx = true} : vector<8x1xf32> -> vector<8x1xf32>
    %121 = vector.broadcast %120 : vector<8x1xf32> to vector<8x8xf32>
    %122 = arith.mulf %117, %121 : vector<8x8xf32>
    %123 = arith.truncf %122 : vector<8x8xf32> to vector<8x8xbf16>
    %124 = vector.extract_strided_slice %57 {offsets = [0, 24], sizes = [8, 8], strides = [1, 1]} : vector<8x32xbf16> to vector<8x8xbf16>
    %cst_35 = arith.constant dense<0.000000e+00> : vector<8x8xf32>
    %125 = tpu.matmul %123, %124, %cst_35 {dimension_numbers = #tpu.dot_dimension_numbers<[1], [0], [0], [1], [0, 0, 1, 1], [], []>} : vector<8x8xbf16>, vector<8x8xbf16>, vector<8x8xf32> -> vector<8x8xf32>
    %126 = tpu.concatenate %74, %91, %108, %125 in 1 : vector<8x8xf32>, vector<8x8xf32>, vector<8x8xf32>, vector<8x8xf32> -> vector<8x32xf32>
    %127 = arith.truncf %126 : vector<8x32xf32> to vector<8x32xbf16>
    %cst_36 = arith.constant dense<0.000000e+00> : vector<8x32xf32>
    %128 = tpu.matmul %127, %38, %cst_36 {dimension_numbers = #tpu.dot_dimension_numbers<[1], [0], [0], [1], [0, 0, 1, 1], [], []>} : vector<8x32xbf16>, vector<32x32xbf16>, vector<8x32xf32> -> vector<8x32xf32>
    %129 = vector.broadcast %42 : vector<1x32xf32> to vector<8x32xf32>
    %130 = arith.addf %128, %129 : vector<8x32xf32>
    %131 = arith.addf %5, %130 : vector<8x32xf32>
    %132 = vector.extract_strided_slice %9 {offsets = [1, 0], sizes = [1, 32], strides = [1, 1]} : vector<15x32xf32> to vector<1x32xf32>
    %133 = vector.extract_strided_slice %9 {offsets = [4, 0], sizes = [1, 32], strides = [1, 1]} : vector<15x32xf32> to vector<1x32xf32>
    %cst_37 = arith.constant dense<0.000000e+00> : vector<8xf32>
    %134 = vector.multi_reduction <add>, %131, %cst_37 [1] : vector<8x32xf32> to vector<8xf32>
    %135 = vector.shape_cast %134 : vector<8xf32> to vector<8x1xf32>
    %cst_38 = arith.constant 3.200000e+01 : f32
    %136 = vector.broadcast %cst_38 : f32 to vector<8x1xf32>
    %137 = arith.divf %135, %136 : vector<8x1xf32>
    %138 = vector.broadcast %137 : vector<8x1xf32> to vector<8x32xf32>
    %139 = arith.subf %131, %138 : vector<8x32xf32>
    %140 = arith.mulf %139, %139 : vector<8x32xf32>
    %cst_39 = arith.constant dense<0.000000e+00> : vector<8xf32>
    %141 = vector.multi_reduction <add>, %140, %cst_39 [1] : vector<8x32xf32> to vector<8xf32>
    %142 = vector.shape_cast %141 : vector<8xf32> to vector<8x1xf32>
    %cst_40 = arith.constant 0.0322580636 : f32
    %143 = vector.broadcast %cst_40 : f32 to vector<8x1xf32>
    %144 = arith.mulf %142, %143 : vector<8x1xf32>
    %145 = vector.broadcast %132 : vector<1x32xf32> to vector<8x32xf32>
    %146 = arith.mulf %145, %139 : vector<8x32xf32>
    %147 = math.sqrt %144 : vector<8x1xf32>
    %cst_41 = arith.constant 9.99999997E-7 : f32
    %148 = vector.broadcast %cst_41 : f32 to vector<8x1xf32>
    %149 = arith.addf %147, %148 : vector<8x1xf32>
    %150 = vector.broadcast %149 : vector<8x1xf32> to vector<8x32xf32>
    %151 = arith.divf %146, %150 : vector<8x32xf32>
    %152 = vector.broadcast %133 : vector<1x32xf32> to vector<8x32xf32>
    %153 = arith.addf %151, %152 : vector<8x32xf32>
    %c0_42 = arith.constant 0 : index
    %c0_43 = arith.constant 0 : index
    %c0_44 = arith.constant 0 : index
    %154 = vector.load %arg5[%c0_42, %c0_43, %c0_44] : memref<1x1x12xf32, #tpu.memory_space<vmem>>, vector<1x1x12xf32>
    %155 = vector.shape_cast %154 : vector<1x1x12xf32> to vector<1x12xf32>
    %c0_45 = arith.constant 0 : index
    %c0_46 = arith.constant 0 : index
    %c128 = arith.constant 128 : index
    %156 = vector.load %arg6[%c0_45, %c0_46, %c128] : memref<1x32x2304xbf16, #tpu.memory_space<vmem>>, vector<1x32x128xbf16>
    %157 = vector.shape_cast %156 : vector<1x32x128xbf16> to vector<32x128xbf16>
    %158 = vector.extract_strided_slice %157 {offsets = [0, 0], sizes = [32, 32], strides = [1, 1]} : vector<32x128xbf16> to vector<32x32xbf16>
    %159 = vector.extract_strided_slice %157 {offsets = [0, 32], sizes = [32, 64], strides = [1, 1]} : vector<32x128xbf16> to vector<32x64xbf16>
    %160 = vector.extract_strided_slice %157 {offsets = [0, 96], sizes = [32, 32], strides = [1, 1]} : vector<32x128xbf16> to vector<32x32xbf16>
    %161 = vector.extract_strided_slice %9 {offsets = [10, 0], sizes = [1, 32], strides = [1, 1]} : vector<15x32xf32> to vector<1x32xf32>
    %162 = vector.extract_strided_slice %9 {offsets = [11, 0], sizes = [1, 32], strides = [1, 1]} : vector<15x32xf32> to vector<1x32xf32>
    %163 = vector.extract_strided_slice %9 {offsets = [12, 0], sizes = [1, 32], strides = [1, 1]} : vector<15x32xf32> to vector<1x32xf32>
    %164 = vector.extract_strided_slice %9 {offsets = [13, 0], sizes = [1, 32], strides = [1, 1]} : vector<15x32xf32> to vector<1x32xf32>
    %165 = arith.truncf %153 : vector<8x32xf32> to vector<8x32xbf16>
    %cst_47 = arith.constant dense<0.000000e+00> : vector<8x32xf32>
    %166 = tpu.matmul %165, %158, %cst_47 {dimension_numbers = #tpu.dot_dimension_numbers<[1], [0], [0], [1], [0, 0, 1, 1], [], []>} : vector<8x32xbf16>, vector<32x32xbf16>, vector<8x32xf32> -> vector<8x32xf32>
    %167 = vector.broadcast %161 : vector<1x32xf32> to vector<8x32xf32>
    %168 = arith.addf %166, %167 : vector<8x32xf32>
    %169 = arith.truncf %7 : vector<12x32xf32> to vector<12x32xbf16>
    %cst_48 = arith.constant dense<0.000000e+00> : vector<12x64xf32>
    %170 = tpu.matmul %169, %159, %cst_48 {dimension_numbers = #tpu.dot_dimension_numbers<[1], [0], [0], [1], [0, 0, 1, 1], [], []>} : vector<12x32xbf16>, vector<32x64xbf16>, vector<12x64xf32> -> vector<12x64xf32>
    %171 = arith.truncf %168 : vector<8x32xf32> to vector<8x32xbf16>
    %172 = vector.extract_strided_slice %170 {offsets = [0, 0], sizes = [12, 32], strides = [1, 1]} : vector<12x64xf32> to vector<12x32xf32>
    %173 = vector.broadcast %162 : vector<1x32xf32> to vector<12x32xf32>
    %174 = arith.addf %172, %173 : vector<12x32xf32>
    %175 = arith.truncf %174 : vector<12x32xf32> to vector<12x32xbf16>
    %176 = vector.extract_strided_slice %170 {offsets = [0, 32], sizes = [12, 32], strides = [1, 1]} : vector<12x64xf32> to vector<12x32xf32>
    %177 = vector.broadcast %163 : vector<1x32xf32> to vector<12x32xf32>
    %178 = arith.addf %176, %177 : vector<12x32xf32>
    %179 = arith.truncf %178 : vector<12x32xf32> to vector<12x32xbf16>
    %180 = vector.extract_strided_slice %171 {offsets = [0, 0], sizes = [8, 8], strides = [1, 1]} : vector<8x32xbf16> to vector<8x8xbf16>
    %181 = vector.extract_strided_slice %175 {offsets = [0, 0], sizes = [12, 8], strides = [1, 1]} : vector<12x32xbf16> to vector<12x8xbf16>
    %cst_49 = arith.constant dense<0.000000e+00> : vector<8x12xf32>
    %182 = tpu.matmul %180, %181, %cst_49 {dimension_numbers = #tpu.dot_dimension_numbers<[1], [1], [0], [0], [0, 0, 1, 0], [], []>} : vector<8x8xbf16>, vector<12x8xbf16>, vector<8x12xf32> -> vector<8x12xf32>
    %183 = vector.broadcast %155 : vector<1x12xf32> to vector<8x12xf32>
    %184 = arith.addf %182, %183 : vector<8x12xf32>
    %cst_50 = arith.constant dense<0xFF800000> : vector<8xf32>
    %185 = vector.multi_reduction <maximumf>, %184, %cst_50 [1] : vector<8x12xf32> to vector<8xf32>
    %186 = vector.shape_cast %185 : vector<8xf32> to vector<8x1xf32>
    %187 = vector.broadcast %186 : vector<8x1xf32> to vector<8x12xf32>
    %188 = arith.subf %184, %187 : vector<8x12xf32>
    %189 = math.exp %188 : vector<8x12xf32>
    %cst_51 = arith.constant dense<0.000000e+00> : vector<8xf32>
    %190 = vector.multi_reduction <add>, %189, %cst_51 [1] : vector<8x12xf32> to vector<8xf32>
    %191 = vector.shape_cast %190 : vector<8xf32> to vector<8x1xf32>
    %192 = tpu.reciprocal %191 {approx = true} : vector<8x1xf32> -> vector<8x1xf32>
    %193 = vector.broadcast %192 : vector<8x1xf32> to vector<8x12xf32>
    %194 = arith.mulf %189, %193 : vector<8x12xf32>
    %195 = arith.truncf %194 : vector<8x12xf32> to vector<8x12xbf16>
    %196 = vector.extract_strided_slice %179 {offsets = [0, 0], sizes = [12, 8], strides = [1, 1]} : vector<12x32xbf16> to vector<12x8xbf16>
    %cst_52 = arith.constant dense<0.000000e+00> : vector<8x8xf32>
    %197 = tpu.matmul %195, %196, %cst_52 {dimension_numbers = #tpu.dot_dimension_numbers<[1], [0], [0], [1], [0, 0, 1, 1], [], []>} : vector<8x12xbf16>, vector<12x8xbf16>, vector<8x8xf32> -> vector<8x8xf32>
    %198 = vector.extract_strided_slice %171 {offsets = [0, 8], sizes = [8, 8], strides = [1, 1]} : vector<8x32xbf16> to vector<8x8xbf16>
    %199 = vector.extract_strided_slice %175 {offsets = [0, 8], sizes = [12, 8], strides = [1, 1]} : vector<12x32xbf16> to vector<12x8xbf16>
    %cst_53 = arith.constant dense<0.000000e+00> : vector<8x12xf32>
    %200 = tpu.matmul %198, %199, %cst_53 {dimension_numbers = #tpu.dot_dimension_numbers<[1], [1], [0], [0], [0, 0, 1, 0], [], []>} : vector<8x8xbf16>, vector<12x8xbf16>, vector<8x12xf32> -> vector<8x12xf32>
    %201 = vector.broadcast %155 : vector<1x12xf32> to vector<8x12xf32>
    %202 = arith.addf %200, %201 : vector<8x12xf32>
    %cst_54 = arith.constant dense<0xFF800000> : vector<8xf32>
    %203 = vector.multi_reduction <maximumf>, %202, %cst_54 [1] : vector<8x12xf32> to vector<8xf32>
    %204 = vector.shape_cast %203 : vector<8xf32> to vector<8x1xf32>
    %205 = vector.broadcast %204 : vector<8x1xf32> to vector<8x12xf32>
    %206 = arith.subf %202, %205 : vector<8x12xf32>
    %207 = math.exp %206 : vector<8x12xf32>
    %cst_55 = arith.constant dense<0.000000e+00> : vector<8xf32>
    %208 = vector.multi_reduction <add>, %207, %cst_55 [1] : vector<8x12xf32> to vector<8xf32>
    %209 = vector.shape_cast %208 : vector<8xf32> to vector<8x1xf32>
    %210 = tpu.reciprocal %209 {approx = true} : vector<8x1xf32> -> vector<8x1xf32>
    %211 = vector.broadcast %210 : vector<8x1xf32> to vector<8x12xf32>
    %212 = arith.mulf %207, %211 : vector<8x12xf32>
    %213 = arith.truncf %212 : vector<8x12xf32> to vector<8x12xbf16>
    %214 = vector.extract_strided_slice %179 {offsets = [0, 8], sizes = [12, 8], strides = [1, 1]} : vector<12x32xbf16> to vector<12x8xbf16>
    %cst_56 = arith.constant dense<0.000000e+00> : vector<8x8xf32>
    %215 = tpu.matmul %213, %214, %cst_56 {dimension_numbers = #tpu.dot_dimension_numbers<[1], [0], [0], [1], [0, 0, 1, 1], [], []>} : vector<8x12xbf16>, vector<12x8xbf16>, vector<8x8xf32> -> vector<8x8xf32>
    %216 = vector.extract_strided_slice %171 {offsets = [0, 16], sizes = [8, 8], strides = [1, 1]} : vector<8x32xbf16> to vector<8x8xbf16>
    %217 = vector.extract_strided_slice %175 {offsets = [0, 16], sizes = [12, 8], strides = [1, 1]} : vector<12x32xbf16> to vector<12x8xbf16>
    %cst_57 = arith.constant dense<0.000000e+00> : vector<8x12xf32>
    %218 = tpu.matmul %216, %217, %cst_57 {dimension_numbers = #tpu.dot_dimension_numbers<[1], [1], [0], [0], [0, 0, 1, 0], [], []>} : vector<8x8xbf16>, vector<12x8xbf16>, vector<8x12xf32> -> vector<8x12xf32>
    %219 = vector.broadcast %155 : vector<1x12xf32> to vector<8x12xf32>
    %220 = arith.addf %218, %219 : vector<8x12xf32>
    %cst_58 = arith.constant dense<0xFF800000> : vector<8xf32>
    %221 = vector.multi_reduction <maximumf>, %220, %cst_58 [1] : vector<8x12xf32> to vector<8xf32>
    %222 = vector.shape_cast %221 : vector<8xf32> to vector<8x1xf32>
    %223 = vector.broadcast %222 : vector<8x1xf32> to vector<8x12xf32>
    %224 = arith.subf %220, %223 : vector<8x12xf32>
    %225 = math.exp %224 : vector<8x12xf32>
    %cst_59 = arith.constant dense<0.000000e+00> : vector<8xf32>
    %226 = vector.multi_reduction <add>, %225, %cst_59 [1] : vector<8x12xf32> to vector<8xf32>
    %227 = vector.shape_cast %226 : vector<8xf32> to vector<8x1xf32>
    %228 = tpu.reciprocal %227 {approx = true} : vector<8x1xf32> -> vector<8x1xf32>
    %229 = vector.broadcast %228 : vector<8x1xf32> to vector<8x12xf32>
    %230 = arith.mulf %225, %229 : vector<8x12xf32>
    %231 = arith.truncf %230 : vector<8x12xf32> to vector<8x12xbf16>
    %232 = vector.extract_strided_slice %179 {offsets = [0, 16], sizes = [12, 8], strides = [1, 1]} : vector<12x32xbf16> to vector<12x8xbf16>
    %cst_60 = arith.constant dense<0.000000e+00> : vector<8x8xf32>
    %233 = tpu.matmul %231, %232, %cst_60 {dimension_numbers = #tpu.dot_dimension_numbers<[1], [0], [0], [1], [0, 0, 1, 1], [], []>} : vector<8x12xbf16>, vector<12x8xbf16>, vector<8x8xf32> -> vector<8x8xf32>
    %234 = vector.extract_strided_slice %171 {offsets = [0, 24], sizes = [8, 8], strides = [1, 1]} : vector<8x32xbf16> to vector<8x8xbf16>
    %235 = vector.extract_strided_slice %175 {offsets = [0, 24], sizes = [12, 8], strides = [1, 1]} : vector<12x32xbf16> to vector<12x8xbf16>
    %cst_61 = arith.constant dense<0.000000e+00> : vector<8x12xf32>
    %236 = tpu.matmul %234, %235, %cst_61 {dimension_numbers = #tpu.dot_dimension_numbers<[1], [1], [0], [0], [0, 0, 1, 0], [], []>} : vector<8x8xbf16>, vector<12x8xbf16>, vector<8x12xf32> -> vector<8x12xf32>
    %237 = vector.broadcast %155 : vector<1x12xf32> to vector<8x12xf32>
    %238 = arith.addf %236, %237 : vector<8x12xf32>
    %cst_62 = arith.constant dense<0xFF800000> : vector<8xf32>
    %239 = vector.multi_reduction <maximumf>, %238, %cst_62 [1] : vector<8x12xf32> to vector<8xf32>
    %240 = vector.shape_cast %239 : vector<8xf32> to vector<8x1xf32>
    %241 = vector.broadcast %240 : vector<8x1xf32> to vector<8x12xf32>
    %242 = arith.subf %238, %241 : vector<8x12xf32>
    %243 = math.exp %242 : vector<8x12xf32>
    %cst_63 = arith.constant dense<0.000000e+00> : vector<8xf32>
    %244 = vector.multi_reduction <add>, %243, %cst_63 [1] : vector<8x12xf32> to vector<8xf32>
    %245 = vector.shape_cast %244 : vector<8xf32> to vector<8x1xf32>
    %246 = tpu.reciprocal %245 {approx = true} : vector<8x1xf32> -> vector<8x1xf32>
    %247 = vector.broadcast %246 : vector<8x1xf32> to vector<8x12xf32>
    %248 = arith.mulf %243, %247 : vector<8x12xf32>
    %249 = arith.truncf %248 : vector<8x12xf32> to vector<8x12xbf16>
    %250 = vector.extract_strided_slice %179 {offsets = [0, 24], sizes = [12, 8], strides = [1, 1]} : vector<12x32xbf16> to vector<12x8xbf16>
    %cst_64 = arith.constant dense<0.000000e+00> : vector<8x8xf32>
    %251 = tpu.matmul %249, %250, %cst_64 {dimension_numbers = #tpu.dot_dimension_numbers<[1], [0], [0], [1], [0, 0, 1, 1], [], []>} : vector<8x12xbf16>, vector<12x8xbf16>, vector<8x8xf32> -> vector<8x8xf32>
    %252 = tpu.concatenate %197, %215, %233, %251 in 1 : vector<8x8xf32>, vector<8x8xf32>, vector<8x8xf32>, vector<8x8xf32> -> vector<8x32xf32>
    %253 = arith.truncf %252 : vector<8x32xf32> to vector<8x32xbf16>
    %cst_65 = arith.constant dense<0.000000e+00> : vector<8x32xf32>
    %254 = tpu.matmul %253, %160, %cst_65 {dimension_numbers = #tpu.dot_dimension_numbers<[1], [0], [0], [1], [0, 0, 1, 1], [], []>} : vector<8x32xbf16>, vector<32x32xbf16>, vector<8x32xf32> -> vector<8x32xf32>
    %255 = vector.broadcast %164 : vector<1x32xf32> to vector<8x32xf32>
    %256 = arith.addf %254, %255 : vector<8x32xf32>
    %257 = arith.addf %131, %256 : vector<8x32xf32>
    %258 = vector.extract_strided_slice %9 {offsets = [2, 0], sizes = [1, 32], strides = [1, 1]} : vector<15x32xf32> to vector<1x32xf32>
    %259 = vector.extract_strided_slice %9 {offsets = [5, 0], sizes = [1, 32], strides = [1, 1]} : vector<15x32xf32> to vector<1x32xf32>
    %cst_66 = arith.constant dense<0.000000e+00> : vector<8xf32>
    %260 = vector.multi_reduction <add>, %257, %cst_66 [1] : vector<8x32xf32> to vector<8xf32>
    %261 = vector.shape_cast %260 : vector<8xf32> to vector<8x1xf32>
    %cst_67 = arith.constant 3.200000e+01 : f32
    %262 = vector.broadcast %cst_67 : f32 to vector<8x1xf32>
    %263 = arith.divf %261, %262 : vector<8x1xf32>
    %264 = vector.broadcast %263 : vector<8x1xf32> to vector<8x32xf32>
    %265 = arith.subf %257, %264 : vector<8x32xf32>
    %266 = arith.mulf %265, %265 : vector<8x32xf32>
    %cst_68 = arith.constant dense<0.000000e+00> : vector<8xf32>
    %267 = vector.multi_reduction <add>, %266, %cst_68 [1] : vector<8x32xf32> to vector<8xf32>
    %268 = vector.shape_cast %267 : vector<8xf32> to vector<8x1xf32>
    %cst_69 = arith.constant 0.0322580636 : f32
    %269 = vector.broadcast %cst_69 : f32 to vector<8x1xf32>
    %270 = arith.mulf %268, %269 : vector<8x1xf32>
    %271 = vector.broadcast %258 : vector<1x32xf32> to vector<8x32xf32>
    %272 = arith.mulf %271, %265 : vector<8x32xf32>
    %273 = math.sqrt %270 : vector<8x1xf32>
    %cst_70 = arith.constant 9.99999997E-7 : f32
    %274 = vector.broadcast %cst_70 : f32 to vector<8x1xf32>
    %275 = arith.addf %273, %274 : vector<8x1xf32>
    %276 = vector.broadcast %275 : vector<8x1xf32> to vector<8x32xf32>
    %277 = arith.divf %272, %276 : vector<8x32xf32>
    %278 = vector.broadcast %259 : vector<1x32xf32> to vector<8x32xf32>
    %279 = arith.addf %277, %278 : vector<8x32xf32>
    %c0_71 = arith.constant 0 : index
    %c0_72 = arith.constant 0 : index
    %c256 = arith.constant 256 : index
    %280 = vector.load %arg6[%c0_71, %c0_72, %c256] : memref<1x32x2304xbf16, #tpu.memory_space<vmem>>, vector<1x32x2048xbf16>
    %281 = vector.shape_cast %280 : vector<1x32x2048xbf16> to vector<32x2048xbf16>
    %282 = arith.truncf %279 : vector<8x32xf32> to vector<8x32xbf16>
    %cst_73 = arith.constant dense<0.000000e+00> : vector<8x2048xf32>
    %283 = tpu.matmul %282, %281, %cst_73 {dimension_numbers = #tpu.dot_dimension_numbers<[1], [0], [0], [1], [0, 0, 1, 1], [], []>} : vector<8x32xbf16>, vector<32x2048xbf16>, vector<8x2048xf32> -> vector<8x2048xf32>
    %c0_74 = arith.constant 0 : index
    %c0_75 = arith.constant 0 : index
    %c0_76 = arith.constant 0 : index
    %284 = vector.load %arg9[%c0_74, %c0_75, %c0_76] : memref<1x1x2048xf32, #tpu.memory_space<vmem>>, vector<1x1x2048xf32>
    %285 = vector.shape_cast %284 : vector<1x1x2048xf32> to vector<1x2048xf32>
    %286 = vector.broadcast %285 : vector<1x2048xf32> to vector<8x2048xf32>
    %287 = arith.addf %283, %286 : vector<8x2048xf32>
    %288 = arith.mulf %287, %287 : vector<8x2048xf32>
    %289 = arith.mulf %287, %288 : vector<8x2048xf32>
    %cst_77 = arith.constant 4.471500e-02 : f32
    %290 = vector.broadcast %cst_77 : f32 to vector<8x2048xf32>
    %291 = arith.mulf %290, %289 : vector<8x2048xf32>
    %292 = arith.addf %287, %291 : vector<8x2048xf32>
    %cst_78 = arith.constant 0.797884583 : f32
    %293 = vector.broadcast %cst_78 : f32 to vector<8x2048xf32>
    %294 = arith.mulf %293, %292 : vector<8x2048xf32>
    %295 = math.tanh %294 : vector<8x2048xf32>
    %cst_79 = arith.constant 1.000000e+00 : f32
    %296 = vector.broadcast %cst_79 : f32 to vector<8x2048xf32>
    %297 = arith.addf %296, %295 : vector<8x2048xf32>
    %cst_80 = arith.constant 5.000000e-01 : f32
    %298 = vector.broadcast %cst_80 : f32 to vector<8x2048xf32>
    %299 = arith.mulf %298, %297 : vector<8x2048xf32>
    %300 = arith.mulf %287, %299 : vector<8x2048xf32>
    %301 = arith.truncf %300 : vector<8x2048xf32> to vector<8x2048xbf16>
    %c0_81 = arith.constant 0 : index
    %c0_82 = arith.constant 0 : index
    %c0_83 = arith.constant 0 : index
    %302 = vector.load %arg7[%c0_81, %c0_82, %c0_83] : memref<1x2048x32xbf16, #tpu.memory_space<vmem>>, vector<1x2048x32xbf16>
    %303 = vector.shape_cast %302 : vector<1x2048x32xbf16> to vector<2048x32xbf16>
    %cst_84 = arith.constant dense<0.000000e+00> : vector<8x32xf32>
    %304 = tpu.matmul %301, %303, %cst_84 {dimension_numbers = #tpu.dot_dimension_numbers<[1], [0], [0], [1], [0, 0, 1, 1], [], []>} : vector<8x2048xbf16>, vector<2048x32xbf16>, vector<8x32xf32> -> vector<8x32xf32>
    %305 = vector.extract_strided_slice %9 {offsets = [14, 0], sizes = [1, 32], strides = [1, 1]} : vector<15x32xf32> to vector<1x32xf32>
    %306 = vector.broadcast %305 : vector<1x32xf32> to vector<8x32xf32>
    %307 = arith.addf %304, %306 : vector<8x32xf32>
    %308 = arith.addf %257, %307 : vector<8x32xf32>
    %309 = arith.index_cast %arg1 : i32 to index
    %c0_85 = arith.constant 0 : index
    %c0_86 = arith.constant 0 : index
    %310 = vector.load %arg13[%309, %c0_85, %c0_86] : memref<2x8x32xf32, #tpu.memory_space<vmem>>, vector<1x8x32xf32>
    %311 = vector.shape_cast %310 : vector<1x8x32xf32> to vector<8x32xf32>
    %312 = vector.shape_cast %308 : vector<8x32xf32> to vector<1x8x32xf32>
    tpu.vector_store %arg13[%309, %c0_85, %c0_86], %312 {strides = array<i32>} : memref<2x8x32xf32, #tpu.memory_space<vmem>>, vector<1x8x32xf32>,
    %c1_i32 = arith.constant 1 : i32
    %313 = arith.cmpi eq, %arg0, %c1_i32 : i32
    %314 = arith.extui %313 : i1 to i32
    %c0_i32_87 = arith.constant 0 : i32
    %315 = arith.cmpi ne, %314, %c0_i32_87 : i32
    scf.if %315 {
      %cst_88 = arith.constant dense<0.000000e+00> : vector<8xf32>
      %316 = vector.multi_reduction <add>, %308, %cst_88 [1] : vector<8x32xf32> to vector<8xf32>
      %317 = vector.shape_cast %316 : vector<8xf32> to vector<8x1xf32>
      %cst_89 = arith.constant 3.200000e+01 : f32
      %318 = vector.broadcast %cst_89 : f32 to vector<8x1xf32>
      %319 = arith.divf %317, %318 : vector<8x1xf32>
      %320 = vector.broadcast %319 : vector<8x1xf32> to vector<8x32xf32>
      %321 = arith.subf %308, %320 : vector<8x32xf32>
      %322 = arith.mulf %321, %321 : vector<8x32xf32>
      %cst_90 = arith.constant dense<0.000000e+00> : vector<8xf32>
      %323 = vector.multi_reduction <add>, %322, %cst_90 [1] : vector<8x32xf32> to vector<8xf32>
      %324 = vector.shape_cast %323 : vector<8xf32> to vector<8x1xf32>
      %cst_91 = arith.constant 0.0322580636 : f32
      %325 = vector.broadcast %cst_91 : f32 to vector<8x1xf32>
      %326 = arith.mulf %324, %325 : vector<8x1xf32>
      %c0_92 = arith.constant 0 : index
      %c0_93 = arith.constant 0 : index
      %327 = vector.load %arg10[%c0_92, %c0_93] : memref<1x32xf32, #tpu.memory_space<vmem>>, vector<1x32xf32>
      %328 = vector.broadcast %327 : vector<1x32xf32> to vector<8x32xf32>
      %329 = arith.mulf %328, %321 : vector<8x32xf32>
      %330 = math.sqrt %326 : vector<8x1xf32>
      %cst_94 = arith.constant 9.99999997E-7 : f32
      %331 = vector.broadcast %cst_94 : f32 to vector<8x1xf32>
      %332 = arith.addf %330, %331 : vector<8x1xf32>
      %333 = vector.broadcast %332 : vector<8x1xf32> to vector<8x32xf32>
      %334 = arith.divf %329, %333 : vector<8x32xf32>
      %c0_95 = arith.constant 0 : index
      %c0_96 = arith.constant 0 : index
      %335 = vector.load %arg11[%c0_95, %c0_96] : memref<1x32xf32, #tpu.memory_space<vmem>>, vector<1x32xf32>
      %336 = vector.broadcast %335 : vector<1x32xf32> to vector<8x32xf32>
      %337 = arith.addf %334, %336 : vector<8x32xf32>
      %c0_97 = arith.constant 0 : index
      %c0_98 = arith.constant 0 : index
      %c0_99 = arith.constant 0 : index
      %338 = vector.load %arg12[%c0_97, %c0_98, %c0_99] : memref<1x8x32xf32, #tpu.memory_space<vmem>>, vector<1x8x32xf32>
      %339 = vector.shape_cast %338 : vector<1x8x32xf32> to vector<8x32xf32>
      %340 = vector.shape_cast %337 : vector<8x32xf32> to vector<1x8x32xf32>
      tpu.vector_store %arg12[%c0_97, %c0_98, %c0_99], %340 {strides = array<i32>} : memref<1x8x32xf32, #tpu.memory_space<vmem>>, vector<1x8x32xf32>,
    } else {
    }
    return
  }
  func.func @transform_0(%arg0: i32, %arg1: i32) -> (i32, i32, i32) {
    %c0_i32 = arith.constant 0 : i32
    %c0_i32_0 = arith.constant 0 : i32
    %c0_i32_1 = arith.constant 0 : i32
    return %arg1, %c0_i32, %c0_i32_0 : i32, i32, i32
  }
  func.func @transform_1(%arg0: i32, %arg1: i32) -> (i32, i32, i32) {
    %c0_i32 = arith.constant 0 : i32
    %c0_i32_0 = arith.constant 0 : i32
    %c0_i32_1 = arith.constant 0 : i32
    return %arg1, %c0_i32, %c0_i32_0 : i32, i32, i32
  }
  func.func @transform_2(%arg0: i32, %arg1: i32) -> (i32, i32, i32) {
    %c0_i32 = arith.constant 0 : i32
    %c0_i32_0 = arith.constant 0 : i32
    %c0_i32_1 = arith.constant 0 : i32
    return %arg1, %c0_i32, %c0_i32_0 : i32, i32, i32
  }
  func.func @transform_3(%arg0: i32, %arg1: i32) -> (i32, i32, i32) {
    %c0_i32 = arith.constant 0 : i32
    %c0_i32_0 = arith.constant 0 : i32
    %c0_i32_1 = arith.constant 0 : i32
    return %arg1, %c0_i32, %c0_i32_0 : i32, i32, i32
  }
  func.func @transform_4(%arg0: i32, %arg1: i32) -> (i32, i32, i32) {
    %c0_i32 = arith.constant 0 : i32
    %c0_i32_0 = arith.constant 0 : i32
    %c0_i32_1 = arith.constant 0 : i32
    return %arg0, %c0_i32, %c0_i32_0 : i32, i32, i32
  }
  func.func @transform_5(%arg0: i32, %arg1: i32) -> (i32, i32, i32) {
    %c0_i32 = arith.constant 0 : i32
    %c0_i32_0 = arith.constant 0 : i32
    %c0_i32_1 = arith.constant 0 : i32
    return %arg0, %c0_i32, %c0_i32_0 : i32, i32, i32
  }
  func.func @transform_6(%arg0: i32, %arg1: i32) -> (i32, i32, i32) {
    %c0_i32 = arith.constant 0 : i32
    %c0_i32_0 = arith.constant 0 : i32
    %c0_i32_1 = arith.constant 0 : i32
    return %arg0, %c0_i32, %c0_i32_0 : i32, i32, i32
  }
  func.func @transform_7(%arg0: i32, %arg1: i32) -> (i32, i32, i32) {
    %c0_i32 = arith.constant 0 : i32
    %c0_i32_0 = arith.constant 0 : i32
    %c0_i32_1 = arith.constant 0 : i32
    return %arg0, %c0_i32, %c0_i32_0 : i32, i32, i32
  }
  func.func @transform_8(%arg0: i32, %arg1: i32) -> (i32, i32) {
    %c0_i32 = arith.constant 0 : i32
    %c0_i32_0 = arith.constant 0 : i32
    %c0_i32_1 = arith.constant 0 : i32
    return %c0_i32, %c0_i32_0 : i32, i32
  }
  func.func @transform_9(%arg0: i32, %arg1: i32) -> (i32, i32) {
    %c0_i32 = arith.constant 0 : i32
    %c0_i32_0 = arith.constant 0 : i32
    %c0_i32_1 = arith.constant 0 : i32
    return %c0_i32, %c0_i32_0 : i32, i32
  }
  func.func @transform_10(%arg0: i32, %arg1: i32) -> (i32, i32, i32) {
    %c0_i32 = arith.constant 0 : i32
    %c0_i32_0 = arith.constant 0 : i32
    %c0_i32_1 = arith.constant 0 : i32
    return %arg1, %c0_i32, %c0_i32_0 : i32, i32, i32
  }
}

</mosaic_0001>

<llo_original>
// kernel: decoder_forward.1
$region0: #{decoder_forward.1}
  #allocation0 [shape = 'u32[]', space=smem, size = 0x4, offset = 0x4, fixed_abs, tag = 'smem constant byte address 0x4 - core index']
  #allocation1 [shape = 'u32[72,128]{1,0:T(1,128)}', space=vmem, size = 0x9000, scoped, tag = 'internal scratch']
  #allocation2 [shape = 'f32[2,8,32]{2,1,0:T(8,128)}', space=vmem, size = 0x2000, scoped, tag = 'scratch operand']
  %s0 = inlined_call_operand.vmem [shape: f32[2,8,32], index: 0, kind: input, shape index: {}]
  %s1 = inlined_call_operand.vmem [shape: f32[2,12,32], index: 1, kind: input, shape index: {}]
  %s2 = inlined_call_operand.vmem [shape: f32[2,8,8], index: 2, kind: input, shape index: {}]
  %s3 = inlined_call_operand.vmem [shape: f32[2,1,12], index: 3, kind: input, shape index: {}]
  %s4 = inlined_call_operand.vmem [shape: bf16[2,32,2304], index: 4, kind: input, shape index: {}]
  %s5 = inlined_call_operand.vmem [shape: bf16[2,2048,32], index: 5, kind: input, shape index: {}]
  %s6 = inlined_call_operand.vmem [shape: f32[2,15,32], index: 6, kind: input, shape index: {}]
  %s7 = inlined_call_operand.vmem [shape: f32[2,1,2048], index: 7, kind: input, shape index: {}]
  %s8 = inlined_call_operand.vmem [shape: f32[1,32], index: 8, kind: input, shape index: {}]
  %s9 = inlined_call_operand.vmem [shape: f32[1,32], index: 9, kind: input, shape index: {}]
  %s10 = inlined_call_operand.hbm [shape: f32[2,8,32], index: 10, kind: output, shape index: {}]
  %s11 = sld [smem:[#allocation0]]
  $region81: #{decoder_forward.1} parent=0
    _
  %s13 = ssub.s32 1, %s11
  %s14 = scalar_select 0, %s13, %s11
  $region1: #{decoder_forward.1} parent=0
    #allocation3 [shape = 'u8[8192]{0}', space=vmem, size = 0x2000, scoped, tag = 'output window, operand 0']
    #allocation4 [shape = 's32[2]{0}', space=sflag, size = 0x8, scoped, tag = 'scoped memory for decoder_forward.1']
    %15 = vsyncpa [#allocation4], 0
    %s16 = scalar_lea.sflag [#allocation4], 1
    %17 = vsyncpa %s16, 0
    loop: start=0, step=1, limit=6
    $region2: #{decoder_forward.1} parent=1 // loop_pre_header
      _
    $region3: #{decoder_forward.1} parent=1 // loop_header
      %s19 = sphi 0, %s23
      %p20 = scmp.ge.s32.totalorder %s19, 6
      %s26 = sphi 0, %s38
      %s27 = sphi 0, %s34
      %s28 = sphi 0, %s26
      %s29 = sphi 0, %s27
      %s30 = sphi 0, %s28
      %s31 = sphi 0, %s29
      %s41 = sphi 0, %s43
      %s44 = sphi 0, %s41
      %s45 = sphi 0, %s44
      %s61 = sphi 0, %s45
      %s67 = sphi 0, %s69
      %s70 = sphi 0, %s67
      %s71 = sphi 0, %s70
      %s87 = sphi 0, %s71
      %s93 = sphi 0, %s95
      %s96 = sphi 0, %s93
      %s97 = sphi 0, %s96
      %s113 = sphi 0, %s97
      %s119 = sphi 0, %s121
      %s122 = sphi 0, %s119
      %s123 = sphi 0, %s122
      %s139 = sphi 0, %s123
      %s145 = sphi 0, %s147
      %s148 = sphi 0, %s145
      %s149 = sphi 0, %s148
      %s165 = sphi 0, %s149
      %s171 = sphi 0, %s173
      %s174 = sphi 0, %s171
      %s175 = sphi 0, %s174
      %s191 = sphi 0, %s175
      %s197 = sphi 0, %s199
      %s200 = sphi 0, %s197
      %s201 = sphi 0, %s200
      %s217 = sphi 0, %s201
      %s223 = sphi 0, %s225
      %s226 = sphi 0, %s223
      %s227 = sphi 0, %s226
      %s243 = sphi 0, %s227
      %s247 = sphi 0, %s247
      %s249 = sphi 0, %s247
      %s250 = sphi 0, %s249
      %s264 = sphi 0, %s250
      %s268 = sphi 0, %s268
      %s270 = sphi 0, %s268
      %s271 = sphi 0, %s270
      %s285 = sphi 0, %s271
      %s291 = sphi 0, %s293
      %s294 = sphi 0, %s291
      %s295 = sphi 0, %s294
      %s311 = sphi 0, %s295
    $region4: #{decoder_forward.1} parent=1 // loop_header_branch
      %22 = sbr.rel (%p20) target = $region8
    $region5: #{decoder_forward.1} parent=1 // loop_body
      %s24 = ssub.s32 %s19, 1
      %s25 = ssub.s32 %s19, 2
      %s32 = sadd.s32 1, %s27
      %p33 = scmp.ge.s32.totalorder %s32, 2
      %s34 = scalar_select %p33, 0, %s32
      %s35 = sadd.s32 1, %s26
      %s36 = scalar_select %p33, %s35, %s26
      %p37 = scmp.ge.s32.totalorder %s36, 2
      %s38 = scalar_select %p37, 0, %s36
      %s39 = ssub.s32 %s27, %s34
      %p40 = scmp.eq.s32.totalorder %s39, 0
      %s42 = sadd.s32 %s41, 1
      %s43 = scalar_select %p40, %s41, %s42
      %p46 = pneg %p40
      %p47 = scmp.eq.s32.totalorder %s19, 3
      %p48 = por %p46, %p47
      %p49 = scmp.ne.s32.totalorder %s41, %s44
      %p50 = scmp.eq.s32.totalorder %s19, 0
      %p51 = por %p49, %p50
      %p52 = scmp.ne.s32.totalorder %s41, %s44
      %p53 = scmp.eq.s32.totalorder %s24, 3
      %p54 = por %p52, %p53
      %p55 = scmp.ne.s32.totalorder %s44, %s45
      %p56 = scmp.eq.s32.totalorder %s24, 0
      %p57 = por %p55, %p56
      %p58 = scmp.ne.s32.totalorder %s44, %s45
      %p59 = scmp.eq.s32.totalorder %s25, 3
      %p60 = por %p58, %p59
      %p62 = scmp.ne.s32.totalorder %s45, %s61
      %p63 = scmp.eq.s32.totalorder %s25, 0
      %p64 = por %p62, %p63
      %s65 = ssub.s32 %s27, %s34
      %p66 = scmp.eq.s32.totalorder %s65, 0
      %s68 = sadd.s32 %s67, 1
      %s69 = scalar_select %p66, %s67, %s68
      %p72 = pneg %p66
      %p73 = scmp.eq.s32.totalorder %s19, 3
      %p74 = por %p72, %p73
      %p75 = scmp.ne.s32.totalorder %s67, %s70
      %p76 = scmp.eq.s32.totalorder %s19, 0
      %p77 = por %p75, %p76
      %p78 = scmp.ne.s32.totalorder %s67, %s70
      %p79 = scmp.eq.s32.totalorder %s24, 3
      %p80 = por %p78, %p79
      %p81 = scmp.ne.s32.totalorder %s70, %s71
      %p82 = scmp.eq.s32.totalorder %s24, 0
      %p83 = por %p81, %p82
      %p84 = scmp.ne.s32.totalorder %s70, %s71
      %p85 = scmp.eq.s32.totalorder %s25, 3
      %p86 = por %p84, %p85
      %p88 = scmp.ne.s32.totalorder %s71, %s87
      %p89 = scmp.eq.s32.totalorder %s25, 0
      %p90 = por %p88, %p89
      %s91 = ssub.s32 %s27, %s34
      %p92 = scmp.eq.s32.totalorder %s91, 0
      %s94 = sadd.s32 %s93, 1
      %s95 = scalar_select %p92, %s93, %s94
      %p98 = pneg %p92
      %p99 = scmp.eq.s32.totalorder %s19, 3
      %p100 = por %p98, %p99
      %p101 = scmp.ne.s32.totalorder %s93, %s96
      %p102 = scmp.eq.s32.totalorder %s19, 0
      %p103 = por %p101, %p102
      %p104 = scmp.ne.s32.totalorder %s93, %s96
      %p105 = scmp.eq.s32.totalorder %s24, 3
      %p106 = por %p104, %p105
      %p107 = scmp.ne.s32.totalorder %s96, %s97
      %p108 = scmp.eq.s32.totalorder %s24, 0
      %p109 = por %p107, %p108
      %p110 = scmp.ne.s32.totalorder %s96, %s97
      %p111 = scmp.eq.s32.totalorder %s25, 3
      %p112 = por %p110, %p111
      %p114 = scmp.ne.s32.totalorder %s97, %s113
      %p115 = scmp.eq.s32.totalorder %s25, 0
      %p116 = por %p114, %p115
      %s117 = ssub.s32 %s27, %s34
      %p118 = scmp.eq.s32.totalorder %s117, 0
      %s120 = sadd.s32 %s119, 1
      %s121 = scalar_select %p118, %s119, %s120
      %p124 = pneg %p118
      %p125 = scmp.eq.s32.totalorder %s19, 3
      %p126 = por %p124, %p125
      %p127 = scmp.ne.s32.totalorder %s119, %s122
      %p128 = scmp.eq.s32.totalorder %s19, 0
      %p129 = por %p127, %p128
      %p130 = scmp.ne.s32.totalorder %s119, %s122
      %p131 = scmp.eq.s32.totalorder %s24, 3
      %p132 = por %p130, %p131
      %p133 = scmp.ne.s32.totalorder %s122, %s123
      %p134 = scmp.eq.s32.totalorder %s24, 0
      %p135 = por %p133, %p134
      %p136 = scmp.ne.s32.totalorder %s122, %s123
      %p137 = scmp.eq.s32.totalorder %s25, 3
      %p138 = por %p136, %p137
      %p140 = scmp.ne.s32.totalorder %s123, %s139
      %p141 = scmp.eq.s32.totalorder %s25, 0
      %p142 = por %p140, %p141
      %s143 = ssub.s32 %s26, %s38
      %p144 = scmp.eq.s32.totalorder %s143, 0
      %s146 = sadd.s32 %s145, 1
      %s147 = scalar_select %p144, %s145, %s146
      %p150 = pneg %p144
      %p151 = scmp.eq.s32.totalorder %s19, 3
      %p152 = por %p150, %p151
      %p153 = scmp.ne.s32.totalorder %s145, %s148
      %p154 = scmp.eq.s32.totalorder %s19, 0
      %p155 = por %p153, %p154
      %p156 = scmp.ne.s32.totalorder %s145, %s148
      %p157 = scmp.eq.s32.totalorder %s24, 3
      %p158 = por %p156, %p157
      %p159 = scmp.ne.s32.totalorder %s148, %s149
      %p160 = scmp.eq.s32.totalorder %s24, 0
      %p161 = por %p159, %p160
      %p162 = scmp.ne.s32.totalorder %s148, %s149
      %p163 = scmp.eq.s32.totalorder %s25, 3
      %p164 = por %p162, %p163
      %p166 = scmp.ne.s32.totalorder %s149, %s165
      %p167 = scmp.eq.s32.totalorder %s25, 0
      %p168 = por %p166, %p167
      %s169 = ssub.s32 %s26, %s38
      %p170 = scmp.eq.s32.totalorder %s169, 0
      %s172 = sadd.s32 %s171, 1
      %s173 = scalar_select %p170, %s171, %s172
      %p176 = pneg %p170
      %p177 = scmp.eq.s32.totalorder %s19, 3
      %p178 = por %p176, %p177
      %p179 = scmp.ne.s32.totalorder %s171, %s174
      %p180 = scmp.eq.s32.totalorder %s19, 0
      %p181 = por %p179, %p180
      %p182 = scmp.ne.s32.totalorder %s171, %s174
      %p183 = scmp.eq.s32.totalorder %s24, 3
      %p184 = por %p182, %p183
      %p185 = scmp.ne.s32.totalorder %s174, %s175
      %p186 = scmp.eq.s32.totalorder %s24, 0
      %p187 = por %p185, %p186
      %p188 = scmp.ne.s32.totalorder %s174, %s175
      %p189 = scmp.eq.s32.totalorder %s25, 3
      %p190 = por %p188, %p189
      %p192 = scmp.ne.s32.totalorder %s175, %s191
      %p193 = scmp.eq.s32.totalorder %s25, 0
      %p194 = por %p192, %p193
      %s195 = ssub.s32 %s26, %s38
      %p196 = scmp.eq.s32.totalorder %s195, 0
      %s198 = sadd.s32 %s197, 1
      %s199 = scalar_select %p196, %s197, %s198
      %p202 = pneg %p196
      %p203 = scmp.eq.s32.totalorder %s19, 3
      %p204 = por %p202, %p203
      %p205 = scmp.ne.s32.totalorder %s197, %s200
      %p206 = scmp.eq.s32.totalorder %s19, 0
      %p207 = por %p205, %p206
      %p208 = scmp.ne.s32.totalorder %s197, %s200
      %p209 = scmp.eq.s32.totalorder %s24, 3
      %p210 = por %p208, %p209
      %p211 = scmp.ne.s32.totalorder %s200, %s201
      %p212 = scmp.eq.s32.totalorder %s24, 0
      %p213 = por %p211, %p212
      %p214 = scmp.ne.s32.totalorder %s200, %s201
      %p215 = scmp.eq.s32.totalorder %s25, 3
      %p216 = por %p214, %p215
      %p218 = scmp.ne.s32.totalorder %s201, %s217
      %p219 = scmp.eq.s32.totalorder %s25, 0
      %p220 = por %p218, %p219
      %s221 = ssub.s32 %s26, %s38
      %p222 = scmp.eq.s32.totalorder %s221, 0
      %s224 = sadd.s32 %s223, 1
      %s225 = scalar_select %p222, %s223, %s224
      %p228 = pneg %p222
      %p229 = scmp.eq.s32.totalorder %s19, 3
      %p230 = por %p228, %p229
      %p231 = scmp.ne.s32.totalorder %s223, %s226
      %p232 = scmp.eq.s32.totalorder %s19, 0
      %p233 = por %p231, %p232
      %p234 = scmp.ne.s32.totalorder %s223, %s226
      %p235 = scmp.eq.s32.totalorder %s24, 3
      %p236 = por %p234, %p235
      %p237 = scmp.ne.s32.totalorder %s226, %s227
      %p238 = scmp.eq.s32.totalorder %s24, 0
      %p239 = por %p237, %p238
      %p240 = scmp.ne.s32.totalorder %s226, %s227
      %p241 = scmp.eq.s32.totalorder %s25, 3
      %p242 = por %p240, %p241
      %p244 = scmp.ne.s32.totalorder %s227, %s243
      %p245 = scmp.eq.s32.totalorder %s25, 0
      %p246 = por %p244, %p245
      %s248 = sadd.s32 %s247, 1
      %p251 = scmp.eq.s32.totalorder %s19, 3
      %p252 = scmp.ne.s32.totalorder %s247, %s249
      %p253 = scmp.eq.s32.totalorder %s19, 0
      %p254 = por %p252, %p253
      %p255 = scmp.ne.s32.totalorder %s247, %s249
      %p256 = scmp.eq.s32.totalorder %s24, 3
      %p257 = por %p255, %p256
      %p258 = scmp.ne.s32.totalorder %s249, %s250
      %p259 = scmp.eq.s32.totalorder %s24, 0
      %p260 = por %p258, %p259
      %p261 = scmp.ne.s32.totalorder %s249, %s250
      %p262 = scmp.eq.s32.totalorder %s25, 3
      %p263 = por %p261, %p262
      %p265 = scmp.ne.s32.totalorder %s250, %s264
      %p266 = scmp.eq.s32.totalorder %s25, 0
      %p267 = por %p265, %p266
      %s269 = sadd.s32 %s268, 1
      %p272 = scmp.eq.s32.totalorder %s19, 3
      %p273 = scmp.ne.s32.totalorder %s268, %s270
      %p274 = scmp.eq.s32.totalorder %s19, 0
      %p275 = por %p273, %p274
      %p276 = scmp.ne.s32.totalorder %s268, %s270
      %p277 = scmp.eq.s32.totalorder %s24, 3
      %p278 = por %p276, %p277
      %p279 = scmp.ne.s32.totalorder %s270, %s271
      %p280 = scmp.eq.s32.totalorder %s24, 0
      %p281 = por %p279, %p280
      %p282 = scmp.ne.s32.totalorder %s270, %s271
      %p283 = scmp.eq.s32.totalorder %s25, 3
      %p284 = por %p282, %p283
      %p286 = scmp.ne.s32.totalorder %s271, %s285
      %p287 = scmp.eq.s32.totalorder %s25, 0
      %p288 = por %p286, %p287
      %s289 = ssub.s32 %s27, %s34
      %p290 = scmp.eq.s32.totalorder %s289, 0
      %s292 = sadd.s32 %s291, 1
      %s293 = scalar_select %p290, %s291, %s292
      %p296 = pneg %p290
      %p297 = scmp.eq.s32.totalorder %s19, 3
      %p298 = por %p296, %p297
      %p299 = scmp.ne.s32.totalorder %s291, %s294
      %p300 = scmp.eq.s32.totalorder %s19, 0
      %p301 = por %p299, %p300
      %p302 = scmp.ne.s32.totalorder %s291, %s294
      %p303 = scmp.eq.s32.totalorder %s24, 3
      %p304 = por %p302, %p303
      %p305 = scmp.ne.s32.totalorder %s294, %s295
      %p306 = scmp.eq.s32.totalorder %s24, 0
      %p307 = por %p305, %p306
      %p308 = scmp.ne.s32.totalorder %s294, %s295
      %p309 = scmp.eq.s32.totalorder %s25, 3
      %p310 = por %p308, %p309
      %p312 = scmp.ne.s32.totalorder %s295, %s311
      %p313 = scmp.eq.s32.totalorder %s25, 0
      %p314 = por %p312, %p313
      %p315 = scmp.le.s32.totalorder 1, %s19
      %p316 = scmp.lt.s32.totalorder %s19, 5
      %p317 = pnand %p315, %p316
      %p318 = pneg %p317
      // Predicated region
      $region9: #{decoder_forward.1} parent=5 // pred_check
        _
      $region10: #{decoder_forward.1} parent=5 // pred_check_branch
        %320 = sbr.rel (%p317) target = $region12
      $region11: #{decoder_forward.1} parent=5 // pred_region
        %s321 = ssub.s32 %s19, 1
        // Predicated region
        $region13: #{decoder_forward.1} parent=11 // pred_check
          %p322 = pneg %p260
        $region14: #{decoder_forward.1} parent=11 // pred_check_branch
          %324 = sbr.rel (%p322) target = $region16
        $region15: #{decoder_forward.1} parent=11 // pred_region
          _
        $region16: #{decoder_forward.1} parent=11 // pred_fallthru
          _
        // Predicated region
        $region17: #{decoder_forward.1} parent=11 // pred_check
          %p325 = pneg %p281
        $region18: #{decoder_forward.1} parent=11 // pred_check_branch
          %327 = sbr.rel (%p325) target = $region20
        $region19: #{decoder_forward.1} parent=11 // pred_region
          _
        $region20: #{decoder_forward.1} parent=11 // pred_fallthru
          _
      $region12: #{decoder_forward.1} parent=5 // pred_fallthru
        _
      %p328 = scmp.lt.s32.totalorder %s19, 4
      // Predicated region
      $region21: #{decoder_forward.1} parent=5 // pred_check
        %p329 = pneg %p328
      $region22: #{decoder_forward.1} parent=5 // pred_check_branch
        %331 = sbr.rel (%p329) target = $region24
      $region23: #{decoder_forward.1} parent=5 // pred_region
        // Predicated region
        $region25: #{decoder_forward.1} parent=23 // pred_check
          %p332 = pneg %p51
        $region26: #{decoder_forward.1} parent=23 // pred_check_branch
          %334 = sbr.rel (%p332) target = $region28
        $region27: #{decoder_forward.1} parent=23 // pred_region
          %p335 = scmp.lt.s32.totalorder %s27, 1
          %s336 = scalar_select %p335, %s27, 1
          %s337 = smul.addr %s336, 8
          %s338 = scalar_lea.vmem %s0, %s337
        $region28: #{decoder_forward.1} parent=23 // pred_fallthru
          _
        // Predicated region
        $region29: #{decoder_forward.1} parent=23 // pred_check
          %p339 = pneg %p77
        $region30: #{decoder_forward.1} parent=23 // pred_check_branch
          %341 = sbr.rel (%p339) target = $region32
        $region31: #{decoder_forward.1} parent=23 // pred_region
          %p342 = scmp.lt.s32.totalorder %s27, 1
          %s343 = scalar_select %p342, %s27, 1
          %s344 = smul.addr %s343, 2
          %s345 = smul.addr %s344, 8
          %s346 = scalar_lea.vmem %s1, %s345
        $region32: #{decoder_forward.1} parent=23 // pred_fallthru
          _
        // Predicated region
        $region33: #{decoder_forward.1} parent=23 // pred_check
          %p347 = pneg %p103
        $region34: #{decoder_forward.1} parent=23 // pred_check_branch
          %349 = sbr.rel (%p347) target = $region36
        $region35: #{decoder_forward.1} parent=23 // pred_region
          %p350 = scmp.lt.s32.totalorder %s27, 1
          %s351 = scalar_select %p350, %s27, 1
          %s352 = smul.addr %s351, 8
          %s353 = scalar_lea.vmem %s2, %s352
        $region36: #{decoder_forward.1} parent=23 // pred_fallthru
          _
        // Predicated region
        $region37: #{decoder_forward.1} parent=23 // pred_check
          %p354 = pneg %p129
        $region38: #{decoder_forward.1} parent=23 // pred_check_branch
          %356 = sbr.rel (%p354) target = $region40
        $region39: #{decoder_forward.1} parent=23 // pred_region
          %p357 = scmp.lt.s32.totalorder %s27, 1
          %s358 = scalar_select %p357, %s27, 1
          %s359 = scalar_lea.vmem %s3, %s358
        $region40: #{decoder_forward.1} parent=23 // pred_fallthru
          _
        // Predicated region
        $region41: #{decoder_forward.1} parent=23 // pred_check
          %p360 = pneg %p155
        $region42: #{decoder_forward.1} parent=23 // pred_check_branch
          %362 = sbr.rel (%p360) target = $region44
        $region43: #{decoder_forward.1} parent=23 // pred_region
          %p363 = scmp.lt.s32.totalorder %s26, 1
          %s364 = scalar_select %p363, %s26, 1
          %s365 = smul.addr %s364, 72
          %s366 = smul.addr %s365, 4
          %s367 = scalar_lea.vmem %s4, %s366
        $region44: #{decoder_forward.1} parent=23 // pred_fallthru
          _
        // Predicated region
        $region45: #{decoder_forward.1} parent=23 // pred_check
          %p368 = pneg %p181
        $region46: #{decoder_forward.1} parent=23 // pred_check_branch
          %370 = sbr.rel (%p368) target = $region48
        $region47: #{decoder_forward.1} parent=23 // pred_region
          %p371 = scmp.lt.s32.totalorder %s26, 1
          %s372 = scalar_select %p371, %s26, 1
          %s373 = smul.addr %s372, 256
          %s374 = smul.addr %s373, 4
          %s375 = scalar_lea.vmem %s5, %s374
        $region48: #{decoder_forward.1} parent=23 // pred_fallthru
          _
        // Predicated region
        $region49: #{decoder_forward.1} parent=23 // pred_check
          %p376 = pneg %p207
        $region50: #{decoder_forward.1} parent=23 // pred_check_branch
          %378 = sbr.rel (%p376) target = $region52
        $region51: #{decoder_forward.1} parent=23 // pred_region
          %p379 = scmp.lt.s32.totalorder %s26, 1
          %s380 = scalar_select %p379, %s26, 1
          %s381 = smul.addr %s380, 2
          %s382 = smul.addr %s381, 8
          %s383 = scalar_lea.vmem %s6, %s382
        $region52: #{decoder_forward.1} parent=23 // pred_fallthru
          _
        // Predicated region
        $region53: #{decoder_forward.1} parent=23 // pred_check
          %p384 = pneg %p233
        $region54: #{decoder_forward.1} parent=23 // pred_check_branch
          %386 = sbr.rel (%p384) target = $region56
        $region55: #{decoder_forward.1} parent=23 // pred_region
          %p387 = scmp.lt.s32.totalorder %s26, 1
          %s388 = scalar_select %p387, %s26, 1
          %s389 = smul.addr %s388, 16
          %s390 = scalar_lea.vmem %s7, %s389
        $region56: #{decoder_forward.1} parent=23 // pred_fallthru
          _
      $region24: #{decoder_forward.1} parent=5 // pred_fallthru
        _
      %p391 = scmp.le.s32.totalorder 1, %s19
      %p392 = scmp.lt.s32.totalorder %s19, 5
      %p393 = pnand %p391, %p392
      %p394 = pneg %p393
      // Predicated region
      $region57: #{decoder_forward.1} parent=5 // pred_check
        _
      $region58: #{decoder_forward.1} parent=5 // pred_check_branch
        %396 = sbr.rel (%p393) target = $region60
      $region59: #{decoder_forward.1} parent=5 // pred_region
        %s397 = ssub.s32 %s19, 1
        %p398 = scmp.lt.s32.totalorder %s29, 1
        %s399 = scalar_select %p398, %s29, 1
        %s400 = smul.addr %s399, 8
        %s401 = scalar_lea.vmem %s0, %s400
        %p402 = pneg %p57
        %p403 = pneg %p54
        %p404 = scmp.lt.s32.totalorder %s29, 1
        %s405 = scalar_select %p404, %s29, 1
        %s406 = smul.addr %s405, 2
        %s407 = smul.addr %s406, 8
        %s408 = scalar_lea.vmem %s1, %s407
        %p409 = pneg %p83
        %p410 = pneg %p80
        %p411 = scmp.lt.s32.totalorder %s29, 1
        %s412 = scalar_select %p411, %s29, 1
        %s413 = smul.addr %s412, 8
        %s414 = scalar_lea.vmem %s2, %s413
        %p415 = pneg %p109
        %p416 = pneg %p106
        %p417 = scmp.lt.s32.totalorder %s29, 1
        %s418 = scalar_select %p417, %s29, 1
        %s419 = scalar_lea.vmem %s3, %s418
        %p420 = pneg %p135
        %p421 = pneg %p132
        %p422 = scmp.lt.s32.totalorder %s28, 1
        %s423 = scalar_select %p422, %s28, 1
        %s424 = smul.addr %s423, 72
        %s425 = smul.addr %s424, 4
        %s426 = scalar_lea.vmem %s4, %s425
        %p427 = pneg %p161
        %p428 = pneg %p158
        %p429 = scmp.lt.s32.totalorder %s28, 1
        %s430 = scalar_select %p429, %s28, 1
        %s431 = smul.addr %s430, 256
        %s432 = smul.addr %s431, 4
        %s433 = scalar_lea.vmem %s5, %s432
        %p434 = pneg %p187
        %p435 = pneg %p184
        %p436 = scmp.lt.s32.totalorder %s28, 1
        %s437 = scalar_select %p436, %s28, 1
        %s438 = smul.addr %s437, 2
        %s439 = smul.addr %s438, 8
        %s440 = scalar_lea.vmem %s6, %s439
        %p441 = pneg %p213
        %p442 = pneg %p210
        %p443 = scmp.lt.s32.totalorder %s28, 1
        %s444 = scalar_select %p443, %s28, 1
        %s445 = smul.addr %s444, 16
        %s446 = scalar_lea.vmem %s7, %s445
        %p447 = pneg %p239
        %p448 = pneg %p236
        %p449 = pneg %p260
        %p450 = pneg %p257
        %p451 = pneg %p281
        %p452 = pneg %p278
        %p453 = pneg %p307
        %p454 = pneg %p304
        %s455 = sand.u32 %s294, 1
        %s456 = scalar_lea.sflag [#allocation4], %s455
        %s457 = sand.u32 %s294, 1
        %s458 = smul.addr %s457, 8
        %s459 = scalar_lea.vmem [#allocation3], %s458
        %p460 = scmp.lt.s32.totalorder %s29, 1
        %s461 = scalar_select %p460, %s29, 1
        %s462 = smul.addr %s461, 8
        %s463 = scalar_lea.vmem %s0, %s462
        %p464 = scmp.lt.s32.totalorder %s29, 1
        %s465 = scalar_select %p464, %s29, 1
        %s466 = smul.addr %s465, 2
        %s467 = smul.addr %s466, 8
        %s468 = scalar_lea.vmem %s1, %s467
        %p469 = scmp.lt.s32.totalorder %s29, 1
        %s470 = scalar_select %p469, %s29, 1
        %s471 = smul.addr %s470, 8
        %s472 = scalar_lea.vmem %s2, %s471
        %p473 = scmp.lt.s32.totalorder %s29, 1
        %s474 = scalar_select %p473, %s29, 1
        %s475 = scalar_lea.vmem %s3, %s474
        %p476 = scmp.lt.s32.totalorder %s28, 1
        %s477 = scalar_select %p476, %s28, 1
        %s478 = smul.addr %s477, 72
        %s479 = smul.addr %s478, 4
        %s480 = scalar_lea.vmem %s4, %s479
        %p481 = scmp.lt.s32.totalorder %s28, 1
        %s482 = scalar_select %p481, %s28, 1
        %s483 = smul.addr %s482, 256
        %s484 = smul.addr %s483, 4
        %s485 = scalar_lea.vmem %s5, %s484
        %p486 = scmp.lt.s32.totalorder %s28, 1
        %s487 = scalar_select %p486, %s28, 1
        %s488 = smul.addr %s487, 2
        %s489 = smul.addr %s488, 8
        %s490 = scalar_lea.vmem %s6, %s489
        %p491 = scmp.lt.s32.totalorder %s28, 1
        %s492 = scalar_select %p491, %s28, 1
        %s493 = smul.addr %s492, 16
        %s494 = scalar_lea.vmem %s7, %s493
        %p496 = scmp.eq.s32.totalorder %s28, 0
        // Predicated region
        $region61: #{decoder_forward.1} parent=59 // pred_check
          %p497 = pneg %p496
        $region62: #{decoder_forward.1} parent=59 // pred_check_branch
          %499 = sbr.rel (%p497) target = $region64
        $region63: #{decoder_forward.1} parent=59 // pred_region
          %v500 = vld [vmem:[%s463] sm:$0xff]
          %s501 = smul.u32 %s29, 8
          %s502 = scalar_lea.vmem [#allocation2], %s501
          %vm503 = vcmask 261120
          %504 = vst.msk [vmem:[%s502] sm:$0xff] %vm503, %v500
        $region64: #{decoder_forward.1} parent=59 // pred_fallthru
          _
        %s505 = smul.u32 %s29, 8
        %s506 = scalar_lea.vmem [#allocation2], %s505
        %v507 = vld [vmem:[%s506] sm:$0xff]
        %v508 = vld [vmem:[%s468] sm:$0xff]
        %v509 = vld [vmem:[%s468 + $0x8] sm:$0xf]
        %v510 = vld [vmem:[%s490] sm:$0xff]
        %v511 = vld [vmem:[%s490 + $0x8] sm:$0x7f]
        %vm512 = vcmask 261120
        %v513 = vsel %vm512, %v507, 0.0
        %514 = vadd.xlane.f32.xlu0 %v513
        %v515 = vpop.xlane.xlu0 %514
        %v516 = vrcp.pop 32.0
        %v517 = vmul.f32 32.0, %v516
        %v518 = vsub.f32 1.0, %v517
        %v519 = vmul.f32 %v516, %v518
        %v520 = vadd.f32 %v516, %v519
        %vm521 = vweird.f32 %v516
        %v522 = vsel %vm521, %v516, %v520
        %v523 = vmul.f32 %v515, %v522
        %v524 = vsub.f32 %v507, %v523
        %v525 = vmul.f32 %v524, %v524
        %v526 = vsel %vm512, %v525, 0.0
        %527 = vadd.xlane.f32.xlu0 %v526
        %v528 = vpop.xlane.xlu0 %527
        %v529 = vmul.f32 %v528, 0.032258064
        %v530 = vperm.slane %v510, 0
        %v531 = vmul.f32 %v530, %v524
        %v532 = vrsqrt.pop %v529
        %v533 = vmul.f32 %v532, %v529
        %v534 = vmul.f32 %v533, %v532
        %v535 = vmul.f32 0.5, %v534
        %v536 = vsub.f32 1.5, %v535
        %v537 = vmul.f32 %v532, %v536
        %v538 = vmul.f32 %v529, %v537
        %vm539 = vcmp.eq.f32.partialorder %v529, inf
        %v540 = vsel %vm539, %v529, %v538
        %vm541 = vcmp.eq.f32.partialorder %v529, 0.0
        %v542 = vand.u32 %v529, 2147483648
        %v543 = vsel %vm541, %v542, %v540
        %v544 = vadd.f32 %v543, 1e-06
        %v545 = vrcp.pop %v544
        %v546 = vmul.f32 %v544, %v545
        %v547 = vsub.f32 1.0, %v546
        %v548 = vmul.f32 %v545, %v547
        %v549 = vadd.f32 %v545, %v548
        %vm550 = vweird.f32 %v544
        %vm551 = vweird.f32 %v545
        %vm552 = vmor %vm550, %vm551
        %v553 = vsel %vm552, %v545, %v549
        %v554 = vand.u32 2147483647, %v544
        %vm555 = vcmp.eq.f32.partialorder %v554, 8.507059e+37
        %v556 = vand.u32 %v544, 2147483648
        %v557 = vor.u32 1.1754944e-38, %v556
        %v558 = vsel %vm555, %v557, %v553
        %v559 = vmul.f32 %v531, %v558
        %v560 = vperm.slane %v510, 3
        %v561 = vadd.f32 %v559, %v560
        %v562 = vld [vmem:[%s472] sm:$0xff]
        %v563 = vld [vmem:[%s480] sm:$0xf]
        %v564 = vld [vmem:[%s480 + $0x48] sm:$0xf]
        %v565 = vld [vmem:[%s480 + $0x90] sm:$0xf]
        %v566 = vld [vmem:[%s480 + $0xd8] sm:$0xf]
        %v567 = vpack.c.bf16 %v561, %v561
        %v568 = vperm.slane %v510, 6
        %v573 = vunpack.c.l.b16 %v563
        %v574 = vunpack.c.l.b16 %v564
        %v575 = vunpack.c.l.b16 %v565
        %v576 = vunpack.c.l.b16 %v566
        %v577 = vpack.c.b16 %v574, %v573
        %v578 = vpack.c.b16 %v576, %v575
        %v582 = vsel %vm512, %v567, 0
        %584 = vmatpush.bf16.msra.mxu0 0
        %585 = vmatpush.bf16.msra.mxu0 0
        %586 = vmatpush.bf16.msra.mxu0 0
        %587 = vmatpush.bf16.msra.mxu0 0
        %588 = vmatpush.bf16.msra.mxu0 0
        %589 = vmatpush.bf16.msra.mxu0 0
        %590 = vmatpush.bf16.msra.mxu0 %v578
        %591 = vmatpush.bf16.msra.mxu0 %v577
        %592 = vmatmul.bf16.gmra.mxu0 %v582
        %v593 = vpop.f32.mrf.mxu0
        %v594 = vadd.f32 %v568, %v593
        %v595 = vpop.f32.mrf.mxu0
        %596 = vdwg.mxu0
        %597 = vrot.lane.b32.xlu0 %v577, 96
        %v598 = vpop.permute.xlu0 %597
        %599 = vrot.lane.b32.xlu0 %v578, 96
        %v600 = vpop.permute.xlu0 %599
        %603 = vmatpush.bf16.msra.mxu0 0
        %604 = vmatpush.bf16.msra.mxu0 0
        %605 = vmatpush.bf16.msra.mxu0 0
        %606 = vmatpush.bf16.msra.mxu0 0
        %607 = vmatpush.bf16.msra.mxu0 0
        %608 = vmatpush.bf16.msra.mxu0 0
        %609 = vmatpush.bf16.msra.mxu0 %v600
        %610 = vmatpush.bf16.msra.mxu0 %v598
        %611 = vmatmul.bf16.gmra.mxu0 %v582
        %v612 = vpop.f32.mrf.mxu0
        %v613 = vadd.f32 0.0, %v612
        %v614 = vpop.f32.mrf.mxu0
        %615 = vdwg.mxu0
        %v616 = vpack.c.bf16 %v594, %v594
        %v617 = vperm.slane %v510, 7
        %v618 = vadd.f32 %v613, %v617
        %v619 = vpack.c.bf16 %v618, %v618
        %v620 = vperm.slane %v511, 0
        %622 = vrot.lane.b32.xlu0 %v620, 32
        %v623 = vpop.permute.xlu0 %622
        %v625 = vadd.f32 %v613, %v623
        %v626 = vpack.c.bf16 %v625, %v625
        %vm627 = vcmask 64512
        %v629 = vsel %vm627, %v616, 0
        %v632 = vsel %vm627, %v619, 0
        %634 = vmatpush.bf16.xpose.msra.mxu0 0
        %635 = vmatpush.bf16.xpose.msra.mxu0 0
        %636 = vmatpush.bf16.xpose.msra.mxu0 0
        %637 = vmatpush.bf16.xpose.msra.mxu0 0
        %638 = vmatpush.bf16.xpose.msra.mxu0 0
        %639 = vmatpush.bf16.xpose.msra.mxu0 0
        %640 = vmatpush.bf16.xpose.msra.mxu0 0
        %641 = vmatpush.bf16.xpose.msra.mxu0 %v632
        %642 = vmatmul.bf16.gmra.mxu0 %v629
        %v643 = vpop.f32.mrf.mxu0
        %v644 = vadd.f32 %v562, %v643
        %v645 = vpop.f32.mrf.mxu0
        %646 = vdwg.mxu0
        %v647 = vsel %vm627, %v644, -inf
        %648 = vmax.xlane.f32.xlu0 %v647
        %v649 = vpop.xlane.xlu0 %648
        %v650 = vsub.f32 %v644, %v649
        %v651 = vmul.f32 %v650, 1.442695
        %v652 = vpow.pop %v651
        %v653 = vsel %vm627, %v652, 0.0
        %654 = vadd.xlane.f32.xlu0 %v653
        %v655 = vpop.xlane.xlu0 %654
        %v656 = vrcp.pop %v655
        %v657 = vmul.f32 %v652, %v656
        %v658 = vpack.c.bf16 %v657, %v657
        %v660 = vunpack.c.l.b16 %v626
        %v661 = vpack.c.b16 %v660, %v660
        %662 = vrot.lane.b32.xlu0 %v661, 96
        %v663 = vpop.permute.xlu0 %662
        %v665 = vsel %vm627, %v658, 0
        %vm667 = vcmask 1043456
        %v669 = vsel %vm667, %v663, 0
        %671 = vmatpush.bf16.msra.mxu0 0
        %672 = vmatpush.bf16.msra.mxu0 0
        %673 = vmatpush.bf16.msra.mxu0 0
        %674 = vmatpush.bf16.msra.mxu0 0
        %675 = vmatpush.bf16.msra.mxu0 0
        %676 = vmatpush.bf16.msra.mxu0 0
        %677 = vmatpush.bf16.msra.mxu0 0
        %678 = vmatpush.bf16.msra.mxu0 %v669
        %679 = vmatmul.bf16.gmra.mxu0 %v665
        %v680 = vpop.f32.mrf.mxu0
        %v681 = vadd.f32 0.0, %v680
        %v682 = vpop.f32.mrf.mxu0
        %683 = vdwg.mxu0
        %v685 = vunpack.c.l.b16 %v616
        %v686 = vpack.c.b16 %v685, %v685
        %687 = vrot.lane.b32.xlu0 %v686, 120
        %v688 = vpop.permute.xlu0 %687
        %v690 = vunpack.c.l.b16 %v619
        %v691 = vpack.c.b16 %v690, %v690
        %692 = vrot.lane.b32.xlu0 %v691, 120
        %v693 = vpop.permute.xlu0 %692
        %v695 = vsel %vm627, %v688, 0
        %v698 = vsel %vm627, %v693, 0
        %700 = vmatpush.bf16.xpose.msra.mxu0 0
        %701 = vmatpush.bf16.xpose.msra.mxu0 0
        %702 = vmatpush.bf16.xpose.msra.mxu0 0
        %703 = vmatpush.bf16.xpose.msra.mxu0 0
        %704 = vmatpush.bf16.xpose.msra.mxu0 0
        %705 = vmatpush.bf16.xpose.msra.mxu0 0
        %706 = vmatpush.bf16.xpose.msra.mxu0 0
        %707 = vmatpush.bf16.xpose.msra.mxu0 %v698
        %708 = vmatmul.bf16.gmra.mxu0 %v695
        %v709 = vpop.f32.mrf.mxu0
        %v710 = vadd.f32 %v562, %v709
        %v711 = vpop.f32.mrf.mxu0
        %712 = vdwg.mxu0
        %v713 = vsel %vm627, %v710, -inf
        %714 = vmax.xlane.f32.xlu0 %v713
        %v715 = vpop.xlane.xlu0 %714
        %v716 = vsub.f32 %v710, %v715
        %v717 = vmul.f32 %v716, 1.442695
        %v718 = vpow.pop %v717
        %v719 = vsel %vm627, %v718, 0.0
        %720 = vadd.xlane.f32.xlu0 %v719
        %v721 = vpop.xlane.xlu0 %720
        %v722 = vrcp.pop %v721
        %v723 = vmul.f32 %v718, %v722
        %v724 = vpack.c.bf16 %v723, %v723
        %725 = vrot.lane.b32.xlu0 %v661, 88
        %v726 = vpop.permute.xlu0 %725
        %v728 = vsel %vm627, %v724, 0
        %v731 = vsel %vm667, %v726, 0
        %733 = vmatpush.bf16.msra.mxu0 0
        %734 = vmatpush.bf16.msra.mxu0 0
        %735 = vmatpush.bf16.msra.mxu0 0
        %736 = vmatpush.bf16.msra.mxu0 0
        %737 = vmatpush.bf16.msra.mxu0 0
        %738 = vmatpush.bf16.msra.mxu0 0
        %739 = vmatpush.bf16.msra.mxu0 0
        %740 = vmatpush.bf16.msra.mxu0 %v731
        %741 = vmatmul.bf16.gmra.mxu0 %v728
        %v742 = vpop.f32.mrf.mxu0
        %v743 = vadd.f32 0.0, %v742
        %v744 = vpop.f32.mrf.mxu0
        %745 = vdwg.mxu0
        %746 = vrot.lane.b32.xlu0 %v686, 112
        %v747 = vpop.permute.xlu0 %746
        %748 = vrot.lane.b32.xlu0 %v691, 112
        %v749 = vpop.permute.xlu0 %748
        %v751 = vsel %vm627, %v747, 0
        %v754 = vsel %vm627, %v749, 0
        %756 = vmatpush.bf16.xpose.msra.mxu0 0
        %757 = vmatpush.bf16.xpose.msra.mxu0 0
        %758 = vmatpush.bf16.xpose.msra.mxu0 0
        %759 = vmatpush.bf16.xpose.msra.mxu0 0
        %760 = vmatpush.bf16.xpose.msra.mxu0 0
        %761 = vmatpush.bf16.xpose.msra.mxu0 0
        %762 = vmatpush.bf16.xpose.msra.mxu0 0
        %763 = vmatpush.bf16.xpose.msra.mxu0 %v754
        %764 = vmatmul.bf16.gmra.mxu0 %v751
        %v765 = vpop.f32.mrf.mxu0
        %v766 = vadd.f32 %v562, %v765
        %v767 = vpop.f32.mrf.mxu0
        %768 = vdwg.mxu0
        %v769 = vsel %vm627, %v766, -inf
        %770 = vmax.xlane.f32.xlu0 %v769
        %v771 = vpop.xlane.xlu0 %770
        %v772 = vsub.f32 %v766, %v771
        %v773 = vmul.f32 %v772, 1.442695
        %v774 = vpow.pop %v773
        %v775 = vsel %vm627, %v774, 0.0
        %776 = vadd.xlane.f32.xlu0 %v775
        %v777 = vpop.xlane.xlu0 %776
        %v778 = vrcp.pop %v777
        %v779 = vmul.f32 %v774, %v778
        %v780 = vpack.c.bf16 %v779, %v779
        %781 = vrot.lane.b32.xlu0 %v661, 80
        %v782 = vpop.permute.xlu0 %781
        %v784 = vsel %vm627, %v780, 0
        %v787 = vsel %vm667, %v782, 0
        %789 = vmatpush.bf16.msra.mxu0 0
        %790 = vmatpush.bf16.msra.mxu0 0
        %791 = vmatpush.bf16.msra.mxu0 0
        %792 = vmatpush.bf16.msra.mxu0 0
        %793 = vmatpush.bf16.msra.mxu0 0
        %794 = vmatpush.bf16.msra.mxu0 0
        %795 = vmatpush.bf16.msra.mxu0 0
        %796 = vmatpush.bf16.msra.mxu0 %v787
        %797 = vmatmul.bf16.gmra.mxu0 %v784
        %v798 = vpop.f32.mrf.mxu0
        %v799 = vadd.f32 0.0, %v798
        %v800 = vpop.f32.mrf.mxu0
        %801 = vdwg.mxu0
        %802 = vrot.lane.b32.xlu0 %v686, 104
        %v803 = vpop.permute.xlu0 %802
        %804 = vrot.lane.b32.xlu0 %v691, 104
        %v805 = vpop.permute.xlu0 %804
        %v807 = vsel %vm627, %v803, 0
        %v810 = vsel %vm627, %v805, 0
        %812 = vmatpush.bf16.xpose.msra.mxu0 0
        %813 = vmatpush.bf16.xpose.msra.mxu0 0
        %814 = vmatpush.bf16.xpose.msra.mxu0 0
        %815 = vmatpush.bf16.xpose.msra.mxu0 0
        %816 = vmatpush.bf16.xpose.msra.mxu0 0
        %817 = vmatpush.bf16.xpose.msra.mxu0 0
        %818 = vmatpush.bf16.xpose.msra.mxu0 0
        %819 = vmatpush.bf16.xpose.msra.mxu0 %v810
        %820 = vmatmul.bf16.gmra.mxu0 %v807
        %v821 = vpop.f32.mrf.mxu0
        %v822 = vadd.f32 %v562, %v821
        %v823 = vpop.f32.mrf.mxu0
        %824 = vdwg.mxu0
        %v825 = vsel %vm627, %v822, -inf
        %826 = vmax.xlane.f32.xlu0 %v825
        %v827 = vpop.xlane.xlu0 %826
        %v828 = vsub.f32 %v822, %v827
        %v829 = vmul.f32 %v828, 1.442695
        %v830 = vpow.pop %v829
        %v831 = vsel %vm627, %v830, 0.0
        %832 = vadd.xlane.f32.xlu0 %v831
        %v833 = vpop.xlane.xlu0 %832
        %v834 = vrcp.pop %v833
        %v835 = vmul.f32 %v830, %v834
        %v836 = vpack.c.bf16 %v835, %v835
        %837 = vrot.lane.b32.xlu0 %v661, 72
        %v838 = vpop.permute.xlu0 %837
        %v840 = vsel %vm627, %v836, 0
        %v843 = vsel %vm667, %v838, 0
        %845 = vmatpush.bf16.msra.mxu0 0
        %846 = vmatpush.bf16.msra.mxu0 0
        %847 = vmatpush.bf16.msra.mxu0 0
        %848 = vmatpush.bf16.msra.mxu0 0
        %849 = vmatpush.bf16.msra.mxu0 0
        %850 = vmatpush.bf16.msra.mxu0 0
        %851 = vmatpush.bf16.msra.mxu0 0
        %852 = vmatpush.bf16.msra.mxu0 %v843
        %853 = vmatmul.bf16.gmra.mxu0 %v840
        %v854 = vpop.f32.mrf.mxu0
        %v855 = vadd.f32 0.0, %v854
        %v856 = vpop.f32.mrf.mxu0
        %857 = vdwg.mxu0
        %859 = vrot.lane.b32.xlu0 %v743, 8
        %v860 = vpop.permute.xlu0 %859
        %863 = vrot.lane.b32.xlu0 %v799, 16
        %v864 = vpop.permute.xlu0 %863
        %867 = vrot.lane.b32.xlu0 %v855, 24
        %v868 = vpop.permute.xlu0 %867
        %v870 = vsel %vm627, %v681, %v860
        %vm871 = vcmask 130048
        %v872 = vsel %vm871, %v870, %v864
        %vm873 = vcmask 195584
        %v874 = vsel %vm873, %v872, %v868
        %v875 = vpack.c.bf16 %v874, %v874
        %v876 = vperm.slane %v511, 1
        %877 = vrot.lane.b32.xlu0 %v577, 32
        %v878 = vpop.permute.xlu0 %877
        %879 = vrot.lane.b32.xlu0 %v578, 32
        %v880 = vpop.permute.xlu0 %879
        %v884 = vsel %vm512, %v875, 0
        %886 = vmatpush.bf16.msra.mxu0 0
        %887 = vmatpush.bf16.msra.mxu0 0
        %888 = vmatpush.bf16.msra.mxu0 0
        %889 = vmatpush.bf16.msra.mxu0 0
        %890 = vmatpush.bf16.msra.mxu0 0
        %891 = vmatpush.bf16.msra.mxu0 0
        %892 = vmatpush.bf16.msra.mxu0 %v880
        %893 = vmatpush.bf16.msra.mxu0 %v878
        %894 = vmatmul.bf16.gmra.mxu0 %v884
        %v895 = vpop.f32.mrf.mxu0
        %v896 = vadd.f32 %v876, %v895
        %v897 = vpop.f32.mrf.mxu0
        %898 = vdwg.mxu0
        %v899 = vadd.f32 %v507, %v896
        %v900 = vsel %vm512, %v899, 0.0
        %901 = vadd.xlane.f32.xlu0 %v900
        %v902 = vpop.xlane.xlu0 %901
        %v903 = vmul.f32 %v902, %v522
        %v904 = vsub.f32 %v899, %v903
        %v905 = vmul.f32 %v904, %v904
        %v906 = vsel %vm512, %v905, 0.0
        %907 = vadd.xlane.f32.xlu0 %v906
        %v908 = vpop.xlane.xlu0 %907
        %v909 = vmul.f32 %v908, 0.032258064
        %v910 = vperm.slane %v510, 1
        %v911 = vmul.f32 %v910, %v904
        %v912 = vrsqrt.pop %v909
        %v913 = vmul.f32 %v912, %v909
        %v914 = vmul.f32 %v913, %v912
        %v915 = vmul.f32 0.5, %v914
        %v916 = vsub.f32 1.5, %v915
        %v917 = vmul.f32 %v912, %v916
        %v918 = vmul.f32 %v909, %v917
        %vm919 = vcmp.eq.f32.partialorder %v909, inf
        %v920 = vsel %vm919, %v909, %v918
        %vm921 = vcmp.eq.f32.partialorder %v909, 0.0
        %v922 = vand.u32 %v909, 2147483648
        %v923 = vsel %vm921, %v922, %v920
        %v924 = vadd.f32 %v923, 1e-06
        %v925 = vrcp.pop %v924
        %v926 = vmul.f32 %v924, %v925
        %v927 = vsub.f32 1.0, %v926
        %v928 = vmul.f32 %v925, %v927
        %v929 = vadd.f32 %v925, %v928
        %vm930 = vweird.f32 %v924
        %vm931 = vweird.f32 %v925
        %vm932 = vmor %vm930, %vm931
        %v933 = vsel %vm932, %v925, %v929
        %v934 = vand.u32 2147483647, %v924
        %vm935 = vcmp.eq.f32.partialorder %v934, 8.507059e+37
        %v936 = vand.u32 %v924, 2147483648
        %v937 = vor.u32 1.1754944e-38, %v936
        %v938 = vsel %vm935, %v937, %v933
        %v939 = vmul.f32 %v911, %v938
        %v940 = vperm.slane %v510, 4
        %v941 = vadd.f32 %v939, %v940
        %v942 = vld [vmem:[%s475] sm:$0x1]
        %v943 = vld [vmem:[%s480 + $0x4] sm:$0xf]
        %v944 = vld [vmem:[%s480 + $0x4c] sm:$0xf]
        %v945 = vld [vmem:[%s480 + $0x94] sm:$0xf]
        %v946 = vld [vmem:[%s480 + $0xdc] sm:$0xf]
        %v947 = vpack.c.bf16 %v941, %v941
        %v948 = vperm.slane %v511, 2
        %v953 = vunpack.c.l.b16 %v943
        %v954 = vunpack.c.l.b16 %v944
        %v955 = vunpack.c.l.b16 %v945
        %v956 = vunpack.c.l.b16 %v946
        %v957 = vpack.c.b16 %v954, %v953
        %v958 = vpack.c.b16 %v956, %v955
        %v962 = vsel %vm512, %v947, 0
        %964 = vmatpush.bf16.msra.mxu0 0
        %965 = vmatpush.bf16.msra.mxu0 0
        %966 = vmatpush.bf16.msra.mxu0 0
        %967 = vmatpush.bf16.msra.mxu0 0
        %968 = vmatpush.bf16.msra.mxu0 0
        %969 = vmatpush.bf16.msra.mxu0 0
        %970 = vmatpush.bf16.msra.mxu0 %v958
        %971 = vmatpush.bf16.msra.mxu0 %v957
        %972 = vmatmul.bf16.gmra.mxu0 %v962
        %v973 = vpop.f32.mrf.mxu0
        %v974 = vadd.f32 %v948, %v973
        %v975 = vpop.f32.mrf.mxu0
        %976 = vdwg.mxu0
        %v977 = vpack.c.bf16 %v509, %v508
        %978 = vrot.lane.b32.xlu0 %v957, 96
        %v979 = vpop.permute.xlu0 %978
        %980 = vrot.lane.b32.xlu0 %v958, 96
        %v981 = vpop.permute.xlu0 %980
        %v985 = vsel %vm512, %v977, 0
        %987 = vmatpush.bf16.msra.mxu0 0
        %988 = vmatpush.bf16.msra.mxu0 0
        %989 = vmatpush.bf16.msra.mxu0 0
        %990 = vmatpush.bf16.msra.mxu0 0
        %991 = vmatpush.bf16.msra.mxu0 0
        %992 = vmatpush.bf16.msra.mxu0 0
        %993 = vmatpush.bf16.msra.mxu0 %v981
        %994 = vmatpush.bf16.msra.mxu0 %v979
        %995 = vmatmul.bf16.gmra.mxu0 %v985
        %v996 = vpop.f32.mrf.mxu0
        %v997 = vadd.f32 0.0, %v996
        %v998 = vpop.f32.mrf.mxu0
        %v999 = vadd.f32 0.0, %v998
        %1000 = vdwg.mxu0
        %v1001 = vpack.c.bf16 %v974, %v974
        %v1002 = vperm.slane %v511, 3
        %v1003 = vadd.f32 %v997, %v1002
        %v1004 = vadd.f32 %v999, %v1002
        %v1005 = vpack.c.bf16 %v1003, %v1003
        %v1006 = vpack.c.bf16 %v1004, %v1004
        %v1007 = vperm.slane %v511, 4
        %1009 = vrot.lane.b32.xlu0 %v1007, 32
        %v1010 = vpop.permute.xlu0 %1009
        %v1012 = vadd.f32 %v997, %v1010
        %v1013 = vadd.f32 %v999, %v1010
        %v1014 = vpack.c.bf16 %v1012, %v1012
        %v1015 = vpack.c.bf16 %v1013, %v1013
        %v1017 = vperm.slane %v942, 0
        %v1021 = vunpack.c.l.b16 %v1005
        %v1022 = vunpack.c.l.b16 %v1006
        %v1023 = vpack.c.b16 %v1022, %v1021
        %v1025 = vsel %vm627, %v1001, 0
        %v1028 = vsel %vm627, %v1023, 0
        %1030 = vmatpush.bf16.xpose.msra.mxu0 0
        %1031 = vmatpush.bf16.xpose.msra.mxu0 0
        %1032 = vmatpush.bf16.xpose.msra.mxu0 0
        %1033 = vmatpush.bf16.xpose.msra.mxu0 0
        %1034 = vmatpush.bf16.xpose.msra.mxu0 0
        %1035 = vmatpush.bf16.xpose.msra.mxu0 0
        %1036 = vmatpush.bf16.xpose.msra.mxu0 0
        %1037 = vmatpush.bf16.xpose.msra.mxu0 %v1028
        %1038 = vmatmul.bf16.gmra.mxu0 %v1025
        %v1039 = vpop.f32.mrf.mxu0
        %v1040 = vadd.f32 %v1017, %v1039
        %v1041 = vpop.f32.mrf.mxu0
        %1042 = vdwg.mxu0
        %vm1043 = vcmask 97280
        %v1044 = vsel %vm1043, %v1040, -inf
        %1045 = vmax.xlane.f32.xlu0 %v1044
        %v1046 = vpop.xlane.xlu0 %1045
        %v1047 = vsub.f32 %v1040, %v1046
        %v1048 = vmul.f32 %v1047, 1.442695
        %v1049 = vpow.pop %v1048
        %v1050 = vsel %vm1043, %v1049, 0.0
        %1051 = vadd.xlane.f32.xlu0 %v1050
        %v1052 = vpop.xlane.xlu0 %1051
        %v1053 = vrcp.pop %v1052
        %v1054 = vmul.f32 %v1049, %v1053
        %v1055 = vpack.c.bf16 %v1054, %v1054
        %v1058 = vunpack.c.l.b16 %v1014
        %v1059 = vunpack.c.l.b16 %v1015
        %v1060 = vpack.c.b16 %v1059, %v1058
        %1061 = vrot.lane.b32.xlu0 %v1060, 96
        %v1062 = vpop.permute.xlu0 %1061
        %v1064 = vsel %vm1043, %v1055, 0
        %vm1066 = vcmask 1045504
        %v1068 = vsel %vm1066, %v1062, 0
        %1070 = vmatpush.bf16.msra.mxu0 0
        %1071 = vmatpush.bf16.msra.mxu0 0
        %1072 = vmatpush.bf16.msra.mxu0 0
        %1073 = vmatpush.bf16.msra.mxu0 0
        %1074 = vmatpush.bf16.msra.mxu0 0
        %1075 = vmatpush.bf16.msra.mxu0 0
        %1076 = vmatpush.bf16.msra.mxu0 0
        %1077 = vmatpush.bf16.msra.mxu0 %v1068
        %1078 = vmatmul.bf16.gmra.mxu0 %v1064
        %v1079 = vpop.f32.mrf.mxu0
        %v1080 = vadd.f32 0.0, %v1079
        %v1081 = vpop.f32.mrf.mxu0
        %1082 = vdwg.mxu0
        %v1084 = vunpack.c.l.b16 %v1001
        %v1085 = vpack.c.b16 %v1084, %v1084
        %1086 = vrot.lane.b32.xlu0 %v1085, 120
        %v1087 = vpop.permute.xlu0 %1086
        %1088 = vrot.lane.b32.xlu0 %v1023, 120
        %v1089 = vpop.permute.xlu0 %1088
        %v1091 = vsel %vm627, %v1087, 0
        %v1094 = vsel %vm627, %v1089, 0
        %1096 = vmatpush.bf16.xpose.msra.mxu0 0
        %1097 = vmatpush.bf16.xpose.msra.mxu0 0
        %1098 = vmatpush.bf16.xpose.msra.mxu0 0
        %1099 = vmatpush.bf16.xpose.msra.mxu0 0
        %1100 = vmatpush.bf16.xpose.msra.mxu0 0
        %1101 = vmatpush.bf16.xpose.msra.mxu0 0
        %1102 = vmatpush.bf16.xpose.msra.mxu0 0
        %1103 = vmatpush.bf16.xpose.msra.mxu0 %v1094
        %1104 = vmatmul.bf16.gmra.mxu0 %v1091
        %v1105 = vpop.f32.mrf.mxu0
        %v1106 = vadd.f32 %v1017, %v1105
        %v1107 = vpop.f32.mrf.mxu0
        %1108 = vdwg.mxu0
        %v1109 = vsel %vm1043, %v1106, -inf
        %1110 = vmax.xlane.f32.xlu0 %v1109
        %v1111 = vpop.xlane.xlu0 %1110
        %v1112 = vsub.f32 %v1106, %v1111
        %v1113 = vmul.f32 %v1112, 1.442695
        %v1114 = vpow.pop %v1113
        %v1115 = vsel %vm1043, %v1114, 0.0
        %1116 = vadd.xlane.f32.xlu0 %v1115
        %v1117 = vpop.xlane.xlu0 %1116
        %v1118 = vrcp.pop %v1117
        %v1119 = vmul.f32 %v1114, %v1118
        %v1120 = vpack.c.bf16 %v1119, %v1119
        %1121 = vrot.lane.b32.xlu0 %v1060, 88
        %v1122 = vpop.permute.xlu0 %1121
        %v1124 = vsel %vm1043, %v1120, 0
        %v1127 = vsel %vm1066, %v1122, 0
        %1129 = vmatpush.bf16.msra.mxu0 0
        %1130 = vmatpush.bf16.msra.mxu0 0
        %1131 = vmatpush.bf16.msra.mxu0 0
        %1132 = vmatpush.bf16.msra.mxu0 0
        %1133 = vmatpush.bf16.msra.mxu0 0
        %1134 = vmatpush.bf16.msra.mxu0 0
        %1135 = vmatpush.bf16.msra.mxu0 0
        %1136 = vmatpush.bf16.msra.mxu0 %v1127
        %1137 = vmatmul.bf16.gmra.mxu0 %v1124
        %v1138 = vpop.f32.mrf.mxu0
        %v1139 = vadd.f32 0.0, %v1138
        %v1140 = vpop.f32.mrf.mxu0
        %1141 = vdwg.mxu0
        %1142 = vrot.lane.b32.xlu0 %v1085, 112
        %v1143 = vpop.permute.xlu0 %1142
        %1144 = vrot.lane.b32.xlu0 %v1023, 112
        %v1145 = vpop.permute.xlu0 %1144
        %v1147 = vsel %vm627, %v1143, 0
        %v1150 = vsel %vm627, %v1145, 0
        %1152 = vmatpush.bf16.xpose.msra.mxu0 0
        %1153 = vmatpush.bf16.xpose.msra.mxu0 0
        %1154 = vmatpush.bf16.xpose.msra.mxu0 0
        %1155 = vmatpush.bf16.xpose.msra.mxu0 0
        %1156 = vmatpush.bf16.xpose.msra.mxu0 0
        %1157 = vmatpush.bf16.xpose.msra.mxu0 0
        %1158 = vmatpush.bf16.xpose.msra.mxu0 0
        %1159 = vmatpush.bf16.xpose.msra.mxu0 %v1150
        %1160 = vmatmul.bf16.gmra.mxu0 %v1147
        %v1161 = vpop.f32.mrf.mxu0
        %v1162 = vadd.f32 %v1017, %v1161
        %v1163 = vpop.f32.mrf.mxu0
        %1164 = vdwg.mxu0
        %v1165 = vsel %vm1043, %v1162, -inf
        %1166 = vmax.xlane.f32.xlu0 %v1165
        %v1167 = vpop.xlane.xlu0 %1166
        %v1168 = vsub.f32 %v1162, %v1167
        %v1169 = vmul.f32 %v1168, 1.442695
        %v1170 = vpow.pop %v1169
        %v1171 = vsel %vm1043, %v1170, 0.0
        %1172 = vadd.xlane.f32.xlu0 %v1171
        %v1173 = vpop.xlane.xlu0 %1172
        %v1174 = vrcp.pop %v1173
        %v1175 = vmul.f32 %v1170, %v1174
        %v1176 = vpack.c.bf16 %v1175, %v1175
        %1177 = vrot.lane.b32.xlu0 %v1060, 80
        %v1178 = vpop.permute.xlu0 %1177
        %v1180 = vsel %vm1043, %v1176, 0
        %v1183 = vsel %vm1066, %v1178, 0
        %1185 = vmatpush.bf16.msra.mxu0 0
        %1186 = vmatpush.bf16.msra.mxu0 0
        %1187 = vmatpush.bf16.msra.mxu0 0
        %1188 = vmatpush.bf16.msra.mxu0 0
        %1189 = vmatpush.bf16.msra.mxu0 0
        %1190 = vmatpush.bf16.msra.mxu0 0
        %1191 = vmatpush.bf16.msra.mxu0 0
        %1192 = vmatpush.bf16.msra.mxu0 %v1183
        %1193 = vmatmul.bf16.gmra.mxu0 %v1180
        %v1194 = vpop.f32.mrf.mxu0
        %v1195 = vadd.f32 0.0, %v1194
        %v1196 = vpop.f32.mrf.mxu0
        %1197 = vdwg.mxu0
        %1198 = vrot.lane.b32.xlu0 %v1085, 104
        %v1199 = vpop.permute.xlu0 %1198
        %1200 = vrot.lane.b32.xlu0 %v1023, 104
        %v1201 = vpop.permute.xlu0 %1200
        %v1203 = vsel %vm627, %v1199, 0
        %v1206 = vsel %vm627, %v1201, 0
        %1208 = vmatpush.bf16.xpose.msra.mxu0 0
        %1209 = vmatpush.bf16.xpose.msra.mxu0 0
        %1210 = vmatpush.bf16.xpose.msra.mxu0 0
        %1211 = vmatpush.bf16.xpose.msra.mxu0 0
        %1212 = vmatpush.bf16.xpose.msra.mxu0 0
        %1213 = vmatpush.bf16.xpose.msra.mxu0 0
        %1214 = vmatpush.bf16.xpose.msra.mxu0 0
        %1215 = vmatpush.bf16.xpose.msra.mxu0 %v1206
        %1216 = vmatmul.bf16.gmra.mxu0 %v1203
        %v1217 = vpop.f32.mrf.mxu0
        %v1218 = vadd.f32 %v1017, %v1217
        %v1219 = vpop.f32.mrf.mxu0
        %1220 = vdwg.mxu0
        %v1221 = vsel %vm1043, %v1218, -inf
        %1222 = vmax.xlane.f32.xlu0 %v1221
        %v1223 = vpop.xlane.xlu0 %1222
        %v1224 = vsub.f32 %v1218, %v1223
        %v1225 = vmul.f32 %v1224, 1.442695
        %v1226 = vpow.pop %v1225
        %v1227 = vsel %vm1043, %v1226, 0.0
        %1228 = vadd.xlane.f32.xlu0 %v1227
        %v1229 = vpop.xlane.xlu0 %1228
        %v1230 = vrcp.pop %v1229
        %v1231 = vmul.f32 %v1226, %v1230
        %v1232 = vpack.c.bf16 %v1231, %v1231
        %1233 = vrot.lane.b32.xlu0 %v1060, 72
        %v1234 = vpop.permute.xlu0 %1233
        %v1236 = vsel %vm1043, %v1232, 0
        %v1239 = vsel %vm1066, %v1234, 0
        %1241 = vmatpush.bf16.msra.mxu0 0
        %1242 = vmatpush.bf16.msra.mxu0 0
        %1243 = vmatpush.bf16.msra.mxu0 0
        %1244 = vmatpush.bf16.msra.mxu0 0
        %1245 = vmatpush.bf16.msra.mxu0 0
        %1246 = vmatpush.bf16.msra.mxu0 0
        %1247 = vmatpush.bf16.msra.mxu0 0
        %1248 = vmatpush.bf16.msra.mxu0 %v1239
        %1249 = vmatmul.bf16.gmra.mxu0 %v1236
        %v1250 = vpop.f32.mrf.mxu0
        %v1251 = vadd.f32 0.0, %v1250
        %v1252 = vpop.f32.mrf.mxu0
        %1253 = vdwg.mxu0
        %1255 = vrot.lane.b32.xlu0 %v1139, 8
        %v1256 = vpop.permute.xlu0 %1255
        %1259 = vrot.lane.b32.xlu0 %v1195, 16
        %v1260 = vpop.permute.xlu0 %1259
        %1263 = vrot.lane.b32.xlu0 %v1251, 24
        %v1264 = vpop.permute.xlu0 %1263
        %v1266 = vsel %vm627, %v1080, %v1256
        %v1267 = vsel %vm871, %v1266, %v1260
        %v1268 = vsel %vm873, %v1267, %v1264
        %v1269 = vpack.c.bf16 %v1268, %v1268
        %v1270 = vperm.slane %v511, 5
        %1271 = vrot.lane.b32.xlu0 %v957, 32
        %v1272 = vpop.permute.xlu0 %1271
        %1273 = vrot.lane.b32.xlu0 %v958, 32
        %v1274 = vpop.permute.xlu0 %1273
        %v1278 = vsel %vm512, %v1269, 0
        %1280 = vmatpush.bf16.msra.mxu0 0
        %1281 = vmatpush.bf16.msra.mxu0 0
        %1282 = vmatpush.bf16.msra.mxu0 0
        %1283 = vmatpush.bf16.msra.mxu0 0
        %1284 = vmatpush.bf16.msra.mxu0 0
        %1285 = vmatpush.bf16.msra.mxu0 0
        %1286 = vmatpush.bf16.msra.mxu0 %v1274
        %1287 = vmatpush.bf16.msra.mxu0 %v1272
        %1288 = vmatmul.bf16.gmra.mxu0 %v1278
        %v1289 = vpop.f32.mrf.mxu0
        %v1290 = vadd.f32 %v1270, %v1289
        %v1291 = vpop.f32.mrf.mxu0
        %1292 = vdwg.mxu0
        %v1293 = vadd.f32 %v899, %v1290
        %v1294 = vsel %vm512, %v1293, 0.0
        %1295 = vadd.xlane.f32.xlu0 %v1294
        %v1296 = vpop.xlane.xlu0 %1295
        %v1297 = vmul.f32 %v1296, %v522
        %v1298 = vsub.f32 %v1293, %v1297
        %v1299 = vmul.f32 %v1298, %v1298
        %v1300 = vsel %vm512, %v1299, 0.0
        %1301 = vadd.xlane.f32.xlu0 %v1300
        %v1302 = vpop.xlane.xlu0 %1301
        %v1303 = vmul.f32 %v1302, 0.032258064
        %v1304 = vperm.slane %v510, 2
        %v1305 = vmul.f32 %v1304, %v1298
        %v1306 = vrsqrt.pop %v1303
        %v1307 = vmul.f32 %v1306, %v1303
        %v1308 = vmul.f32 %v1307, %v1306
        %v1309 = vmul.f32 0.5, %v1308
        %v1310 = vsub.f32 1.5, %v1309
        %v1311 = vmul.f32 %v1306, %v1310
        %v1312 = vmul.f32 %v1303, %v1311
        %vm1313 = vcmp.eq.f32.partialorder %v1303, inf
        %v1314 = vsel %vm1313, %v1303, %v1312
        %vm1315 = vcmp.eq.f32.partialorder %v1303, 0.0
        %v1316 = vand.u32 %v1303, 2147483648
        %v1317 = vsel %vm1315, %v1316, %v1314
        %v1318 = vadd.f32 %v1317, 1e-06
        %v1319 = vrcp.pop %v1318
        %v1320 = vmul.f32 %v1318, %v1319
        %v1321 = vsub.f32 1.0, %v1320
        %v1322 = vmul.f32 %v1319, %v1321
        %v1323 = vadd.f32 %v1319, %v1322
        %vm1324 = vweird.f32 %v1318
        %vm1325 = vweird.f32 %v1319
        %vm1326 = vmor %vm1324, %vm1325
        %v1327 = vsel %vm1326, %v1319, %v1323
        %v1328 = vand.u32 2147483647, %v1318
        %vm1329 = vcmp.eq.f32.partialorder %v1328, 8.507059e+37
        %v1330 = vand.u32 %v1318, 2147483648
        %v1331 = vor.u32 1.1754944e-38, %v1330
        %v1332 = vsel %vm1329, %v1331, %v1327
        %v1333 = vmul.f32 %v1305, %v1332
        %v1334 = vperm.slane %v510, 5
        %v1335 = vadd.f32 %v1333, %v1334
        %v1336 = vld [vmem:[%s480 + $0x8] sm:$0xff]
        %v1337 = vld [vmem:[%s480 + $0x10] sm:$0xff]
        %v1338 = vld [vmem:[%s480 + $0x18] sm:$0xff]
        %v1339 = vld [vmem:[%s480 + $0x20] sm:$0xff]
        %v1340 = vld [vmem:[%s480 + $0x28] sm:$0xff]
        %v1341 = vld [vmem:[%s480 + $0x30] sm:$0xff]
        %v1342 = vld [vmem:[%s480 + $0x38] sm:$0xff]
        %v1343 = vld [vmem:[%s480 + $0x40] sm:$0xff]
        %v1344 = vld [vmem:[%s480 + $0x50] sm:$0xff]
        %v1345 = vld [vmem:[%s480 + $0x58] sm:$0xff]
        %v1346 = vld [vmem:[%s480 + $0x60] sm:$0xff]
        %v1347 = vld [vmem:[%s480 + $0x68] sm:$0xff]
        %v1348 = vld [vmem:[%s480 + $0x70] sm:$0xff]
        %v1349 = vld [vmem:[%s480 + $0x78] sm:$0xff]
        %v1350 = vld [vmem:[%s480 + $0x80] sm:$0xff]
        %v1351 = vld [vmem:[%s480 + $0x88] sm:$0xff]
        %v1352 = vld [vmem:[%s480 + $0x98] sm:$0xff]
        %v1353 = vld [vmem:[%s480 + $0xa0] sm:$0xff]
        %v1354 = vld [vmem:[%s480 + $0xa8] sm:$0xff]
        %v1355 = vld [vmem:[%s480 + $0xb0] sm:$0xff]
        %v1356 = vld [vmem:[%s480 + $0xb8] sm:$0xff]
        %v1357 = vld [vmem:[%s480 + $0xc0] sm:$0xff]
        %v1358 = vld [vmem:[%s480 + $0xc8] sm:$0xff]
        %v1359 = vld [vmem:[%s480 + $0xd0] sm:$0xff]
        %v1360 = vld [vmem:[%s480 + $0xe0] sm:$0xff]
        %v1361 = vld [vmem:[%s480 + $0xe8] sm:$0xff]
        %v1362 = vld [vmem:[%s480 + $0xf0] sm:$0xff]
        %v1363 = vld [vmem:[%s480 + $0xf8] sm:$0xff]
        %v1364 = vld [vmem:[%s480 + $0x100] sm:$0xff]
        %v1365 = vld [vmem:[%s480 + $0x108] sm:$0xff]
        %v1366 = vld [vmem:[%s480 + $0x110] sm:$0xff]
        %v1367 = vld [vmem:[%s480 + $0x118] sm:$0xff]
        %v1368 = vpack.c.bf16 %v1335, %v1335
        %v1369 = vld [vmem:[%s494] sm:$0xff]
        %v1370 = vld [vmem:[%s494 + $0x8] sm:$0xff]
        %v1373 = vperm.slane %v1369, 0
        %v1374 = vperm.slane %v1369, 1
        %v1375 = vperm.slane %v1369, 2
        %v1376 = vperm.slane %v1369, 3
        %v1377 = vperm.slane %v1369, 4
        %v1378 = vperm.slane %v1369, 5
        %v1379 = vperm.slane %v1369, 6
        %v1380 = vperm.slane %v1369, 7
        %v1381 = vperm.slane %v1370, 0
        %v1382 = vperm.slane %v1370, 1
        %v1383 = vperm.slane %v1370, 2
        %v1384 = vperm.slane %v1370, 3
        %v1385 = vperm.slane %v1370, 4
        %v1386 = vperm.slane %v1370, 5
        %v1387 = vperm.slane %v1370, 6
        %v1388 = vperm.slane %v1370, 7
        %v1437 = vunpack.c.l.b16 %v1336
        %v1438 = vunpack.c.h.b16 %v1336
        %v1439 = vunpack.c.l.b16 %v1337
        %v1440 = vunpack.c.h.b16 %v1337
        %v1441 = vunpack.c.l.b16 %v1338
        %v1442 = vunpack.c.h.b16 %v1338
        %v1443 = vunpack.c.l.b16 %v1339
        %v1444 = vunpack.c.h.b16 %v1339
        %v1445 = vunpack.c.l.b16 %v1340
        %v1446 = vunpack.c.h.b16 %v1340
        %v1447 = vunpack.c.l.b16 %v1341
        %v1448 = vunpack.c.h.b16 %v1341
        %v1449 = vunpack.c.l.b16 %v1342
        %v1450 = vunpack.c.h.b16 %v1342
        %v1451 = vunpack.c.l.b16 %v1343
        %v1452 = vunpack.c.h.b16 %v1343
        %v1453 = vunpack.c.l.b16 %v1344
        %v1454 = vunpack.c.h.b16 %v1344
        %v1455 = vunpack.c.l.b16 %v1345
        %v1456 = vunpack.c.h.b16 %v1345
        %v1457 = vunpack.c.l.b16 %v1346
        %v1458 = vunpack.c.h.b16 %v1346
        %v1459 = vunpack.c.l.b16 %v1347
        %v1460 = vunpack.c.h.b16 %v1347
        %v1461 = vunpack.c.l.b16 %v1348
        %v1462 = vunpack.c.h.b16 %v1348
        %v1463 = vunpack.c.l.b16 %v1349
        %v1464 = vunpack.c.h.b16 %v1349
        %v1465 = vunpack.c.l.b16 %v1350
        %v1466 = vunpack.c.h.b16 %v1350
        %v1467 = vunpack.c.l.b16 %v1351
        %v1468 = vunpack.c.h.b16 %v1351
        %v1469 = vunpack.c.l.b16 %v1352
        %v1470 = vunpack.c.h.b16 %v1352
        %v1471 = vunpack.c.l.b16 %v1353
        %v1472 = vunpack.c.h.b16 %v1353
        %v1473 = vunpack.c.l.b16 %v1354
        %v1474 = vunpack.c.h.b16 %v1354
        %v1475 = vunpack.c.l.b16 %v1355
        %v1476 = vunpack.c.h.b16 %v1355
        %v1477 = vunpack.c.l.b16 %v1356
        %v1478 = vunpack.c.h.b16 %v1356
        %v1479 = vunpack.c.l.b16 %v1357
        %v1480 = vunpack.c.h.b16 %v1357
        %v1481 = vunpack.c.l.b16 %v1358
        %v1482 = vunpack.c.h.b16 %v1358
        %v1483 = vunpack.c.l.b16 %v1359
        %v1484 = vunpack.c.h.b16 %v1359
        %v1485 = vunpack.c.l.b16 %v1360
        %v1486 = vunpack.c.h.b16 %v1360
        %v1487 = vunpack.c.l.b16 %v1361
        %v1488 = vunpack.c.h.b16 %v1361
        %v1489 = vunpack.c.l.b16 %v1362
        %v1490 = vunpack.c.h.b16 %v1362
        %v1491 = vunpack.c.l.b16 %v1363
        %v1492 = vunpack.c.h.b16 %v1363
        %v1493 = vunpack.c.l.b16 %v1364
        %v1494 = vunpack.c.h.b16 %v1364
        %v1495 = vunpack.c.l.b16 %v1365
        %v1496 = vunpack.c.h.b16 %v1365
        %v1497 = vunpack.c.l.b16 %v1366
        %v1498 = vunpack.c.h.b16 %v1366
        %v1499 = vunpack.c.l.b16 %v1367
        %v1500 = vunpack.c.h.b16 %v1367
        %v1501 = vpack.c.b16 %v1453, %v1437
        %v1502 = vpack.c.b16 %v1454, %v1438
        %v1503 = vpack.c.b16 %v1455, %v1439
        %v1504 = vpack.c.b16 %v1456, %v1440
        %v1505 = vpack.c.b16 %v1457, %v1441
        %v1506 = vpack.c.b16 %v1458, %v1442
        %v1507 = vpack.c.b16 %v1459, %v1443
        %v1508 = vpack.c.b16 %v1460, %v1444
        %v1509 = vpack.c.b16 %v1461, %v1445
        %v1510 = vpack.c.b16 %v1462, %v1446
        %v1511 = vpack.c.b16 %v1463, %v1447
        %v1512 = vpack.c.b16 %v1464, %v1448
        %v1513 = vpack.c.b16 %v1465, %v1449
        %v1514 = vpack.c.b16 %v1466, %v1450
        %v1515 = vpack.c.b16 %v1467, %v1451
        %v1516 = vpack.c.b16 %v1468, %v1452
        %v1517 = vpack.c.b16 %v1485, %v1469
        %v1518 = vpack.c.b16 %v1486, %v1470
        %v1519 = vpack.c.b16 %v1487, %v1471
        %v1520 = vpack.c.b16 %v1488, %v1472
        %v1521 = vpack.c.b16 %v1489, %v1473
        %v1522 = vpack.c.b16 %v1490, %v1474
        %v1523 = vpack.c.b16 %v1491, %v1475
        %v1524 = vpack.c.b16 %v1492, %v1476
        %v1525 = vpack.c.b16 %v1493, %v1477
        %v1526 = vpack.c.b16 %v1494, %v1478
        %v1527 = vpack.c.b16 %v1495, %v1479
        %v1528 = vpack.c.b16 %v1496, %v1480
        %v1529 = vpack.c.b16 %v1497, %v1481
        %v1530 = vpack.c.b16 %v1498, %v1482
        %v1531 = vpack.c.b16 %v1499, %v1483
        %v1532 = vpack.c.b16 %v1500, %v1484
        %v1566 = vsel %vm512, %v1368, 0
        %1568 = vmatpush.bf16.msra.mxu0 0
        %1569 = vmatpush.bf16.msra.mxu0 0
        %1570 = vmatpush.bf16.msra.mxu0 0
        %1571 = vmatpush.bf16.msra.mxu0 0
        %1572 = vmatpush.bf16.msra.mxu0 0
        %1573 = vmatpush.bf16.msra.mxu0 0
        %1574 = vmatpush.bf16.msra.mxu0 %v1517
        %1575 = vmatpush.bf16.msra.mxu0 %v1501
        %1576 = vmatmul.bf16.gmra.mxu0 %v1566
        %v1577 = vpop.f32.mrf.mxu0
        %v1578 = vadd.f32 %v1373, %v1577
        %v1579 = vpop.f32.mrf.mxu0
        %1580 = vdwg.mxu0
        %1581 = vmatpush.bf16.msra.mxu0 0
        %1582 = vmatpush.bf16.msra.mxu0 0
        %1583 = vmatpush.bf16.msra.mxu0 0
        %1584 = vmatpush.bf16.msra.mxu0 0
        %1585 = vmatpush.bf16.msra.mxu0 0
        %1586 = vmatpush.bf16.msra.mxu0 0
        %1587 = vmatpush.bf16.msra.mxu0 %v1518
        %1588 = vmatpush.bf16.msra.mxu0 %v1502
        %1589 = vmatmul.bf16.gmra.mxu0 %v1566
        %v1590 = vpop.f32.mrf.mxu0
        %v1591 = vadd.f32 %v1374, %v1590
        %v1592 = vpop.f32.mrf.mxu0
        %1593 = vdwg.mxu0
        %1594 = vmatpush.bf16.msra.mxu0 0
        %1595 = vmatpush.bf16.msra.mxu0 0
        %1596 = vmatpush.bf16.msra.mxu0 0
        %1597 = vmatpush.bf16.msra.mxu0 0
        %1598 = vmatpush.bf16.msra.mxu0 0
        %1599 = vmatpush.bf16.msra.mxu0 0
        %1600 = vmatpush.bf16.msra.mxu0 %v1519
        %1601 = vmatpush.bf16.msra.mxu0 %v1503
        %1602 = vmatmul.bf16.gmra.mxu0 %v1566
        %v1603 = vpop.f32.mrf.mxu0
        %v1604 = vadd.f32 %v1375, %v1603
        %v1605 = vpop.f32.mrf.mxu0
        %1606 = vdwg.mxu0
        %1607 = vmatpush.bf16.msra.mxu0 0
        %1608 = vmatpush.bf16.msra.mxu0 0
        %1609 = vmatpush.bf16.msra.mxu0 0
        %1610 = vmatpush.bf16.msra.mxu0 0
        %1611 = vmatpush.bf16.msra.mxu0 0
        %1612 = vmatpush.bf16.msra.mxu0 0
        %1613 = vmatpush.bf16.msra.mxu0 %v1520
        %1614 = vmatpush.bf16.msra.mxu0 %v1504
        %1615 = vmatmul.bf16.gmra.mxu0 %v1566
        %v1616 = vpop.f32.mrf.mxu0
        %v1617 = vadd.f32 %v1376, %v1616
        %v1618 = vpop.f32.mrf.mxu0
        %1619 = vdwg.mxu0
        %1620 = vmatpush.bf16.msra.mxu0 0
        %1621 = vmatpush.bf16.msra.mxu0 0
        %1622 = vmatpush.bf16.msra.mxu0 0
        %1623 = vmatpush.bf16.msra.mxu0 0
        %1624 = vmatpush.bf16.msra.mxu0 0
        %1625 = vmatpush.bf16.msra.mxu0 0
        %1626 = vmatpush.bf16.msra.mxu0 %v1521
        %1627 = vmatpush.bf16.msra.mxu0 %v1505
        %1628 = vmatmul.bf16.gmra.mxu0 %v1566
        %v1629 = vpop.f32.mrf.mxu0
        %v1630 = vadd.f32 %v1377, %v1629
        %v1631 = vpop.f32.mrf.mxu0
        %1632 = vdwg.mxu0
        %1633 = vmatpush.bf16.msra.mxu0 0
        %1634 = vmatpush.bf16.msra.mxu0 0
        %1635 = vmatpush.bf16.msra.mxu0 0
        %1636 = vmatpush.bf16.msra.mxu0 0
        %1637 = vmatpush.bf16.msra.mxu0 0
        %1638 = vmatpush.bf16.msra.mxu0 0
        %1639 = vmatpush.bf16.msra.mxu0 %v1522
        %1640 = vmatpush.bf16.msra.mxu0 %v1506
        %1641 = vmatmul.bf16.gmra.mxu0 %v1566
        %v1642 = vpop.f32.mrf.mxu0
        %v1643 = vadd.f32 %v1378, %v1642
        %v1644 = vpop.f32.mrf.mxu0
        %1645 = vdwg.mxu0
        %1646 = vmatpush.bf16.msra.mxu0 0
        %1647 = vmatpush.bf16.msra.mxu0 0
        %1648 = vmatpush.bf16.msra.mxu0 0
        %1649 = vmatpush.bf16.msra.mxu0 0
        %1650 = vmatpush.bf16.msra.mxu0 0
        %1651 = vmatpush.bf16.msra.mxu0 0
        %1652 = vmatpush.bf16.msra.mxu0 %v1523
        %1653 = vmatpush.bf16.msra.mxu0 %v1507
        %1654 = vmatmul.bf16.gmra.mxu0 %v1566
        %v1655 = vpop.f32.mrf.mxu0
        %v1656 = vadd.f32 %v1379, %v1655
        %v1657 = vpop.f32.mrf.mxu0
        %1658 = vdwg.mxu0
        %1659 = vmatpush.bf16.msra.mxu0 0
        %1660 = vmatpush.bf16.msra.mxu0 0
        %1661 = vmatpush.bf16.msra.mxu0 0
        %1662 = vmatpush.bf16.msra.mxu0 0
        %1663 = vmatpush.bf16.msra.mxu0 0
        %1664 = vmatpush.bf16.msra.mxu0 0
        %1665 = vmatpush.bf16.msra.mxu0 %v1524
        %1666 = vmatpush.bf16.msra.mxu0 %v1508
        %1667 = vmatmul.bf16.gmra.mxu0 %v1566
        %v1668 = vpop.f32.mrf.mxu0
        %v1669 = vadd.f32 %v1380, %v1668
        %v1670 = vpop.f32.mrf.mxu0
        %1671 = vdwg.mxu0
        %1672 = vmatpush.bf16.msra.mxu0 0
        %1673 = vmatpush.bf16.msra.mxu0 0
        %1674 = vmatpush.bf16.msra.mxu0 0
        %1675 = vmatpush.bf16.msra.mxu0 0
        %1676 = vmatpush.bf16.msra.mxu0 0
        %1677 = vmatpush.bf16.msra.mxu0 0
        %1678 = vmatpush.bf16.msra.mxu0 %v1525
        %1679 = vmatpush.bf16.msra.mxu0 %v1509
        %1680 = vmatmul.bf16.gmra.mxu0 %v1566
        %v1681 = vpop.f32.mrf.mxu0
        %v1682 = vadd.f32 %v1381, %v1681
        %v1683 = vpop.f32.mrf.mxu0
        %1684 = vdwg.mxu0
        %1685 = vmatpush.bf16.msra.mxu0 0
        %1686 = vmatpush.bf16.msra.mxu0 0
        %1687 = vmatpush.bf16.msra.mxu0 0
        %1688 = vmatpush.bf16.msra.mxu0 0
        %1689 = vmatpush.bf16.msra.mxu0 0
        %1690 = vmatpush.bf16.msra.mxu0 0
        %1691 = vmatpush.bf16.msra.mxu0 %v1526
        %1692 = vmatpush.bf16.msra.mxu0 %v1510
        %1693 = vmatmul.bf16.gmra.mxu0 %v1566
        %v1694 = vpop.f32.mrf.mxu0
        %v1695 = vadd.f32 %v1382, %v1694
        %v1696 = vpop.f32.mrf.mxu0
        %1697 = vdwg.mxu0
        %1698 = vmatpush.bf16.msra.mxu0 0
        %1699 = vmatpush.bf16.msra.mxu0 0
        %1700 = vmatpush.bf16.msra.mxu0 0
        %1701 = vmatpush.bf16.msra.mxu0 0
        %1702 = vmatpush.bf16.msra.mxu0 0
        %1703 = vmatpush.bf16.msra.mxu0 0
        %1704 = vmatpush.bf16.msra.mxu0 %v1527
        %1705 = vmatpush.bf16.msra.mxu0 %v1511
        %1706 = vmatmul.bf16.gmra.mxu0 %v1566
        %v1707 = vpop.f32.mrf.mxu0
        %v1708 = vadd.f32 %v1383, %v1707
        %v1709 = vpop.f32.mrf.mxu0
        %1710 = vdwg.mxu0
        %1711 = vmatpush.bf16.msra.mxu0 0
        %1712 = vmatpush.bf16.msra.mxu0 0
        %1713 = vmatpush.bf16.msra.mxu0 0
        %1714 = vmatpush.bf16.msra.mxu0 0
        %1715 = vmatpush.bf16.msra.mxu0 0
        %1716 = vmatpush.bf16.msra.mxu0 0
        %1717 = vmatpush.bf16.msra.mxu0 %v1528
        %1718 = vmatpush.bf16.msra.mxu0 %v1512
        %1719 = vmatmul.bf16.gmra.mxu0 %v1566
        %v1720 = vpop.f32.mrf.mxu0
        %v1721 = vadd.f32 %v1384, %v1720
        %v1722 = vpop.f32.mrf.mxu0
        %1723 = vdwg.mxu0
        %1724 = vmatpush.bf16.msra.mxu0 0
        %1725 = vmatpush.bf16.msra.mxu0 0
        %1726 = vmatpush.bf16.msra.mxu0 0
        %1727 = vmatpush.bf16.msra.mxu0 0
        %1728 = vmatpush.bf16.msra.mxu0 0
        %1729 = vmatpush.bf16.msra.mxu0 0
        %1730 = vmatpush.bf16.msra.mxu0 %v1529
        %1731 = vmatpush.bf16.msra.mxu0 %v1513
        %1732 = vmatmul.bf16.gmra.mxu0 %v1566
        %v1733 = vpop.f32.mrf.mxu0
        %v1734 = vadd.f32 %v1385, %v1733
        %v1735 = vpop.f32.mrf.mxu0
        %1736 = vdwg.mxu0
        %1737 = vmatpush.bf16.msra.mxu0 0
        %1738 = vmatpush.bf16.msra.mxu0 0
        %1739 = vmatpush.bf16.msra.mxu0 0
        %1740 = vmatpush.bf16.msra.mxu0 0
        %1741 = vmatpush.bf16.msra.mxu0 0
        %1742 = vmatpush.bf16.msra.mxu0 0
        %1743 = vmatpush.bf16.msra.mxu0 %v1530
        %1744 = vmatpush.bf16.msra.mxu0 %v1514
        %1745 = vmatmul.bf16.gmra.mxu0 %v1566
        %v1746 = vpop.f32.mrf.mxu0
        %v1747 = vadd.f32 %v1386, %v1746
        %v1748 = vpop.f32.mrf.mxu0
        %1749 = vdwg.mxu0
        %1750 = vmatpush.bf16.msra.mxu0 0
        %1751 = vmatpush.bf16.msra.mxu0 0
        %1752 = vmatpush.bf16.msra.mxu0 0
        %1753 = vmatpush.bf16.msra.mxu0 0
        %1754 = vmatpush.bf16.msra.mxu0 0
        %1755 = vmatpush.bf16.msra.mxu0 0
        %1756 = vmatpush.bf16.msra.mxu0 %v1531
        %1757 = vmatpush.bf16.msra.mxu0 %v1515
        %1758 = vmatmul.bf16.gmra.mxu0 %v1566
        %v1759 = vpop.f32.mrf.mxu0
        %v1760 = vadd.f32 %v1387, %v1759
        %v1761 = vpop.f32.mrf.mxu0
        %1762 = vdwg.mxu0
        %1763 = vmatpush.bf16.msra.mxu0 0
        %1764 = vmatpush.bf16.msra.mxu0 0
        %1765 = vmatpush.bf16.msra.mxu0 0
        %1766 = vmatpush.bf16.msra.mxu0 0
        %1767 = vmatpush.bf16.msra.mxu0 0
        %1768 = vmatpush.bf16.msra.mxu0 0
        %1769 = vmatpush.bf16.msra.mxu0 %v1532
        %1770 = vmatpush.bf16.msra.mxu0 %v1516
        %1771 = vmatmul.bf16.gmra.mxu0 %v1566
        %v1772 = vpop.f32.mrf.mxu0
        %v1773 = vadd.f32 %v1388, %v1772
        %v1774 = vpop.f32.mrf.mxu0
        %1775 = vdwg.mxu0
        %v1776 = vmul.f32 %v1578, %v1578
        %v1777 = vmul.f32 %v1591, %v1591
        %v1778 = vmul.f32 %v1604, %v1604
        %v1779 = vmul.f32 %v1617, %v1617
        %v1780 = vmul.f32 %v1630, %v1630
        %v1781 = vmul.f32 %v1643, %v1643
        %v1782 = vmul.f32 %v1656, %v1656
        %v1783 = vmul.f32 %v1669, %v1669
        %v1784 = vmul.f32 %v1682, %v1682
        %v1785 = vmul.f32 %v1695, %v1695
        %v1786 = vmul.f32 %v1708, %v1708
        %v1787 = vmul.f32 %v1721, %v1721
        %v1788 = vmul.f32 %v1734, %v1734
        %v1789 = vmul.f32 %v1747, %v1747
        %v1790 = vmul.f32 %v1760, %v1760
        %v1791 = vmul.f32 %v1773, %v1773
        %v1792 = vmul.f32 %v1578, %v1776
        %v1793 = vmul.f32 %v1591, %v1777
        %v1794 = vmul.f32 %v1604, %v1778
        %v1795 = vmul.f32 %v1617, %v1779
        %v1796 = vmul.f32 %v1630, %v1780
        %v1797 = vmul.f32 %v1643, %v1781
        %v1798 = vmul.f32 %v1656, %v1782
        %v1799 = vmul.f32 %v1669, %v1783
        %v1800 = vmul.f32 %v1682, %v1784
        %v1801 = vmul.f32 %v1695, %v1785
        %v1802 = vmul.f32 %v1708, %v1786
        %v1803 = vmul.f32 %v1721, %v1787
        %v1804 = vmul.f32 %v1734, %v1788
        %v1805 = vmul.f32 %v1747, %v1789
        %v1806 = vmul.f32 %v1760, %v1790
        %v1807 = vmul.f32 %v1773, %v1791
        %v1808 = vmul.f32 %v1792, 0.044715
        %v1809 = vmul.f32 %v1793, 0.044715
        %v1810 = vmul.f32 %v1794, 0.044715
        %v1811 = vmul.f32 %v1795, 0.044715
        %v1812 = vmul.f32 %v1796, 0.044715
        %v1813 = vmul.f32 %v1797, 0.044715
        %v1814 = vmul.f32 %v1798, 0.044715
        %v1815 = vmul.f32 %v1799, 0.044715
        %v1816 = vmul.f32 %v1800, 0.044715
        %v1817 = vmul.f32 %v1801, 0.044715
        %v1818 = vmul.f32 %v1802, 0.044715
        %v1819 = vmul.f32 %v1803, 0.044715
        %v1820 = vmul.f32 %v1804, 0.044715
        %v1821 = vmul.f32 %v1805, 0.044715
        %v1822 = vmul.f32 %v1806, 0.044715
        %v1823 = vmul.f32 %v1807, 0.044715
        %v1824 = vadd.f32 %v1578, %v1808
        %v1825 = vadd.f32 %v1591, %v1809
        %v1826 = vadd.f32 %v1604, %v1810
        %v1827 = vadd.f32 %v1617, %v1811
        %v1828 = vadd.f32 %v1630, %v1812
        %v1829 = vadd.f32 %v1643, %v1813
        %v1830 = vadd.f32 %v1656, %v1814
        %v1831 = vadd.f32 %v1669, %v1815
        %v1832 = vadd.f32 %v1682, %v1816
        %v1833 = vadd.f32 %v1695, %v1817
        %v1834 = vadd.f32 %v1708, %v1818
        %v1835 = vadd.f32 %v1721, %v1819
        %v1836 = vadd.f32 %v1734, %v1820
        %v1837 = vadd.f32 %v1747, %v1821
        %v1838 = vadd.f32 %v1760, %v1822
        %v1839 = vadd.f32 %v1773, %v1823
        %v1840 = vmul.f32 %v1824, 0.7978846
        %v1841 = vmul.f32 %v1825, 0.7978846
        %v1842 = vmul.f32 %v1826, 0.7978846
        %v1843 = vmul.f32 %v1827, 0.7978846
        %v1844 = vmul.f32 %v1828, 0.7978846
        %v1845 = vmul.f32 %v1829, 0.7978846
        %v1846 = vmul.f32 %v1830, 0.7978846
        %v1847 = vmul.f32 %v1831, 0.7978846
        %v1848 = vmul.f32 %v1832, 0.7978846
        %v1849 = vmul.f32 %v1833, 0.7978846
        %v1850 = vmul.f32 %v1834, 0.7978846
        %v1851 = vmul.f32 %v1835, 0.7978846
        %v1852 = vmul.f32 %v1836, 0.7978846
        %v1853 = vmul.f32 %v1837, 0.7978846
        %v1854 = vmul.f32 %v1838, 0.7978846
        %v1855 = vmul.f32 %v1839, 0.7978846
        %v1856 = vtanh.pop %v1840
        %v1857 = vtanh.pop %v1841
        %v1858 = vtanh.pop %v1842
        %v1859 = vtanh.pop %v1843
        %v1860 = vtanh.pop %v1844
        %v1861 = vtanh.pop %v1845
        %v1862 = vtanh.pop %v1846
        %v1863 = vtanh.pop %v1847
        %v1864 = vtanh.pop %v1848
        %v1865 = vtanh.pop %v1849
        %v1866 = vtanh.pop %v1850
        %v1867 = vtanh.pop %v1851
        %v1868 = vtanh.pop %v1852
        %v1869 = vtanh.pop %v1853
        %v1870 = vtanh.pop %v1854
        %v1871 = vtanh.pop %v1855
        %v1872 = vadd.f32 %v1856, 1.0
        %v1873 = vadd.f32 %v1857, 1.0
        %v1874 = vadd.f32 %v1858, 1.0
        %v1875 = vadd.f32 %v1859, 1.0
        %v1876 = vadd.f32 %v1860, 1.0
        %v1877 = vadd.f32 %v1861, 1.0
        %v1878 = vadd.f32 %v1862, 1.0
        %v1879 = vadd.f32 %v1863, 1.0
        %v1880 = vadd.f32 %v1864, 1.0
        %v1881 = vadd.f32 %v1865, 1.0
        %v1882 = vadd.f32 %v1866, 1.0
        %v1883 = vadd.f32 %v1867, 1.0
        %v1884 = vadd.f32 %v1868, 1.0
        %v1885 = vadd.f32 %v1869, 1.0
        %v1886 = vadd.f32 %v1870, 1.0
        %v1887 = vadd.f32 %v1871, 1.0
        %v1888 = vmul.f32 %v1872, 0.5
        %v1889 = vmul.f32 %v1873, 0.5
        %v1890 = vmul.f32 %v1874, 0.5
        %v1891 = vmul.f32 %v1875, 0.5
        %v1892 = vmul.f32 %v1876, 0.5
        %v1893 = vmul.f32 %v1877, 0.5
        %v1894 = vmul.f32 %v1878, 0.5
        %v1895 = vmul.f32 %v1879, 0.5
        %v1896 = vmul.f32 %v1880, 0.5
        %v1897 = vmul.f32 %v1881, 0.5
        %v1898 = vmul.f32 %v1882, 0.5
        %v1899 = vmul.f32 %v1883, 0.5
        %v1900 = vmul.f32 %v1884, 0.5
        %v1901 = vmul.f32 %v1885, 0.5
        %v1902 = vmul.f32 %v1886, 0.5
        %v1903 = vmul.f32 %v1887, 0.5
        %v1904 = vmul.f32 %v1578, %v1888
        %v1905 = vmul.f32 %v1591, %v1889
        %v1906 = vmul.f32 %v1604, %v1890
        %v1907 = vmul.f32 %v1617, %v1891
        %v1908 = vmul.f32 %v1630, %v1892
        %v1909 = vmul.f32 %v1643, %v1893
        %v1910 = vmul.f32 %v1656, %v1894
        %v1911 = vmul.f32 %v1669, %v1895
        %v1912 = vmul.f32 %v1682, %v1896
        %v1913 = vmul.f32 %v1695, %v1897
        %v1914 = vmul.f32 %v1708, %v1898
        %v1915 = vmul.f32 %v1721, %v1899
        %v1916 = vmul.f32 %v1734, %v1900
        %v1917 = vmul.f32 %v1747, %v1901
        %v1918 = vmul.f32 %v1760, %v1902
        %v1919 = vmul.f32 %v1773, %v1903
        %v1920 = vpack.c.bf16 %v1904, %v1904
        %v1921 = vpack.c.bf16 %v1905, %v1905
        %v1922 = vpack.c.bf16 %v1906, %v1906
        %v1923 = vpack.c.bf16 %v1907, %v1907
        %v1924 = vpack.c.bf16 %v1908, %v1908
        %v1925 = vpack.c.bf16 %v1909, %v1909
        %v1926 = vpack.c.bf16 %v1910, %v1910
        %v1927 = vpack.c.bf16 %v1911, %v1911
        %v1928 = vpack.c.bf16 %v1912, %v1912
        %v1929 = vpack.c.bf16 %v1913, %v1913
        %v1930 = vpack.c.bf16 %v1914, %v1914
        %v1931 = vpack.c.bf16 %v1915, %v1915
        %v1932 = vpack.c.bf16 %v1916, %v1916
        %v1933 = vpack.c.bf16 %v1917, %v1917
        %v1934 = vpack.c.bf16 %v1918, %v1918
        %v1935 = vpack.c.bf16 %v1919, %v1919
        %v1936 = vld [vmem:[%s485] sm:$0xf]
        %v1937 = vld [vmem:[%s485 + $0x4] sm:$0xf]
        %v1938 = vld [vmem:[%s485 + $0x8] sm:$0xf]
        %v1939 = vld [vmem:[%s485 + $0xc] sm:$0xf]
        %v1940 = vld [vmem:[%s485 + $0x10] sm:$0xf]
        %v1941 = vld [vmem:[%s485 + $0x14] sm:$0xf]
        %v1942 = vld [vmem:[%s485 + $0x18] sm:$0xf]
        %v1943 = vld [vmem:[%s485 + $0x1c] sm:$0xf]
        %v1944 = vld [vmem:[%s485 + $0x20] sm:$0xf]
        %v1945 = vld [vmem:[%s485 + $0x24] sm:$0xf]
        %v1946 = vld [vmem:[%s485 + $0x28] sm:$0xf]
        %v1947 = vld [vmem:[%s485 + $0x2c] sm:$0xf]
        %v1948 = vld [vmem:[%s485 + $0x30] sm:$0xf]
        %v1949 = vld [vmem:[%s485 + $0x34] sm:$0xf]
        %v1950 = vld [vmem:[%s485 + $0x38] sm:$0xf]
        %v1951 = vld [vmem:[%s485 + $0x3c] sm:$0xf]
        %v1952 = vld [vmem:[%s485 + $0x40] sm:$0xf]
        %v1953 = vld [vmem:[%s485 + $0x44] sm:$0xf]
        %v1954 = vld [vmem:[%s485 + $0x48] sm:$0xf]
        %v1955 = vld [vmem:[%s485 + $0x4c] sm:$0xf]
        %v1956 = vld [vmem:[%s485 + $0x50] sm:$0xf]
        %v1957 = vld [vmem:[%s485 + $0x54] sm:$0xf]
        %v1958 = vld [vmem:[%s485 + $0x58] sm:$0xf]
        %v1959 = vld [vmem:[%s485 + $0x5c] sm:$0xf]
        %v1960 = vld [vmem:[%s485 + $0x60] sm:$0xf]
        %v1961 = vld [vmem:[%s485 + $0x64] sm:$0xf]
        %v1962 = vld [vmem:[%s485 + $0x68] sm:$0xf]
        %v1963 = vld [vmem:[%s485 + $0x6c] sm:$0xf]
        %v1964 = vld [vmem:[%s485 + $0x70] sm:$0xf]
        %v1965 = vld [vmem:[%s485 + $0x74] sm:$0xf]
        %v1966 = vld [vmem:[%s485 + $0x78] sm:$0xf]
        %v1967 = vld [vmem:[%s485 + $0x7c] sm:$0xf]
        %v1968 = vld [vmem:[%s485 + $0x80] sm:$0xf]
        %v1969 = vld [vmem:[%s485 + $0x84] sm:$0xf]
        %v1970 = vld [vmem:[%s485 + $0x88] sm:$0xf]
        %v1971 = vld [vmem:[%s485 + $0x8c] sm:$0xf]
        %v1972 = vld [vmem:[%s485 + $0x90] sm:$0xf]
        %v1973 = vld [vmem:[%s485 + $0x94] sm:$0xf]
        %v1974 = vld [vmem:[%s485 + $0x98] sm:$0xf]
        %v1975 = vld [vmem:[%s485 + $0x9c] sm:$0xf]
        %v1976 = vld [vmem:[%s485 + $0xa0] sm:$0xf]
        %v1977 = vld [vmem:[%s485 + $0xa4] sm:$0xf]
        %v1978 = vld [vmem:[%s485 + $0xa8] sm:$0xf]
        %v1979 = vld [vmem:[%s485 + $0xac] sm:$0xf]
        %v1980 = vld [vmem:[%s485 + $0xb0] sm:$0xf]
        %v1981 = vld [vmem:[%s485 + $0xb4] sm:$0xf]
        %v1982 = vld [vmem:[%s485 + $0xb8] sm:$0xf]
        %v1983 = vld [vmem:[%s485 + $0xbc] sm:$0xf]
        %v1984 = vld [vmem:[%s485 + $0xc0] sm:$0xf]
        %v1985 = vld [vmem:[%s485 + $0xc4] sm:$0xf]
        %v1986 = vld [vmem:[%s485 + $0xc8] sm:$0xf]
        %v1987 = vld [vmem:[%s485 + $0xcc] sm:$0xf]
        %v1988 = vld [vmem:[%s485 + $0xd0] sm:$0xf]
        %v1989 = vld [vmem:[%s485 + $0xd4] sm:$0xf]
        %v1990 = vld [vmem:[%s485 + $0xd8] sm:$0xf]
        %v1991 = vld [vmem:[%s485 + $0xdc] sm:$0xf]
        %v1992 = vld [vmem:[%s485 + $0xe0] sm:$0xf]
        %v1993 = vld [vmem:[%s485 + $0xe4] sm:$0xf]
        %v1994 = vld [vmem:[%s485 + $0xe8] sm:$0xf]
        %v1995 = vld [vmem:[%s485 + $0xec] sm:$0xf]
        %v1996 = vld [vmem:[%s485 + $0xf0] sm:$0xf]
        %v1997 = vld [vmem:[%s485 + $0xf4] sm:$0xf]
        %v1998 = vld [vmem:[%s485 + $0xf8] sm:$0xf]
        %v1999 = vld [vmem:[%s485 + $0xfc] sm:$0xf]
        %v2000 = vld [vmem:[%s485 + $0x100] sm:$0xf]
        %v2001 = vld [vmem:[%s485 + $0x104] sm:$0xf]
        %v2002 = vld [vmem:[%s485 + $0x108] sm:$0xf]
        %v2003 = vld [vmem:[%s485 + $0x10c] sm:$0xf]
        %v2004 = vld [vmem:[%s485 + $0x110] sm:$0xf]
        %v2005 = vld [vmem:[%s485 + $0x114] sm:$0xf]
        %v2006 = vld [vmem:[%s485 + $0x118] sm:$0xf]
        %v2007 = vld [vmem:[%s485 + $0x11c] sm:$0xf]
        %v2008 = vld [vmem:[%s485 + $0x120] sm:$0xf]
        %v2009 = vld [vmem:[%s485 + $0x124] sm:$0xf]
        %v2010 = vld [vmem:[%s485 + $0x128] sm:$0xf]
        %v2011 = vld [vmem:[%s485 + $0x12c] sm:$0xf]
        %v2012 = vld [vmem:[%s485 + $0x130] sm:$0xf]
        %v2013 = vld [vmem:[%s485 + $0x134] sm:$0xf]
        %v2014 = vld [vmem:[%s485 + $0x138] sm:$0xf]
        %v2015 = vld [vmem:[%s485 + $0x13c] sm:$0xf]
        %v2016 = vld [vmem:[%s485 + $0x140] sm:$0xf]
        %v2017 = vld [vmem:[%s485 + $0x144] sm:$0xf]
        %v2018 = vld [vmem:[%s485 + $0x148] sm:$0xf]
        %v2019 = vld [vmem:[%s485 + $0x14c] sm:$0xf]
        %v2020 = vld [vmem:[%s485 + $0x150] sm:$0xf]
        %v2021 = vld [vmem:[%s485 + $0x154] sm:$0xf]
        %v2022 = vld [vmem:[%s485 + $0x158] sm:$0xf]
        %v2023 = vld [vmem:[%s485 + $0x15c] sm:$0xf]
        %v2024 = vld [vmem:[%s485 + $0x160] sm:$0xf]
        %v2025 = vld [vmem:[%s485 + $0x164] sm:$0xf]
        %v2026 = vld [vmem:[%s485 + $0x168] sm:$0xf]
        %v2027 = vld [vmem:[%s485 + $0x16c] sm:$0xf]
        %v2028 = vld [vmem:[%s485 + $0x170] sm:$0xf]
        %v2029 = vld [vmem:[%s485 + $0x174] sm:$0xf]
        %v2030 = vld [vmem:[%s485 + $0x178] sm:$0xf]
        %v2031 = vld [vmem:[%s485 + $0x17c] sm:$0xf]
        %v2032 = vld [vmem:[%s485 + $0x180] sm:$0xf]
        %v2033 = vld [vmem:[%s485 + $0x184] sm:$0xf]
        %v2034 = vld [vmem:[%s485 + $0x188] sm:$0xf]
        %v2035 = vld [vmem:[%s485 + $0x18c] sm:$0xf]
        %v2036 = vld [vmem:[%s485 + $0x190] sm:$0xf]
        %v2037 = vld [vmem:[%s485 + $0x194] sm:$0xf]
        %v2038 = vld [vmem:[%s485 + $0x198] sm:$0xf]
        %v2039 = vld [vmem:[%s485 + $0x19c] sm:$0xf]
        %v2040 = vld [vmem:[%s485 + $0x1a0] sm:$0xf]
        %v2041 = vld [vmem:[%s485 + $0x1a4] sm:$0xf]
        %v2042 = vld [vmem:[%s485 + $0x1a8] sm:$0xf]
        %v2043 = vld [vmem:[%s485 + $0x1ac] sm:$0xf]
        %v2044 = vld [vmem:[%s485 + $0x1b0] sm:$0xf]
        %v2045 = vld [vmem:[%s485 + $0x1b4] sm:$0xf]
        %v2046 = vld [vmem:[%s485 + $0x1b8] sm:$0xf]
        %v2047 = vld [vmem:[%s485 + $0x1bc] sm:$0xf]
        %v2048 = vld [vmem:[%s485 + $0x1c0] sm:$0xf]
        %v2049 = vld [vmem:[%s485 + $0x1c4] sm:$0xf]
        %v2050 = vld [vmem:[%s485 + $0x1c8] sm:$0xf]
        %v2051 = vld [vmem:[%s485 + $0x1cc] sm:$0xf]
        %v2052 = vld [vmem:[%s485 + $0x1d0] sm:$0xf]
        %v2053 = vld [vmem:[%s485 + $0x1d4] sm:$0xf]
        %v2054 = vld [vmem:[%s485 + $0x1d8] sm:$0xf]
        %v2055 = vld [vmem:[%s485 + $0x1dc] sm:$0xf]
        %v2056 = vld [vmem:[%s485 + $0x1e0] sm:$0xf]
        %v2057 = vld [vmem:[%s485 + $0x1e4] sm:$0xf]
        %v2058 = vld [vmem:[%s485 + $0x1e8] sm:$0xf]
        %v2059 = vld [vmem:[%s485 + $0x1ec] sm:$0xf]
        %v2060 = vld [vmem:[%s485 + $0x1f0] sm:$0xf]
        %v2061 = vld [vmem:[%s485 + $0x1f4] sm:$0xf]
        %v2062 = vld [vmem:[%s485 + $0x1f8] sm:$0xf]
        %v2063 = vld [vmem:[%s485 + $0x1fc] sm:$0xf]
        %v2064 = vld [vmem:[%s485 + $0x200] sm:$0xf]
        %v2065 = vld [vmem:[%s485 + $0x204] sm:$0xf]
        %v2066 = vld [vmem:[%s485 + $0x208] sm:$0xf]
        %v2067 = vld [vmem:[%s485 + $0x20c] sm:$0xf]
        %v2068 = vld [vmem:[%s485 + $0x210] sm:$0xf]
        %v2069 = vld [vmem:[%s485 + $0x214] sm:$0xf]
        %v2070 = vld [vmem:[%s485 + $0x218] sm:$0xf]
        %v2071 = vld [vmem:[%s485 + $0x21c] sm:$0xf]
        %v2072 = vld [vmem:[%s485 + $0x220] sm:$0xf]
        %v2073 = vld [vmem:[%s485 + $0x224] sm:$0xf]
        %v2074 = vld [vmem:[%s485 + $0x228] sm:$0xf]
        %v2075 = vld [vmem:[%s485 + $0x22c] sm:$0xf]
        %v2076 = vld [vmem:[%s485 + $0x230] sm:$0xf]
        %v2077 = vld [vmem:[%s485 + $0x234] sm:$0xf]
        %v2078 = vld [vmem:[%s485 + $0x238] sm:$0xf]
        %v2079 = vld [vmem:[%s485 + $0x23c] sm:$0xf]
        %v2080 = vld [vmem:[%s485 + $0x240] sm:$0xf]
        %v2081 = vld [vmem:[%s485 + $0x244] sm:$0xf]
        %v2082 = vld [vmem:[%s485 + $0x248] sm:$0xf]
        %v2083 = vld [vmem:[%s485 + $0x24c] sm:$0xf]
        %v2084 = vld [vmem:[%s485 + $0x250] sm:$0xf]
        %v2085 = vld [vmem:[%s485 + $0x254] sm:$0xf]
        %v2086 = vld [vmem:[%s485 + $0x258] sm:$0xf]
        %v2087 = vld [vmem:[%s485 + $0x25c] sm:$0xf]
        %v2088 = vld [vmem:[%s485 + $0x260] sm:$0xf]
        %v2089 = vld [vmem:[%s485 + $0x264] sm:$0xf]
        %v2090 = vld [vmem:[%s485 + $0x268] sm:$0xf]
        %v2091 = vld [vmem:[%s485 + $0x26c] sm:$0xf]
        %v2092 = vld [vmem:[%s485 + $0x270] sm:$0xf]
        %v2093 = vld [vmem:[%s485 + $0x274] sm:$0xf]
        %v2094 = vld [vmem:[%s485 + $0x278] sm:$0xf]
        %v2095 = vld [vmem:[%s485 + $0x27c] sm:$0xf]
        %v2096 = vld [vmem:[%s485 + $0x280] sm:$0xf]
        %v2097 = vld [vmem:[%s485 + $0x284] sm:$0xf]
        %v2098 = vld [vmem:[%s485 + $0x288] sm:$0xf]
        %v2099 = vld [vmem:[%s485 + $0x28c] sm:$0xf]
        %v2100 = vld [vmem:[%s485 + $0x290] sm:$0xf]
        %v2101 = vld [vmem:[%s485 + $0x294] sm:$0xf]
        %v2102 = vld [vmem:[%s485 + $0x298] sm:$0xf]
        %v2103 = vld [vmem:[%s485 + $0x29c] sm:$0xf]
        %v2104 = vld [vmem:[%s485 + $0x2a0] sm:$0xf]
        %v2105 = vld [vmem:[%s485 + $0x2a4] sm:$0xf]
        %v2106 = vld [vmem:[%s485 + $0x2a8] sm:$0xf]
        %v2107 = vld [vmem:[%s485 + $0x2ac] sm:$0xf]
        %v2108 = vld [vmem:[%s485 + $0x2b0] sm:$0xf]
        %v2109 = vld [vmem:[%s485 + $0x2b4] sm:$0xf]
        %v2110 = vld [vmem:[%s485 + $0x2b8] sm:$0xf]
        %v2111 = vld [vmem:[%s485 + $0x2bc] sm:$0xf]
        %v2112 = vld [vmem:[%s485 + $0x2c0] sm:$0xf]
        %v2113 = vld [vmem:[%s485 + $0x2c4] sm:$0xf]
        %v2114 = vld [vmem:[%s485 + $0x2c8] sm:$0xf]
        %v2115 = vld [vmem:[%s485 + $0x2cc] sm:$0xf]
        %v2116 = vld [vmem:[%s485 + $0x2d0] sm:$0xf]
        %v2117 = vld [vmem:[%s485 + $0x2d4] sm:$0xf]
        %v2118 = vld [vmem:[%s485 + $0x2d8] sm:$0xf]
        %v2119 = vld [vmem:[%s485 + $0x2dc] sm:$0xf]
        %v2120 = vld [vmem:[%s485 + $0x2e0] sm:$0xf]
        %v2121 = vld [vmem:[%s485 + $0x2e4] sm:$0xf]
        %v2122 = vld [vmem:[%s485 + $0x2e8] sm:$0xf]
        %v2123 = vld [vmem:[%s485 + $0x2ec] sm:$0xf]
        %v2124 = vld [vmem:[%s485 + $0x2f0] sm:$0xf]
        %v2125 = vld [vmem:[%s485 + $0x2f4] sm:$0xf]
        %v2126 = vld [vmem:[%s485 + $0x2f8] sm:$0xf]
        %v2127 = vld [vmem:[%s485 + $0x2fc] sm:$0xf]
        %v2128 = vld [vmem:[%s485 + $0x300] sm:$0xf]
        %v2129 = vld [vmem:[%s485 + $0x304] sm:$0xf]
        %v2130 = vld [vmem:[%s485 + $0x308] sm:$0xf]
        %v2131 = vld [vmem:[%s485 + $0x30c] sm:$0xf]
        %v2132 = vld [vmem:[%s485 + $0x310] sm:$0xf]
        %v2133 = vld [vmem:[%s485 + $0x314] sm:$0xf]
        %v2134 = vld [vmem:[%s485 + $0x318] sm:$0xf]
        %v2135 = vld [vmem:[%s485 + $0x31c] sm:$0xf]
        %v2136 = vld [vmem:[%s485 + $0x320] sm:$0xf]
        %v2137 = vld [vmem:[%s485 + $0x324] sm:$0xf]
        %v2138 = vld [vmem:[%s485 + $0x328] sm:$0xf]
        %v2139 = vld [vmem:[%s485 + $0x32c] sm:$0xf]
        %v2140 = vld [vmem:[%s485 + $0x330] sm:$0xf]
        %v2141 = vld [vmem:[%s485 + $0x334] sm:$0xf]
        %v2142 = vld [vmem:[%s485 + $0x338] sm:$0xf]
        %v2143 = vld [vmem:[%s485 + $0x33c] sm:$0xf]
        %v2144 = vld [vmem:[%s485 + $0x340] sm:$0xf]
        %v2145 = vld [vmem:[%s485 + $0x344] sm:$0xf]
        %v2146 = vld [vmem:[%s485 + $0x348] sm:$0xf]
        %v2147 = vld [vmem:[%s485 + $0x34c] sm:$0xf]
        %v2148 = vld [vmem:[%s485 + $0x350] sm:$0xf]
        %v2149 = vld [vmem:[%s485 + $0x354] sm:$0xf]
        %v2150 = vld [vmem:[%s485 + $0x358] sm:$0xf]
        %v2151 = vld [vmem:[%s485 + $0x35c] sm:$0xf]
        %v2152 = vld [vmem:[%s485 + $0x360] sm:$0xf]
        %v2153 = vld [vmem:[%s485 + $0x364] sm:$0xf]
        %v2154 = vld [vmem:[%s485 + $0x368] sm:$0xf]
        %v2155 = vld [vmem:[%s485 + $0x36c] sm:$0xf]
        %v2156 = vld [vmem:[%s485 + $0x370] sm:$0xf]
        %v2157 = vld [vmem:[%s485 + $0x374] sm:$0xf]
        %v2158 = vld [vmem:[%s485 + $0x378] sm:$0xf]
        %v2159 = vld [vmem:[%s485 + $0x37c] sm:$0xf]
        %v2160 = vld [vmem:[%s485 + $0x380] sm:$0xf]
        %v2161 = vld [vmem:[%s485 + $0x384] sm:$0xf]
        %v2162 = vld [vmem:[%s485 + $0x388] sm:$0xf]
        %v2163 = vld [vmem:[%s485 + $0x38c] sm:$0xf]
        %v2164 = vld [vmem:[%s485 + $0x390] sm:$0xf]
        %v2165 = vld [vmem:[%s485 + $0x394] sm:$0xf]
        %v2166 = vld [vmem:[%s485 + $0x398] sm:$0xf]
        %v2167 = vld [vmem:[%s485 + $0x39c] sm:$0xf]
        %v2168 = vld [vmem:[%s485 + $0x3a0] sm:$0xf]
        %v2169 = vld [vmem:[%s485 + $0x3a4] sm:$0xf]
        %v2170 = vld [vmem:[%s485 + $0x3a8] sm:$0xf]
        %v2171 = vld [vmem:[%s485 + $0x3ac] sm:$0xf]
        %v2172 = vld [vmem:[%s485 + $0x3b0] sm:$0xf]
        %v2173 = vld [vmem:[%s485 + $0x3b4] sm:$0xf]
        %v2174 = vld [vmem:[%s485 + $0x3b8] sm:$0xf]
        %v2175 = vld [vmem:[%s485 + $0x3bc] sm:$0xf]
        %v2176 = vld [vmem:[%s485 + $0x3c0] sm:$0xf]
        %v2177 = vld [vmem:[%s485 + $0x3c4] sm:$0xf]
        %v2178 = vld [vmem:[%s485 + $0x3c8] sm:$0xf]
        %v2179 = vld [vmem:[%s485 + $0x3cc] sm:$0xf]
        %v2180 = vld [vmem:[%s485 + $0x3d0] sm:$0xf]
        %v2181 = vld [vmem:[%s485 + $0x3d4] sm:$0xf]
        %v2182 = vld [vmem:[%s485 + $0x3d8] sm:$0xf]
        %v2183 = vld [vmem:[%s485 + $0x3dc] sm:$0xf]
        %v2184 = vld [vmem:[%s485 + $0x3e0] sm:$0xf]
        %v2185 = vld [vmem:[%s485 + $0x3e4] sm:$0xf]
        %v2186 = vld [vmem:[%s485 + $0x3e8] sm:$0xf]
        %v2187 = vld [vmem:[%s485 + $0x3ec] sm:$0xf]
        %v2188 = vld [vmem:[%s485 + $0x3f0] sm:$0xf]
        %v2189 = vld [vmem:[%s485 + $0x3f4] sm:$0xf]
        %v2190 = vld [vmem:[%s485 + $0x3f8] sm:$0xf]
        %v2191 = vld [vmem:[%s485 + $0x3fc] sm:$0xf]
        %v2192 = vperm.slane %v511, 6
        %v2449 = vunpack.c.l.b16 %v1936
        %v2450 = vunpack.c.l.b16 %v1937
        %v2451 = vunpack.c.l.b16 %v1938
        %v2452 = vunpack.c.l.b16 %v1939
        %v2453 = vunpack.c.l.b16 %v1940
        %v2454 = vunpack.c.l.b16 %v1941
        %v2455 = vunpack.c.l.b16 %v1942
        %v2456 = vunpack.c.l.b16 %v1943
        %v2457 = vunpack.c.l.b16 %v1944
        %v2458 = vunpack.c.l.b16 %v1945
        %v2459 = vunpack.c.l.b16 %v1946
        %v2460 = vunpack.c.l.b16 %v1947
        %v2461 = vunpack.c.l.b16 %v1948
        %v2462 = vunpack.c.l.b16 %v1949
        %v2463 = vunpack.c.l.b16 %v1950
        %v2464 = vunpack.c.l.b16 %v1951
        %v2465 = vunpack.c.l.b16 %v1952
        %v2466 = vunpack.c.l.b16 %v1953
        %v2467 = vunpack.c.l.b16 %v1954
        %v2468 = vunpack.c.l.b16 %v1955
        %v2469 = vunpack.c.l.b16 %v1956
        %v2470 = vunpack.c.l.b16 %v1957
        %v2471 = vunpack.c.l.b16 %v1958
        %v2472 = vunpack.c.l.b16 %v1959
        %v2473 = vunpack.c.l.b16 %v1960
        %v2474 = vunpack.c.l.b16 %v1961
        %v2475 = vunpack.c.l.b16 %v1962
        %v2476 = vunpack.c.l.b16 %v1963
        %v2477 = vunpack.c.l.b16 %v1964
        %v2478 = vunpack.c.l.b16 %v1965
        %v2479 = vunpack.c.l.b16 %v1966
        %v2480 = vunpack.c.l.b16 %v1967
        %v2481 = vunpack.c.l.b16 %v1968
        %v2482 = vunpack.c.l.b16 %v1969
        %v2483 = vunpack.c.l.b16 %v1970
        %v2484 = vunpack.c.l.b16 %v1971
        %v2485 = vunpack.c.l.b16 %v1972
        %v2486 = vunpack.c.l.b16 %v1973
        %v2487 = vunpack.c.l.b16 %v1974
        %v2488 = vunpack.c.l.b16 %v1975
        %v2489 = vunpack.c.l.b16 %v1976
        %v2490 = vunpack.c.l.b16 %v1977
        %v2491 = vunpack.c.l.b16 %v1978
        %v2492 = vunpack.c.l.b16 %v1979
        %v2493 = vunpack.c.l.b16 %v1980
        %v2494 = vunpack.c.l.b16 %v1981
        %v2495 = vunpack.c.l.b16 %v1982
        %v2496 = vunpack.c.l.b16 %v1983
        %v2497 = vunpack.c.l.b16 %v1984
        %v2498 = vunpack.c.l.b16 %v1985
        %v2499 = vunpack.c.l.b16 %v1986
        %v2500 = vunpack.c.l.b16 %v1987
        %v2501 = vunpack.c.l.b16 %v1988
        %v2502 = vunpack.c.l.b16 %v1989
        %v2503 = vunpack.c.l.b16 %v1990
        %v2504 = vunpack.c.l.b16 %v1991
        %v2505 = vunpack.c.l.b16 %v1992
        %v2506 = vunpack.c.l.b16 %v1993
        %v2507 = vunpack.c.l.b16 %v1994
        %v2508 = vunpack.c.l.b16 %v1995
        %v2509 = vunpack.c.l.b16 %v1996
        %v2510 = vunpack.c.l.b16 %v1997
        %v2511 = vunpack.c.l.b16 %v1998
        %v2512 = vunpack.c.l.b16 %v1999
        %v2513 = vunpack.c.l.b16 %v2000
        %v2514 = vunpack.c.l.b16 %v2001
        %v2515 = vunpack.c.l.b16 %v2002
        %v2516 = vunpack.c.l.b16 %v2003
        %v2517 = vunpack.c.l.b16 %v2004
        %v2518 = vunpack.c.l.b16 %v2005
        %v2519 = vunpack.c.l.b16 %v2006
        %v2520 = vunpack.c.l.b16 %v2007
        %v2521 = vunpack.c.l.b16 %v2008
        %v2522 = vunpack.c.l.b16 %v2009
        %v2523 = vunpack.c.l.b16 %v2010
        %v2524 = vunpack.c.l.b16 %v2011
        %v2525 = vunpack.c.l.b16 %v2012
        %v2526 = vunpack.c.l.b16 %v2013
        %v2527 = vunpack.c.l.b16 %v2014
        %v2528 = vunpack.c.l.b16 %v2015
        %v2529 = vunpack.c.l.b16 %v2016
        %v2530 = vunpack.c.l.b16 %v2017
        %v2531 = vunpack.c.l.b16 %v2018
        %v2532 = vunpack.c.l.b16 %v2019
        %v2533 = vunpack.c.l.b16 %v2020
        %v2534 = vunpack.c.l.b16 %v2021
        %v2535 = vunpack.c.l.b16 %v2022
        %v2536 = vunpack.c.l.b16 %v2023
        %v2537 = vunpack.c.l.b16 %v2024
        %v2538 = vunpack.c.l.b16 %v2025
        %v2539 = vunpack.c.l.b16 %v2026
        %v2540 = vunpack.c.l.b16 %v2027
        %v2541 = vunpack.c.l.b16 %v2028
        %v2542 = vunpack.c.l.b16 %v2029
        %v2543 = vunpack.c.l.b16 %v2030
        %v2544 = vunpack.c.l.b16 %v2031
        %v2545 = vunpack.c.l.b16 %v2032
        %v2546 = vunpack.c.l.b16 %v2033
        %v2547 = vunpack.c.l.b16 %v2034
        %v2548 = vunpack.c.l.b16 %v2035
        %v2549 = vunpack.c.l.b16 %v2036
        %v2550 = vunpack.c.l.b16 %v2037
        %v2551 = vunpack.c.l.b16 %v2038
        %v2552 = vunpack.c.l.b16 %v2039
        %v2553 = vunpack.c.l.b16 %v2040
        %v2554 = vunpack.c.l.b16 %v2041
        %v2555 = vunpack.c.l.b16 %v2042
        %v2556 = vunpack.c.l.b16 %v2043
        %v2557 = vunpack.c.l.b16 %v2044
        %v2558 = vunpack.c.l.b16 %v2045
        %v2559 = vunpack.c.l.b16 %v2046
        %v2560 = vunpack.c.l.b16 %v2047
        %v2561 = vunpack.c.l.b16 %v2048
        %v2562 = vunpack.c.l.b16 %v2049
        %v2563 = vunpack.c.l.b16 %v2050
        %v2564 = vunpack.c.l.b16 %v2051
        %v2565 = vunpack.c.l.b16 %v2052
        %v2566 = vunpack.c.l.b16 %v2053
        %v2567 = vunpack.c.l.b16 %v2054
        %v2568 = vunpack.c.l.b16 %v2055
        %v2569 = vunpack.c.l.b16 %v2056
        %v2570 = vunpack.c.l.b16 %v2057
        %v2571 = vunpack.c.l.b16 %v2058
        %v2572 = vunpack.c.l.b16 %v2059
        %v2573 = vunpack.c.l.b16 %v2060
        %v2574 = vunpack.c.l.b16 %v2061
        %v2575 = vunpack.c.l.b16 %v2062
        %v2576 = vunpack.c.l.b16 %v2063
        %v2577 = vunpack.c.l.b16 %v2064
        %v2578 = vunpack.c.l.b16 %v2065
        %v2579 = vunpack.c.l.b16 %v2066
        %v2580 = vunpack.c.l.b16 %v2067
        %v2581 = vunpack.c.l.b16 %v2068
        %v2582 = vunpack.c.l.b16 %v2069
        %v2583 = vunpack.c.l.b16 %v2070
        %v2584 = vunpack.c.l.b16 %v2071
        %v2585 = vunpack.c.l.b16 %v2072
        %v2586 = vunpack.c.l.b16 %v2073
        %v2587 = vunpack.c.l.b16 %v2074
        %v2588 = vunpack.c.l.b16 %v2075
        %v2589 = vunpack.c.l.b16 %v2076
        %v2590 = vunpack.c.l.b16 %v2077
        %v2591 = vunpack.c.l.b16 %v2078
        %v2592 = vunpack.c.l.b16 %v2079
        %v2593 = vunpack.c.l.b16 %v2080
        %v2594 = vunpack.c.l.b16 %v2081
        %v2595 = vunpack.c.l.b16 %v2082
        %v2596 = vunpack.c.l.b16 %v2083
        %v2597 = vunpack.c.l.b16 %v2084
        %v2598 = vunpack.c.l.b16 %v2085
        %v2599 = vunpack.c.l.b16 %v2086
        %v2600 = vunpack.c.l.b16 %v2087
        %v2601 = vunpack.c.l.b16 %v2088
        %v2602 = vunpack.c.l.b16 %v2089
        %v2603 = vunpack.c.l.b16 %v2090
        %v2604 = vunpack.c.l.b16 %v2091
        %v2605 = vunpack.c.l.b16 %v2092
        %v2606 = vunpack.c.l.b16 %v2093
        %v2607 = vunpack.c.l.b16 %v2094
        %v2608 = vunpack.c.l.b16 %v2095
        %v2609 = vunpack.c.l.b16 %v2096
        %v2610 = vunpack.c.l.b16 %v2097
        %v2611 = vunpack.c.l.b16 %v2098
        %v2612 = vunpack.c.l.b16 %v2099
        %v2613 = vunpack.c.l.b16 %v2100
        %v2614 = vunpack.c.l.b16 %v2101
        %v2615 = vunpack.c.l.b16 %v2102
        %v2616 = vunpack.c.l.b16 %v2103
        %v2617 = vunpack.c.l.b16 %v2104
        %v2618 = vunpack.c.l.b16 %v2105
        %v2619 = vunpack.c.l.b16 %v2106
        %v2620 = vunpack.c.l.b16 %v2107
        %v2621 = vunpack.c.l.b16 %v2108
        %v2622 = vunpack.c.l.b16 %v2109
        %v2623 = vunpack.c.l.b16 %v2110
        %v2624 = vunpack.c.l.b16 %v2111
        %v2625 = vunpack.c.l.b16 %v2112
        %v2626 = vunpack.c.l.b16 %v2113
        %v2627 = vunpack.c.l.b16 %v2114
        %v2628 = vunpack.c.l.b16 %v2115
        %v2629 = vunpack.c.l.b16 %v2116
        %v2630 = vunpack.c.l.b16 %v2117
        %v2631 = vunpack.c.l.b16 %v2118
        %v2632 = vunpack.c.l.b16 %v2119
        %v2633 = vunpack.c.l.b16 %v2120
        %v2634 = vunpack.c.l.b16 %v2121
        %v2635 = vunpack.c.l.b16 %v2122
        %v2636 = vunpack.c.l.b16 %v2123
        %v2637 = vunpack.c.l.b16 %v2124
        %v2638 = vunpack.c.l.b16 %v2125
        %v2639 = vunpack.c.l.b16 %v2126
        %v2640 = vunpack.c.l.b16 %v2127
        %v2641 = vunpack.c.l.b16 %v2128
        %v2642 = vunpack.c.l.b16 %v2129
        %v2643 = vunpack.c.l.b16 %v2130
        %v2644 = vunpack.c.l.b16 %v2131
        %v2645 = vunpack.c.l.b16 %v2132
        %v2646 = vunpack.c.l.b16 %v2133
        %v2647 = vunpack.c.l.b16 %v2134
        %v2648 = vunpack.c.l.b16 %v2135
        %v2649 = vunpack.c.l.b16 %v2136
        %v2650 = vunpack.c.l.b16 %v2137
        %v2651 = vunpack.c.l.b16 %v2138
        %v2652 = vunpack.c.l.b16 %v2139
        %v2653 = vunpack.c.l.b16 %v2140
        %v2654 = vunpack.c.l.b16 %v2141
        %v2655 = vunpack.c.l.b16 %v2142
        %v2656 = vunpack.c.l.b16 %v2143
        %v2657 = vunpack.c.l.b16 %v2144
        %v2658 = vunpack.c.l.b16 %v2145
        %v2659 = vunpack.c.l.b16 %v2146
        %v2660 = vunpack.c.l.b16 %v2147
        %v2661 = vunpack.c.l.b16 %v2148
        %v2662 = vunpack.c.l.b16 %v2149
        %v2663 = vunpack.c.l.b16 %v2150
        %v2664 = vunpack.c.l.b16 %v2151
        %v2665 = vunpack.c.l.b16 %v2152
        %v2666 = vunpack.c.l.b16 %v2153
        %v2667 = vunpack.c.l.b16 %v2154
        %v2668 = vunpack.c.l.b16 %v2155
        %v2669 = vunpack.c.l.b16 %v2156
        %v2670 = vunpack.c.l.b16 %v2157
        %v2671 = vunpack.c.l.b16 %v2158
        %v2672 = vunpack.c.l.b16 %v2159
        %v2673 = vunpack.c.l.b16 %v2160
        %v2674 = vunpack.c.l.b16 %v2161
        %v2675 = vunpack.c.l.b16 %v2162
        %v2676 = vunpack.c.l.b16 %v2163
        %v2677 = vunpack.c.l.b16 %v2164
        %v2678 = vunpack.c.l.b16 %v2165
        %v2679 = vunpack.c.l.b16 %v2166
        %v2680 = vunpack.c.l.b16 %v2167
        %v2681 = vunpack.c.l.b16 %v2168
        %v2682 = vunpack.c.l.b16 %v2169
        %v2683 = vunpack.c.l.b16 %v2170
        %v2684 = vunpack.c.l.b16 %v2171
        %v2685 = vunpack.c.l.b16 %v2172
        %v2686 = vunpack.c.l.b16 %v2173
        %v2687 = vunpack.c.l.b16 %v2174
        %v2688 = vunpack.c.l.b16 %v2175
        %v2689 = vunpack.c.l.b16 %v2176
        %v2690 = vunpack.c.l.b16 %v2177
        %v2691 = vunpack.c.l.b16 %v2178
        %v2692 = vunpack.c.l.b16 %v2179
        %v2693 = vunpack.c.l.b16 %v2180
        %v2694 = vunpack.c.l.b16 %v2181
        %v2695 = vunpack.c.l.b16 %v2182
        %v2696 = vunpack.c.l.b16 %v2183
        %v2697 = vunpack.c.l.b16 %v2184
        %v2698 = vunpack.c.l.b16 %v2185
        %v2699 = vunpack.c.l.b16 %v2186
        %v2700 = vunpack.c.l.b16 %v2187
        %v2701 = vunpack.c.l.b16 %v2188
        %v2702 = vunpack.c.l.b16 %v2189
        %v2703 = vunpack.c.l.b16 %v2190
        %v2704 = vunpack.c.l.b16 %v2191
        %v2705 = vpack.c.b16 %v2450, %v2449
        %v2706 = vpack.c.b16 %v2452, %v2451
        %v2707 = vpack.c.b16 %v2454, %v2453
        %v2708 = vpack.c.b16 %v2456, %v2455
        %v2709 = vpack.c.b16 %v2458, %v2457
        %v2710 = vpack.c.b16 %v2460, %v2459
        %v2711 = vpack.c.b16 %v2462, %v2461
        %v2712 = vpack.c.b16 %v2464, %v2463
        %v2713 = vpack.c.b16 %v2466, %v2465
        %v2714 = vpack.c.b16 %v2468, %v2467
        %v2715 = vpack.c.b16 %v2470, %v2469
        %v2716 = vpack.c.b16 %v2472, %v2471
        %v2717 = vpack.c.b16 %v2474, %v2473
        %v2718 = vpack.c.b16 %v2476, %v2475
        %v2719 = vpack.c.b16 %v2478, %v2477
        %v2720 = vpack.c.b16 %v2480, %v2479
        %v2721 = vpack.c.b16 %v2482, %v2481
        %v2722 = vpack.c.b16 %v2484, %v2483
        %v2723 = vpack.c.b16 %v2486, %v2485
        %v2724 = vpack.c.b16 %v2488, %v2487
        %v2725 = vpack.c.b16 %v2490, %v2489
        %v2726 = vpack.c.b16 %v2492, %v2491
        %v2727 = vpack.c.b16 %v2494, %v2493
        %v2728 = vpack.c.b16 %v2496, %v2495
        %v2729 = vpack.c.b16 %v2498, %v2497
        %v2730 = vpack.c.b16 %v2500, %v2499
        %v2731 = vpack.c.b16 %v2502, %v2501
        %v2732 = vpack.c.b16 %v2504, %v2503
        %v2733 = vpack.c.b16 %v2506, %v2505
        %v2734 = vpack.c.b16 %v2508, %v2507
        %v2735 = vpack.c.b16 %v2510, %v2509
        %v2736 = vpack.c.b16 %v2512, %v2511
        %v2737 = vpack.c.b16 %v2514, %v2513
        %v2738 = vpack.c.b16 %v2516, %v2515
        %v2739 = vpack.c.b16 %v2518, %v2517
        %v2740 = vpack.c.b16 %v2520, %v2519
        %v2741 = vpack.c.b16 %v2522, %v2521
        %v2742 = vpack.c.b16 %v2524, %v2523
        %v2743 = vpack.c.b16 %v2526, %v2525
        %v2744 = vpack.c.b16 %v2528, %v2527
        %v2745 = vpack.c.b16 %v2530, %v2529
        %v2746 = vpack.c.b16 %v2532, %v2531
        %v2747 = vpack.c.b16 %v2534, %v2533
        %v2748 = vpack.c.b16 %v2536, %v2535
        %v2749 = vpack.c.b16 %v2538, %v2537
        %v2750 = vpack.c.b16 %v2540, %v2539
        %v2751 = vpack.c.b16 %v2542, %v2541
        %v2752 = vpack.c.b16 %v2544, %v2543
        %v2753 = vpack.c.b16 %v2546, %v2545
        %v2754 = vpack.c.b16 %v2548, %v2547
        %v2755 = vpack.c.b16 %v2550, %v2549
        %v2756 = vpack.c.b16 %v2552, %v2551
        %v2757 = vpack.c.b16 %v2554, %v2553
        %v2758 = vpack.c.b16 %v2556, %v2555
        %v2759 = vpack.c.b16 %v2558, %v2557
        %v2760 = vpack.c.b16 %v2560, %v2559
        %v2761 = vpack.c.b16 %v2562, %v2561
        %v2762 = vpack.c.b16 %v2564, %v2563
        %v2763 = vpack.c.b16 %v2566, %v2565
        %v2764 = vpack.c.b16 %v2568, %v2567
        %v2765 = vpack.c.b16 %v2570, %v2569
        %v2766 = vpack.c.b16 %v2572, %v2571
        %v2767 = vpack.c.b16 %v2574, %v2573
        %v2768 = vpack.c.b16 %v2576, %v2575
        %v2769 = vpack.c.b16 %v2578, %v2577
        %v2770 = vpack.c.b16 %v2580, %v2579
        %v2771 = vpack.c.b16 %v2582, %v2581
        %v2772 = vpack.c.b16 %v2584, %v2583
        %v2773 = vpack.c.b16 %v2586, %v2585
        %v2774 = vpack.c.b16 %v2588, %v2587
        %v2775 = vpack.c.b16 %v2590, %v2589
        %v2776 = vpack.c.b16 %v2592, %v2591
        %v2777 = vpack.c.b16 %v2594, %v2593
        %v2778 = vpack.c.b16 %v2596, %v2595
        %v2779 = vpack.c.b16 %v2598, %v2597
        %v2780 = vpack.c.b16 %v2600, %v2599
        %v2781 = vpack.c.b16 %v2602, %v2601
        %v2782 = vpack.c.b16 %v2604, %v2603
        %v2783 = vpack.c.b16 %v2606, %v2605
        %v2784 = vpack.c.b16 %v2608, %v2607
        %v2785 = vpack.c.b16 %v2610, %v2609
        %v2786 = vpack.c.b16 %v2612, %v2611
        %v2787 = vpack.c.b16 %v2614, %v2613
        %v2788 = vpack.c.b16 %v2616, %v2615
        %v2789 = vpack.c.b16 %v2618, %v2617
        %v2790 = vpack.c.b16 %v2620, %v2619
        %v2791 = vpack.c.b16 %v2622, %v2621
        %v2792 = vpack.c.b16 %v2624, %v2623
        %v2793 = vpack.c.b16 %v2626, %v2625
        %v2794 = vpack.c.b16 %v2628, %v2627
        %v2795 = vpack.c.b16 %v2630, %v2629
        %v2796 = vpack.c.b16 %v2632, %v2631
        %v2797 = vpack.c.b16 %v2634, %v2633
        %v2798 = vpack.c.b16 %v2636, %v2635
        %v2799 = vpack.c.b16 %v2638, %v2637
        %v2800 = vpack.c.b16 %v2640, %v2639
        %v2801 = vpack.c.b16 %v2642, %v2641
        %v2802 = vpack.c.b16 %v2644, %v2643
        %v2803 = vpack.c.b16 %v2646, %v2645
        %v2804 = vpack.c.b16 %v2648, %v2647
        %v2805 = vpack.c.b16 %v2650, %v2649
        %v2806 = vpack.c.b16 %v2652, %v2651
        %v2807 = vpack.c.b16 %v2654, %v2653
        %v2808 = vpack.c.b16 %v2656, %v2655
        %v2809 = vpack.c.b16 %v2658, %v2657
        %v2810 = vpack.c.b16 %v2660, %v2659
        %v2811 = vpack.c.b16 %v2662, %v2661
        %v2812 = vpack.c.b16 %v2664, %v2663
        %v2813 = vpack.c.b16 %v2666, %v2665
        %v2814 = vpack.c.b16 %v2668, %v2667
        %v2815 = vpack.c.b16 %v2670, %v2669
        %v2816 = vpack.c.b16 %v2672, %v2671
        %v2817 = vpack.c.b16 %v2674, %v2673
        %v2818 = vpack.c.b16 %v2676, %v2675
        %v2819 = vpack.c.b16 %v2678, %v2677
        %v2820 = vpack.c.b16 %v2680, %v2679
        %v2821 = vpack.c.b16 %v2682, %v2681
        %v2822 = vpack.c.b16 %v2684, %v2683
        %v2823 = vpack.c.b16 %v2686, %v2685
        %v2824 = vpack.c.b16 %v2688, %v2687
        %v2825 = vpack.c.b16 %v2690, %v2689
        %v2826 = vpack.c.b16 %v2692, %v2691
        %v2827 = vpack.c.b16 %v2694, %v2693
        %v2828 = vpack.c.b16 %v2696, %v2695
        %v2829 = vpack.c.b16 %v2698, %v2697
        %v2830 = vpack.c.b16 %v2700, %v2699
        %v2831 = vpack.c.b16 %v2702, %v2701
        %v2832 = vpack.c.b16 %v2704, %v2703
        %2961 = vmatpush.bf16.msra.mxu0 %v2712
        %2962 = vmatpush.bf16.msra.mxu0 %v2711
        %2963 = vmatpush.bf16.msra.mxu0 %v2710
        %2964 = vmatpush.bf16.msra.mxu0 %v2709
        %2965 = vmatpush.bf16.msra.mxu0 %v2708
        %2966 = vmatpush.bf16.msra.mxu0 %v2707
        %2967 = vmatpush.bf16.msra.mxu0 %v2706
        %2968 = vmatpush.bf16.msra.mxu0 %v2705
        %2969 = vmatmul.bf16.gmra.mxu0 %v1920
        %v2970 = vpop.f32.mrf.mxu0
        %v2971 = vadd.f32 %v2192, %v2970
        %v2972 = vpop.f32.mrf.mxu0
        %2973 = vdwg.mxu0
        %2974 = vmatpush.bf16.msra.mxu0 %v2720
        %2975 = vmatpush.bf16.msra.mxu0 %v2719
        %2976 = vmatpush.bf16.msra.mxu0 %v2718
        %2977 = vmatpush.bf16.msra.mxu0 %v2717
        %2978 = vmatpush.bf16.msra.mxu0 %v2716
        %2979 = vmatpush.bf16.msra.mxu0 %v2715
        %2980 = vmatpush.bf16.msra.mxu0 %v2714
        %2981 = vmatpush.bf16.msra.mxu0 %v2713
        %2982 = vmatmul.bf16.gmra.mxu0 %v1921
        %v2983 = vpop.f32.mrf.mxu0
        %v2984 = vadd.f32 %v2971, %v2983
        %v2985 = vpop.f32.mrf.mxu0
        %2986 = vdwg.mxu0
        %2987 = vmatpush.bf16.msra.mxu0 %v2728
        %2988 = vmatpush.bf16.msra.mxu0 %v2727
        %2989 = vmatpush.bf16.msra.mxu0 %v2726
        %2990 = vmatpush.bf16.msra.mxu0 %v2725
        %2991 = vmatpush.bf16.msra.mxu0 %v2724
        %2992 = vmatpush.bf16.msra.mxu0 %v2723
        %2993 = vmatpush.bf16.msra.mxu0 %v2722
        %2994 = vmatpush.bf16.msra.mxu0 %v2721
        %2995 = vmatmul.bf16.gmra.mxu0 %v1922
        %v2996 = vpop.f32.mrf.mxu0
        %v2997 = vadd.f32 %v2984, %v2996
        %v2998 = vpop.f32.mrf.mxu0
        %2999 = vdwg.mxu0
        %3000 = vmatpush.bf16.msra.mxu0 %v2736
        %3001 = vmatpush.bf16.msra.mxu0 %v2735
        %3002 = vmatpush.bf16.msra.mxu0 %v2734
        %3003 = vmatpush.bf16.msra.mxu0 %v2733
        %3004 = vmatpush.bf16.msra.mxu0 %v2732
        %3005 = vmatpush.bf16.msra.mxu0 %v2731
        %3006 = vmatpush.bf16.msra.mxu0 %v2730
        %3007 = vmatpush.bf16.msra.mxu0 %v2729
        %3008 = vmatmul.bf16.gmra.mxu0 %v1923
        %v3009 = vpop.f32.mrf.mxu0
        %v3010 = vadd.f32 %v2997, %v3009
        %v3011 = vpop.f32.mrf.mxu0
        %3012 = vdwg.mxu0
        %3013 = vmatpush.bf16.msra.mxu0 %v2744
        %3014 = vmatpush.bf16.msra.mxu0 %v2743
        %3015 = vmatpush.bf16.msra.mxu0 %v2742
        %3016 = vmatpush.bf16.msra.mxu0 %v2741
        %3017 = vmatpush.bf16.msra.mxu0 %v2740
        %3018 = vmatpush.bf16.msra.mxu0 %v2739
        %3019 = vmatpush.bf16.msra.mxu0 %v2738
        %3020 = vmatpush.bf16.msra.mxu0 %v2737
        %3021 = vmatmul.bf16.gmra.mxu0 %v1924
        %v3022 = vpop.f32.mrf.mxu0
        %v3023 = vadd.f32 %v3010, %v3022
        %v3024 = vpop.f32.mrf.mxu0
        %3025 = vdwg.mxu0
        %3026 = vmatpush.bf16.msra.mxu0 %v2752
        %3027 = vmatpush.bf16.msra.mxu0 %v2751
        %3028 = vmatpush.bf16.msra.mxu0 %v2750
        %3029 = vmatpush.bf16.msra.mxu0 %v2749
        %3030 = vmatpush.bf16.msra.mxu0 %v2748
        %3031 = vmatpush.bf16.msra.mxu0 %v2747
        %3032 = vmatpush.bf16.msra.mxu0 %v2746
        %3033 = vmatpush.bf16.msra.mxu0 %v2745
        %3034 = vmatmul.bf16.gmra.mxu0 %v1925
        %v3035 = vpop.f32.mrf.mxu0
        %v3036 = vadd.f32 %v3023, %v3035
        %v3037 = vpop.f32.mrf.mxu0
        %3038 = vdwg.mxu0
        %3039 = vmatpush.bf16.msra.mxu0 %v2760
        %3040 = vmatpush.bf16.msra.mxu0 %v2759
        %3041 = vmatpush.bf16.msra.mxu0 %v2758
        %3042 = vmatpush.bf16.msra.mxu0 %v2757
        %3043 = vmatpush.bf16.msra.mxu0 %v2756
        %3044 = vmatpush.bf16.msra.mxu0 %v2755
        %3045 = vmatpush.bf16.msra.mxu0 %v2754
        %3046 = vmatpush.bf16.msra.mxu0 %v2753
        %3047 = vmatmul.bf16.gmra.mxu0 %v1926
        %v3048 = vpop.f32.mrf.mxu0
        %v3049 = vadd.f32 %v3036, %v3048
        %v3050 = vpop.f32.mrf.mxu0
        %3051 = vdwg.mxu0
        %3052 = vmatpush.bf16.msra.mxu0 %v2768
        %3053 = vmatpush.bf16.msra.mxu0 %v2767
        %3054 = vmatpush.bf16.msra.mxu0 %v2766
        %3055 = vmatpush.bf16.msra.mxu0 %v2765
        %3056 = vmatpush.bf16.msra.mxu0 %v2764
        %3057 = vmatpush.bf16.msra.mxu0 %v2763
        %3058 = vmatpush.bf16.msra.mxu0 %v2762
        %3059 = vmatpush.bf16.msra.mxu0 %v2761
        %3060 = vmatmul.bf16.gmra.mxu0 %v1927
        %v3061 = vpop.f32.mrf.mxu0
        %v3062 = vadd.f32 %v3049, %v3061
        %v3063 = vpop.f32.mrf.mxu0
        %3064 = vdwg.mxu0
        %3065 = vmatpush.bf16.msra.mxu0 %v2776
        %3066 = vmatpush.bf16.msra.mxu0 %v2775
        %3067 = vmatpush.bf16.msra.mxu0 %v2774
        %3068 = vmatpush.bf16.msra.mxu0 %v2773
        %3069 = vmatpush.bf16.msra.mxu0 %v2772
        %3070 = vmatpush.bf16.msra.mxu0 %v2771
        %3071 = vmatpush.bf16.msra.mxu0 %v2770
        %3072 = vmatpush.bf16.msra.mxu0 %v2769
        %3073 = vmatmul.bf16.gmra.mxu0 %v1928
        %v3074 = vpop.f32.mrf.mxu0
        %v3075 = vadd.f32 %v3062, %v3074
        %v3076 = vpop.f32.mrf.mxu0
        %3077 = vdwg.mxu0
        %3078 = vmatpush.bf16.msra.mxu0 %v2784
        %3079 = vmatpush.bf16.msra.mxu0 %v2783
        %3080 = vmatpush.bf16.msra.mxu0 %v2782
        %3081 = vmatpush.bf16.msra.mxu0 %v2781
        %3082 = vmatpush.bf16.msra.mxu0 %v2780
        %3083 = vmatpush.bf16.msra.mxu0 %v2779
        %3084 = vmatpush.bf16.msra.mxu0 %v2778
        %3085 = vmatpush.bf16.msra.mxu0 %v2777
        %3086 = vmatmul.bf16.gmra.mxu0 %v1929
        %v3087 = vpop.f32.mrf.mxu0
        %v3088 = vadd.f32 %v3075, %v3087
        %v3089 = vpop.f32.mrf.mxu0
        %3090 = vdwg.mxu0
        %3091 = vmatpush.bf16.msra.mxu0 %v2792
        %3092 = vmatpush.bf16.msra.mxu0 %v2791
        %3093 = vmatpush.bf16.msra.mxu0 %v2790
        %3094 = vmatpush.bf16.msra.mxu0 %v2789
        %3095 = vmatpush.bf16.msra.mxu0 %v2788
        %3096 = vmatpush.bf16.msra.mxu0 %v2787
        %3097 = vmatpush.bf16.msra.mxu0 %v2786
        %3098 = vmatpush.bf16.msra.mxu0 %v2785
        %3099 = vmatmul.bf16.gmra.mxu0 %v1930
        %v3100 = vpop.f32.mrf.mxu0
        %v3101 = vadd.f32 %v3088, %v3100
        %v3102 = vpop.f32.mrf.mxu0
        %3103 = vdwg.mxu0
        %3104 = vmatpush.bf16.msra.mxu0 %v2800
        %3105 = vmatpush.bf16.msra.mxu0 %v2799
        %3106 = vmatpush.bf16.msra.mxu0 %v2798
        %3107 = vmatpush.bf16.msra.mxu0 %v2797
        %3108 = vmatpush.bf16.msra.mxu0 %v2796
        %3109 = vmatpush.bf16.msra.mxu0 %v2795
        %3110 = vmatpush.bf16.msra.mxu0 %v2794
        %3111 = vmatpush.bf16.msra.mxu0 %v2793
        %3112 = vmatmul.bf16.gmra.mxu0 %v1931
        %v3113 = vpop.f32.mrf.mxu0
        %v3114 = vadd.f32 %v3101, %v3113
        %v3115 = vpop.f32.mrf.mxu0
        %3116 = vdwg.mxu0
        %3117 = vmatpush.bf16.msra.mxu0 %v2808
        %3118 = vmatpush.bf16.msra.mxu0 %v2807
        %3119 = vmatpush.bf16.msra.mxu0 %v2806
        %3120 = vmatpush.bf16.msra.mxu0 %v2805
        %3121 = vmatpush.bf16.msra.mxu0 %v2804
        %3122 = vmatpush.bf16.msra.mxu0 %v2803
        %3123 = vmatpush.bf16.msra.mxu0 %v2802
        %3124 = vmatpush.bf16.msra.mxu0 %v2801
        %3125 = vmatmul.bf16.gmra.mxu0 %v1932
        %v3126 = vpop.f32.mrf.mxu0
        %v3127 = vadd.f32 %v3114, %v3126
        %v3128 = vpop.f32.mrf.mxu0
        %3129 = vdwg.mxu0
        %3130 = vmatpush.bf16.msra.mxu0 %v2816
        %3131 = vmatpush.bf16.msra.mxu0 %v2815
        %3132 = vmatpush.bf16.msra.mxu0 %v2814
        %3133 = vmatpush.bf16.msra.mxu0 %v2813
        %3134 = vmatpush.bf16.msra.mxu0 %v2812
        %3135 = vmatpush.bf16.msra.mxu0 %v2811
        %3136 = vmatpush.bf16.msra.mxu0 %v2810
        %3137 = vmatpush.bf16.msra.mxu0 %v2809
        %3138 = vmatmul.bf16.gmra.mxu0 %v1933
        %v3139 = vpop.f32.mrf.mxu0
        %v3140 = vadd.f32 %v3127, %v3139
        %v3141 = vpop.f32.mrf.mxu0
        %3142 = vdwg.mxu0
        %3143 = vmatpush.bf16.msra.mxu0 %v2824
        %3144 = vmatpush.bf16.msra.mxu0 %v2823
        %3145 = vmatpush.bf16.msra.mxu0 %v2822
        %3146 = vmatpush.bf16.msra.mxu0 %v2821
        %3147 = vmatpush.bf16.msra.mxu0 %v2820
        %3148 = vmatpush.bf16.msra.mxu0 %v2819
        %3149 = vmatpush.bf16.msra.mxu0 %v2818
        %3150 = vmatpush.bf16.msra.mxu0 %v2817
        %3151 = vmatmul.bf16.gmra.mxu0 %v1934
        %v3152 = vpop.f32.mrf.mxu0
        %v3153 = vadd.f32 %v3140, %v3152
        %v3154 = vpop.f32.mrf.mxu0
        %3155 = vdwg.mxu0
        %3156 = vmatpush.bf16.msra.mxu0 %v2832
        %3157 = vmatpush.bf16.msra.mxu0 %v2831
        %3158 = vmatpush.bf16.msra.mxu0 %v2830
        %3159 = vmatpush.bf16.msra.mxu0 %v2829
        %3160 = vmatpush.bf16.msra.mxu0 %v2828
        %3161 = vmatpush.bf16.msra.mxu0 %v2827
        %3162 = vmatpush.bf16.msra.mxu0 %v2826
        %3163 = vmatpush.bf16.msra.mxu0 %v2825
        %3164 = vmatmul.bf16.gmra.mxu0 %v1935
        %v3165 = vpop.f32.mrf.mxu0
        %v3166 = vadd.f32 %v3153, %v3165
        %v3167 = vpop.f32.mrf.mxu0
        %3168 = vdwg.mxu0
        %v3169 = vadd.f32 %v1293, %v3166
        %3170 = vst.msk [vmem:[%s506] sm:$0xff] %vm512, %v3169
        %p3171 = scmp.eq.s32.totalorder %s28, 1
        // Predicated region
        $region65: #{decoder_forward.1} parent=59 // pred_check
          %p3172 = pneg %p3171
        $region66: #{decoder_forward.1} parent=59 // pred_check_branch
          %3174 = sbr.rel (%p3172) target = $region68
        $region67: #{decoder_forward.1} parent=59 // pred_region
          %v3175 = vsel %vm512, %v3169, 0.0
          %3176 = vadd.xlane.f32.xlu0 %v3175
          %v3177 = vpop.xlane.xlu0 %3176
          %v3178 = vmul.f32 %v3177, %v522
          %v3179 = vsub.f32 %v3169, %v3178
          %v3180 = vmul.f32 %v3179, %v3179
          %v3181 = vsel %vm512, %v3180, 0.0
          %3182 = vadd.xlane.f32.xlu0 %v3181
          %v3183 = vpop.xlane.xlu0 %3182
          %v3184 = vmul.f32 %v3183, 0.032258064
          %v3185 = vld [vmem:[%s8] sm:$0x1]
          %v3187 = vperm.slane %v3185, 0
          %v3189 = vmul.f32 %v3187, %v3179
          %v3190 = vrsqrt.pop %v3184
          %v3191 = vmul.f32 %v3190, %v3184
          %v3192 = vmul.f32 %v3191, %v3190
          %v3193 = vmul.f32 0.5, %v3192
          %v3194 = vsub.f32 1.5, %v3193
          %v3195 = vmul.f32 %v3190, %v3194
          %v3196 = vmul.f32 %v3184, %v3195
          %vm3197 = vcmp.eq.f32.partialorder %v3184, inf
          %v3198 = vsel %vm3197, %v3184, %v3196
          %vm3199 = vcmp.eq.f32.partialorder %v3184, 0.0
          %v3200 = vand.u32 %v3184, 2147483648
          %v3201 = vsel %vm3199, %v3200, %v3198
          %v3202 = vadd.f32 %v3201, 1e-06
          %v3203 = vrcp.pop %v3202
          %v3204 = vmul.f32 %v3202, %v3203
          %v3205 = vsub.f32 1.0, %v3204
          %v3206 = vmul.f32 %v3203, %v3205
          %v3207 = vadd.f32 %v3203, %v3206
          %vm3208 = vweird.f32 %v3202
          %vm3209 = vweird.f32 %v3203
          %vm3210 = vmor %vm3208, %vm3209
          %v3211 = vsel %vm3210, %v3203, %v3207
          %v3212 = vand.u32 2147483647, %v3202
          %vm3213 = vcmp.eq.f32.partialorder %v3212, 8.507059e+37
          %v3214 = vand.u32 %v3202, 2147483648
          %v3215 = vor.u32 1.1754944e-38, %v3214
          %v3216 = vsel %vm3213, %v3215, %v3211
          %v3217 = vmul.f32 %v3189, %v3216
          %v3218 = vld [vmem:[%s9] sm:$0x1]
          %v3220 = vperm.slane %v3218, 0
          %v3222 = vadd.f32 %v3217, %v3220
          %3223 = vst.msk [vmem:[%s459] sm:$0xff] %vm512, %v3222
        $region68: #{decoder_forward.1} parent=59 // pred_fallthru
          _
        %s3224 = sand.u32 %s294, 1
        %s3225 = scalar_lea.sflag [#allocation4], %s3224
        %s3226 = sand.u32 %s294, 1
        %s3227 = smul.addr %s3226, 8
        %s3228 = scalar_lea.vmem [#allocation3], %s3227
        // Predicated region
        $region69: #{decoder_forward.1} parent=59 // pred_check
          %p3229 = pneg %p304
        $region70: #{decoder_forward.1} parent=59 // pred_check_branch
          %3231 = sbr.rel (%p3229) target = $region72
        $region71: #{decoder_forward.1} parent=59 // pred_region
          %3233 = vsyncadd %s3225, 0
          %s3234 = smul.addr %s29, 8
          %s3235 = scalar_lea.hbm %s10, %s3234
          %s3237 = sshll.u32 %s3228, 4
          %s3238 = int_to_ptr.vmem [resolvable:$true] %s3237
          %s3239 = sshll.u32 %s3235, 4
          %s3240 = int_to_ptr.hbm [resolvable:$true] %s3239
          %3242 = dma.vmem_to_hbm [thread:$0]  %s3238, 128, %s3240, %s3225
        $region72: #{decoder_forward.1} parent=59 // pred_fallthru
          _
      $region60: #{decoder_forward.1} parent=5 // pred_fallthru
        _
      %p3243 = scmp.le.s32.totalorder 2, %s19
      // Predicated region
      $region73: #{decoder_forward.1} parent=5 // pred_check
        %p3244 = pneg %p3243
      $region74: #{decoder_forward.1} parent=5 // pred_check_branch
        %3246 = sbr.rel (%p3244) target = $region76
      $region75: #{decoder_forward.1} parent=5 // pred_region
        %s3247 = ssub.s32 %s19, 2
        // Predicated region
        $region77: #{decoder_forward.1} parent=75 // pred_check
          %p3248 = pneg %p310
        $region78: #{decoder_forward.1} parent=75 // pred_check_branch
          %3250 = sbr.rel (%p3248) target = $region80
        $region79: #{decoder_forward.1} parent=75 // pred_region
          %s3251 = sand.u32 %s295, 1
          %s3252 = scalar_lea.sflag [#allocation4], %s3251
          %s3253 = sand.u32 %s295, 1
          %s3254 = smul.addr %s3253, 8
          %s3255 = scalar_lea.vmem [#allocation3], %s3254
          %3257 = dma.done %s3252, 128
        $region80: #{decoder_forward.1} parent=75 // pred_fallthru
          _
      $region76: #{decoder_forward.1} parent=5 // pred_fallthru
        _
    $region6: #{decoder_forward.1} parent=1 // loop_footer
      %s23 = sadd.s32 1, %s19
    $region7: #{decoder_forward.1} parent=1 // loop_footer_branch
      %18 = sbr.rel target = $region3
    $region8: #{decoder_forward.1} parent=1 // loop_exit
      _
    %3258 = vsyncpa [#allocation4], 1
    %s3259 = scalar_lea.sflag [#allocation4], 1
    %3260 = vsyncpa %s3259, 1

</llo_original>
